<compile_context>
chip_gen: v6e
topology: v6e:2x2x1
jax: 0.10.0
libtpu: 0.0.40
codegen_flags: <defaults>
</compile_context>

<pallas_src>
import functools

import jax
import jax.numpy as jnp
import numpy as np
from jax.experimental import pallas as pl
from jax.experimental.pallas import tpu as pltpu


def _round_up(x, m):
    return ((x + m - 1) // m) * m


def _bigru_head_kernel(maxlen_ref,                      # (nB,) int32 in SMEM (scalar prefetch)
                       x_f_ref, x_b_ref, len_ref,
                       wih_f_ref, whh_f_ref, gb_f_ref, bhn_f_ref,
                       wih_b_ref, whh_b_ref, gb_b_ref, bhn_b_ref,
                       wcf_ref, wcb_ref, bc_ref,
                       o_ref,
                       gi_f_scr, gi_b_scr, hf_scr, hb_scr):
    # x_*_ref: (TT, Bt, H) time-major block. x_b_ref is the time-REVERSED block
    # (via its index_map), so both directions advance in their natural order.
    TT, Bt, H = x_f_ref.shape
    b_idx = pl.program_id(0)
    t_blk = pl.program_id(1)
    nT = pl.num_programs(1)

    # Initialize the hidden-state carries at the first time block of each batch tile.
    @pl.when(t_blk == 0)
    def _():
        hf_scr[...] = jnp.zeros_like(hf_scr)
        hb_scr[...] = jnp.zeros_like(hb_scr)

    # Padded-tail skip logic: max valid length over the rows of this batch tile.
    ml = maxlen_ref[b_idx]
    fwd_live = (t_blk * TT) < ml                   # fwd block overlaps valid region
    bwd_live = ((nT - 1 - t_blk) * TT) < ml        # bwd (reversed) block overlaps valid region

    # ---- hoisted input projections (one big MXU matmul per live direction) ----
    # b_ih and the r/z parts of b_hh are pre-folded into gb_*.
    @pl.when(fwd_live)
    def _():
        xf = x_f_ref[...].reshape(TT * Bt, H)
        gi_f_scr[...] = (jnp.dot(xf, wih_f_ref[...],
                                 preferred_element_type=jnp.float32) + gb_f_ref[...])

    @pl.when(bwd_live)
    def _():
        xb = x_b_ref[...].reshape(TT * Bt, H)
        gi_b_scr[...] = (jnp.dot(xb, wih_b_ref[...],
                                 preferred_element_type=jnp.float32) + gb_b_ref[...])

    # ---- serial recurrence (skipped entirely when both directions are in the
    # padded tail; a dead direction's updates are discarded by the per-step
    # length mask, so reading its stale gi scratch is harmless) -----------------
    @pl.when(jnp.logical_or(fwd_live, bwd_live))
    def _():
        whh_f = whh_f_ref[...]
        whh_b = whh_b_ref[...]
        bhn_f = jnp.broadcast_to(bhn_f_ref[...], (Bt, H))
        bhn_b = jnp.broadcast_to(bhn_b_ref[...], (Bt, H))
        lens = len_ref[...]                          # (Bt, 1) int32 valid lengths

        t0_f = t_blk * TT                            # fwd global time at local step 0
        t0_b = (nT - 1 - t_blk) * TT + (TT - 1)      # bwd global time at local step 0

        def gru_step(gi_t, h, whh, bhn, valid):
            # Single matmul per direction per step; gate math in f32.
            gh = jnp.dot(h, whh, preferred_element_type=jnp.float32)    # (Bt, 3H)
            r = jax.nn.sigmoid(gi_t[:, :H] + gh[:, :H])
            z = jax.nn.sigmoid(gi_t[:, H:2 * H] + gh[:, H:2 * H])
            n = jnp.tanh(gi_t[:, 2 * H:] + r * (gh[:, 2 * H:] + bhn))
            h_new = (1.0 - z) * n + z * h
            return jnp.where(valid, h_new, h)        # packed-sequence masking

        def body(i, carry):
            h_f, h_b = carry
            # The two directions are independent -> interleaved so MXU/EUP latency overlaps.
            row_f = pl.multiple_of(i * Bt, Bt)
            row_b = pl.multiple_of((TT - 1 - i) * Bt, Bt)
            gi_ft = gi_f_scr[pl.ds(row_f, Bt), :]    # (Bt, 3H) contiguous, aligned
            gi_bt = gi_b_scr[pl.ds(row_b, Bt), :]
            h_f = gru_step(gi_ft, h_f, whh_f, bhn_f, (t0_f + i) < lens)
            h_b = gru_step(gi_bt, h_b, whh_b, bhn_b, (t0_b - i) < lens)
            return h_f, h_b

        unroll = True if TT <= 16 else 4
        h_f, h_b = jax.lax.fori_loop(0, TT, body, (hf_scr[...], hb_scr[...]),
                                     unroll=unroll)
        hf_scr[...] = h_f
        hb_scr[...] = h_b

    # Classifier only after the last time block (fwd has seen t=0..T-1, bwd t=T-1..0).
    # Concat avoided: W_cls split into fwd/bwd halves at trace time.
    @pl.when(t_blk == nT - 1)
    def _():
        logits = (jnp.dot(hf_scr[...], wcf_ref[...], preferred_element_type=jnp.float32)
                  + jnp.dot(hb_scr[...], wcb_ref[...], preferred_element_type=jnp.float32)
                  + bc_ref[...])
        o_ref[...] = logits.astype(o_ref.dtype)


def _pick_tiles(B, T, H, bt, tt, budget_bytes=24 * 1024 * 1024):
    """Pick (Bt, TT) so x double-buffers + gi scratch stay within ~budget."""
    Bt = _round_up(min(B, 128), 8) if bt is None else _round_up(bt, 8)
    if tt is not None:
        return Bt, _round_up(tt, 8)
    # bytes per (t, b) cell: 2 dirs x 2 pipeline buffers of x  +  2 dirs x 3H gi scratch
    per_cell = (2 * 2 * H + 2 * 3 * H) * 4
    max_cells = max(budget_bytes // per_cell, 64)

    def fit_tt(bt_):
        return max(8, min(_round_up(T, 8), 128, ((max_cells // bt_) // 8) * 8))

    TT = fit_tt(Bt)
    while Bt > 8 and TT * Bt > max_cells:
        Bt = _round_up(max(Bt // 2, 8), 8)
        TT = fit_tt(Bt)
    return Bt, TT


@functools.partial(jax.jit, static_argnames=("bt", "tt"))
def fine_tune_head(hidden_states, attention_mask, params, *, bt=None, tt=None):
    """hidden_states: (B, T, H) f32, attention_mask: (B, T) int/bool -> (B, 1)."""
    B, T, H = hidden_states.shape

    Bt, TT = _pick_tiles(B, T, H, bt, tt)
    Bp = _round_up(B, Bt)
    Tp = _round_up(T, TT)
    nB, nT = Bp // Bt, Tp // TT

    # Per-row valid lengths (replaces the dense (T,B,1) mask in the kernel).
    lengths = jnp.sum(attention_mask.astype(jnp.int32), axis=1)
    lengths = jnp.pad(lengths, (0, Bp - B))                            # (Bp,)
    tile_max_len = jnp.max(lengths.reshape(nB, Bt), axis=1)           # (nB,) scalar prefetch
    lengths2d = lengths[:, None]                                       # (Bp, 1)

    x = hidden_states.astype(jnp.float32)
    x = jnp.pad(x, ((0, Bp - B), (0, Tp - T), (0, 0)))
    x = jnp.transpose(x, (1, 0, 2))                                    # (Tp, Bp, H) time-major
    # TODO(synk): feed (B,T,H) directly through the index_map (middle-axis dynamic
    # slicing) to drop this one extra HBM round trip of x.

    # Trace-time (parameter-sized) bias folding and classifier split.
    def fold(b_ih, b_hh):
        gbias = (b_ih + jnp.concatenate(
            [b_hh[:2 * H], jnp.zeros((H,), jnp.float32)]))[None, :]    # (1, 3H)
        bhn = b_hh[2 * H:][None, :]                                    # (1, H)
        return gbias, bhn

    gb_f, bhn_f = fold(params["b_ih_f"], params["b_hh_f"])
    gb_b, bhn_b = fold(params["b_ih_b"], params["b_hh_b"])
    wcf = params["w_cls"][:H]
    wcb = params["w_cls"][H:]
    bc = params["b_cls"].reshape(1, 1)

    args = (x, x, lengths2d,
            params["w_ih_f"], params["w_hh_f"], gb_f, bhn_f,
            params["w_ih_b"], params["w_hh_b"], gb_b, bhn_b,
            wcf, wcb, bc)

    def full_spec(a):
        # Whole-array VMEM-resident block (constant index map -> fetched once).
        return pl.BlockSpec(a.shape, lambda b, t, ml: (0,) * a.ndim)

    in_specs = [
        pl.BlockSpec((TT, Bt, H), lambda b, t, ml: (t, b, 0)),              # fwd time block
        pl.BlockSpec((TT, Bt, H), lambda b, t, ml: (nT - 1 - t, b, 0)),     # bwd (reversed) block
        pl.BlockSpec((Bt, 1), lambda b, t, ml: (b, 0)),                     # lengths
    ] + [full_spec(a) for a in args[3:]]

    vmem_est = (2 * 2 * TT * Bt * H * 4        # x blocks, 2 dirs, double buffered
                + 2 * TT * Bt * 3 * H * 4      # hoisted gi scratch, 2 dirs
                + 2 * Bt * H * 4               # hidden carries
                + 4 * H * 3 * H * 4            # W_ih / W_hh, both dirs
                + 16 * H * 4 + 4096)           # biases / classifier / slack
    vmem_limit = int(min(max(32 * 1024 * 1024, 2 * vmem_est), 64 * 1024 * 1024))

    out = pl.pallas_call(
        _bigru_head_kernel,
        out_shape=jax.ShapeDtypeStruct((Bp, 1), jnp.float32),
        grid_spec=pltpu.PrefetchScalarGridSpec(
            num_scalar_prefetch=1,
            grid=(nB, nT),
            in_specs=in_specs,
            out_specs=pl.BlockSpec((Bt, 1), lambda b, t, ml: (b, 0)),
            scratch_shapes=[
                pltpu.VMEM((TT * Bt, 3 * H), jnp.float32),  # hoisted gi (fwd)
                pltpu.VMEM((TT * Bt, 3 * H), jnp.float32),  # hoisted gi (bwd)
                pltpu.VMEM((Bt, H), jnp.float32),           # h_fwd carry
                pltpu.VMEM((Bt, H), jnp.float32),           # h_bwd carry
            ]),
        compiler_params=pltpu.CompilerParams(
            dimension_semantics=("parallel", "arbitrary"),
            vmem_limit_bytes=vmem_limit),
    )(tile_max_len, *args)
    return out[:B]


def _ref_fine_tune_head(hidden_states, attention_mask, params):
    """Pure-JAX reference of the same masked BiGRU + classifier."""
    B, T, H = hidden_states.shape
    x = hidden_states.astype(jnp.float32)
    m = attention_mask.astype(jnp.float32)

    def gru_dir(w_ih, w_hh, b_ih, b_hh, reverse):
        def step(h, inputs):
            x_t, m_t = inputs
            gi = x_t @ w_ih + b_ih
            gh = h @ w_hh + b_hh
            r = jax.nn.sigmoid(gi[:, :H] + gh[:, :H])
            z = jax.nn.sigmoid(gi[:, H:2 * H] + gh[:, H:2 * H])
            n = jnp.tanh(gi[:, 2 * H:] + r * gh[:, 2 * H:])
            h_new = (1.0 - z) * n + z * h
            h = m_t[:, None] * h_new + (1.0 - m_t[:, None]) * h
            return h, None

        xs = (jnp.transpose(x, (1, 0, 2)), jnp.transpose(m, (1, 0)))
        h0 = jnp.zeros((B, H), jnp.float32)
        h_last, _ = jax.lax.scan(step, h0, xs, reverse=reverse)
        return h_last

    h_f = gru_dir(params["w_ih_f"], params["w_hh_f"],
                  params["b_ih_f"], params["b_hh_f"], reverse=False)
    h_b = gru_dir(params["w_ih_b"], params["w_hh_b"],
                  params["b_ih_b"], params["b_hh_b"], reverse=True)
    feat = jnp.concatenate([h_f, h_b], axis=-1)
    return feat @ params["w_cls"] + params["b_cls"]


def _init_params(key, H):
    """PyTorch-like uniform(-1/sqrt(H), 1/sqrt(H)); weights stored (in, out)."""
    bound = 1.0 / np.sqrt(H)
    ks = jax.random.split(key, 10)
    u = lambda k, shape: jax.random.uniform(k, shape, jnp.float32, -bound, bound)
    return {
        "w_ih_f": u(ks[0], (H, 3 * H)), "w_hh_f": u(ks[1], (H, 3 * H)),
        "b_ih_f": u(ks[2], (3 * H,)),   "b_hh_f": u(ks[3], (3 * H,)),
        "w_ih_b": u(ks[4], (H, 3 * H)), "w_hh_b": u(ks[5], (H, 3 * H)),
        "b_ih_b": u(ks[6], (3 * H,)),   "b_hh_b": u(ks[7], (3 * H,)),
        "w_cls": u(ks[8], (2 * H, 1)),  "b_cls": u(ks[9], (1,)),
        # NOTE: FineTuneHead.__init__ also builds an unused Linear(H, 1)
        # (`self.classifier`) that never appears in forward(); omitted here.
    }


if __name__ == "__main__":
    H = 32
    key = jax.random.PRNGKey(0)

    def run_case(k, B, T, max_len=None, **kw):
        kx, kl, kp = jax.random.split(k, 3)
        hs = jax.random.normal(kx, (B, T, H), jnp.float32)
        hi = T if max_len is None else max_len
        lengths = jax.random.randint(kl, (B,), 1, hi + 1)
        mask = (jnp.arange(T)[None, :] < lengths[:, None]).astype(jnp.int32)
        params = _init_params(kp, H)

        out = jax.block_until_ready(fine_tune_head(hs, mask, params, **kw))
        ref = _ref_fine_tune_head(hs, mask, params)
        assert out.shape == (B, 1)
        np.testing.assert_allclose(np.asarray(out), np.asarray(ref),
                                   atol=2e-4, rtol=2e-3)

    k1, k2, k3 = jax.random.split(key, 3)
    run_case(k1, B=2, T=8)                              # single (1, 1) grid block
    run_case(k2, B=12, T=21, bt=8, tt=8)                # nB=2 x nT=3 grid, padded B and T
    run_case(k3, B=16, T=48, max_len=10, bt=8, tt=8)    # exercises padded-block skip path

    print("KERNEL_OK")
</pallas_src>

<mosaic_0001>
module attributes {stable_mosaic.version = 11 : i64} {
  func.func @_bigru_head_kernel(%arg0: i32, %arg1: i32, %arg2: memref<1xi32, #tpu.memory_space<smem>>, %arg3: memref<8x8x32xf32, #tpu.memory_space<vmem>>, %arg4: memref<8x8x32xf32, #tpu.memory_space<vmem>>, %arg5: memref<8x1xi32, #tpu.memory_space<vmem>>, %arg6: memref<32x96xf32, #tpu.memory_space<vmem>>, %arg7: memref<32x96xf32, #tpu.memory_space<vmem>>, %arg8: memref<1x96xf32, #tpu.memory_space<vmem>>, %arg9: memref<1x32xf32, #tpu.memory_space<vmem>>, %arg10: memref<32x96xf32, #tpu.memory_space<vmem>>, %arg11: memref<32x96xf32, #tpu.memory_space<vmem>>, %arg12: memref<1x96xf32, #tpu.memory_space<vmem>>, %arg13: memref<1x32xf32, #tpu.memory_space<vmem>>, %arg14: memref<32x1xf32, #tpu.memory_space<vmem>>, %arg15: memref<32x1xf32, #tpu.memory_space<vmem>>, %arg16: memref<1x1xf32, #tpu.memory_space<vmem>>, %arg17: memref<8x1xf32, #tpu.memory_space<vmem>>, %arg18: memref<64x96xf32, #tpu.memory_space<vmem>>, %arg19: memref<64x96xf32, #tpu.memory_space<vmem>>, %arg20: memref<8x32xf32, #tpu.memory_space<vmem>>, %arg21: memref<8x32xf32, #tpu.memory_space<vmem>>) attributes {dimension_semantics = [#tpu.dimension_semantics<parallel>, #tpu.dimension_semantics<arbitrary>], iteration_bounds = array<i64: 1, 1>, scalar_prefetch = 1 : i64, scratch_operands = 4 : i64, tpu.core_type = #tpu.core_type<tc>, window_params = [{transform_indices = @transform_0, window_bounds = array<i64: 8, 8, 32>}, {transform_indices = @transform_1, window_bounds = array<i64: 8, 8, 32>}, {transform_indices = @transform_2, window_bounds = array<i64: 8, 1>}, {pipeline_mode = #tpu.pipeline_mode<synchronous>, transform_indices = @transform_3, window_bounds = array<i64: 32, 96>}, {pipeline_mode = #tpu.pipeline_mode<synchronous>, transform_indices = @transform_4, window_bounds = array<i64: 32, 96>}, {pipeline_mode = #tpu.pipeline_mode<synchronous>, transform_indices = @transform_5, window_bounds = array<i64: 1, 96>}, {pipeline_mode = #tpu.pipeline_mode<synchronous>, transform_indices = @transform_6, window_bounds = array<i64: 1, 32>}, {pipeline_mode = #tpu.pipeline_mode<synchronous>, transform_indices = @transform_7, window_bounds = array<i64: 32, 96>}, {pipeline_mode = #tpu.pipeline_mode<synchronous>, transform_indices = @transform_8, window_bounds = array<i64: 32, 96>}, {pipeline_mode = #tpu.pipeline_mode<synchronous>, transform_indices = @transform_9, window_bounds = array<i64: 1, 96>}, {pipeline_mode = #tpu.pipeline_mode<synchronous>, transform_indices = @transform_10, window_bounds = array<i64: 1, 32>}, {pipeline_mode = #tpu.pipeline_mode<synchronous>, transform_indices = @transform_11, window_bounds = array<i64: 32, 1>}, {pipeline_mode = #tpu.pipeline_mode<synchronous>, transform_indices = @transform_12, window_bounds = array<i64: 32, 1>}, {pipeline_mode = #tpu.pipeline_mode<synchronous>, transform_indices = @transform_13, window_bounds = array<i64: 1, 1>}, {transform_indices = @transform_14, window_bounds = array<i64: 8, 1>}]} {
    %c0_i32 = arith.constant 0 : i32
    %0 = arith.cmpi eq, %arg1, %c0_i32 : i32
    %1 = arith.extui %0 : i1 to i32
    %c0_i32_0 = arith.constant 0 : i32
    %2 = arith.cmpi ne, %1, %c0_i32_0 : i32
    scf.if %2 {
      %cst = arith.constant 0.000000e+00 : f32
      %20 = vector.broadcast %cst : f32 to vector<8x32xf32>
      %c0 = arith.constant 0 : index
      %c0_8 = arith.constant 0 : index
      %21 = vector.load %arg20[%c0, %c0_8] : memref<8x32xf32, #tpu.memory_space<vmem>>, vector<8x32xf32>
      tpu.vector_store %arg20[%c0, %c0_8], %20 {strides = array<i32>} : memref<8x32xf32, #tpu.memory_space<vmem>>, vector<8x32xf32>,
      %cst_9 = arith.constant 0.000000e+00 : f32
      %22 = vector.broadcast %cst_9 : f32 to vector<8x32xf32>
      %c0_10 = arith.constant 0 : index
      %c0_11 = arith.constant 0 : index
      %23 = vector.load %arg21[%c0_10, %c0_11] : memref<8x32xf32, #tpu.memory_space<vmem>>, vector<8x32xf32>
      tpu.vector_store %arg21[%c0_10, %c0_11], %22 {strides = array<i32>} : memref<8x32xf32, #tpu.memory_space<vmem>>, vector<8x32xf32>,
    } else {
    }
    %3 = arith.index_cast %arg0 : i32 to index
    %4 = memref.load %arg2[%3] : memref<1xi32, #tpu.memory_space<smem>>
    %c8_i32 = arith.constant 8 : i32
    %5 = arith.muli %arg1, %c8_i32 : i32
    %6 = arith.cmpi slt, %5, %4 : i32
    %c0_i32_1 = arith.constant 0 : i32
    %7 = arith.subi %c0_i32_1, %arg1 : i32
    %c8_i32_2 = arith.constant 8 : i32
    %8 = arith.muli %7, %c8_i32_2 : i32
    %9 = arith.cmpi slt, %8, %4 : i32
    %10 = arith.extui %6 : i1 to i32
    %c0_i32_3 = arith.constant 0 : i32
    %11 = arith.cmpi ne, %10, %c0_i32_3 : i32
    scf.if %11 {
      %c0 = arith.constant 0 : index
      %c0_8 = arith.constant 0 : index
      %c0_9 = arith.constant 0 : index
      %20 = vector.load %arg3[%c0, %c0_8, %c0_9] : memref<8x8x32xf32, #tpu.memory_space<vmem>>, vector<8x8x32xf32>
      %21 = vector.shape_cast %20 : vector<8x8x32xf32> to vector<64x32xf32>
      %c0_10 = arith.constant 0 : index
      %c0_11 = arith.constant 0 : index
      %22 = vector.load %arg6[%c0_10, %c0_11] : memref<32x96xf32, #tpu.memory_space<vmem>>, vector<32x96xf32>
      %cst = arith.constant dense<0.000000e+00> : vector<64x96xf32>
      %23 = tpu.matmul %21, %22, %cst {dimension_numbers = #tpu.dot_dimension_numbers<[1], [0], [0], [1], [0, 0, 1, 1], [], []>} : vector<64x32xf32>, vector<32x96xf32>, vector<64x96xf32> -> vector<64x96xf32>
      %c0_12 = arith.constant 0 : index
      %c0_13 = arith.constant 0 : index
      %24 = vector.load %arg8[%c0_12, %c0_13] : memref<1x96xf32, #tpu.memory_space<vmem>>, vector<1x96xf32>
      %25 = vector.broadcast %24 : vector<1x96xf32> to vector<64x96xf32>
      %26 = arith.addf %23, %25 : vector<64x96xf32>
      %c0_14 = arith.constant 0 : index
      %c0_15 = arith.constant 0 : index
      %27 = vector.load %arg18[%c0_14, %c0_15] : memref<64x96xf32, #tpu.memory_space<vmem>>, vector<64x96xf32>
      tpu.vector_store %arg18[%c0_14, %c0_15], %26 {strides = array<i32>} : memref<64x96xf32, #tpu.memory_space<vmem>>, vector<64x96xf32>,
    } else {
    }
    %12 = arith.extui %9 : i1 to i32
    %c0_i32_4 = arith.constant 0 : i32
    %13 = arith.cmpi ne, %12, %c0_i32_4 : i32
    scf.if %13 {
      %c0 = arith.constant 0 : index
      %c0_8 = arith.constant 0 : index
      %c0_9 = arith.constant 0 : index
      %20 = vector.load %arg4[%c0, %c0_8, %c0_9] : memref<8x8x32xf32, #tpu.memory_space<vmem>>, vector<8x8x32xf32>
      %21 = vector.shape_cast %20 : vector<8x8x32xf32> to vector<64x32xf32>
      %c0_10 = arith.constant 0 : index
      %c0_11 = arith.constant 0 : index
      %22 = vector.load %arg10[%c0_10, %c0_11] : memref<32x96xf32, #tpu.memory_space<vmem>>, vector<32x96xf32>
      %cst = arith.constant dense<0.000000e+00> : vector<64x96xf32>
      %23 = tpu.matmul %21, %22, %cst {dimension_numbers = #tpu.dot_dimension_numbers<[1], [0], [0], [1], [0, 0, 1, 1], [], []>} : vector<64x32xf32>, vector<32x96xf32>, vector<64x96xf32> -> vector<64x96xf32>
      %c0_12 = arith.constant 0 : index
      %c0_13 = arith.constant 0 : index
      %24 = vector.load %arg12[%c0_12, %c0_13] : memref<1x96xf32, #tpu.memory_space<vmem>>, vector<1x96xf32>
      %25 = vector.broadcast %24 : vector<1x96xf32> to vector<64x96xf32>
      %26 = arith.addf %23, %25 : vector<64x96xf32>
      %c0_14 = arith.constant 0 : index
      %c0_15 = arith.constant 0 : index
      %27 = vector.load %arg19[%c0_14, %c0_15] : memref<64x96xf32, #tpu.memory_space<vmem>>, vector<64x96xf32>
      tpu.vector_store %arg19[%c0_14, %c0_15], %26 {strides = array<i32>} : memref<64x96xf32, #tpu.memory_space<vmem>>, vector<64x96xf32>,
    } else {
    }
    %14 = arith.ori %6, %9 : i1
    %15 = arith.extui %14 : i1 to i32
    %c0_i32_5 = arith.constant 0 : i32
    %16 = arith.cmpi ne, %15, %c0_i32_5 : i32
    scf.if %16 {
      %c0 = arith.constant 0 : index
      %c0_8 = arith.constant 0 : index
      %20 = vector.load %arg7[%c0, %c0_8] : memref<32x96xf32, #tpu.memory_space<vmem>>, vector<32x96xf32>
      %c0_9 = arith.constant 0 : index
      %c0_10 = arith.constant 0 : index
      %21 = vector.load %arg11[%c0_9, %c0_10] : memref<32x96xf32, #tpu.memory_space<vmem>>, vector<32x96xf32>
      %c0_11 = arith.constant 0 : index
      %c0_12 = arith.constant 0 : index
      %22 = vector.load %arg9[%c0_11, %c0_12] : memref<1x32xf32, #tpu.memory_space<vmem>>, vector<1x32xf32>
      %23 = vector.shape_cast %22 : vector<1x32xf32> to vector<1x32xf32>
      %24 = vector.broadcast %23 : vector<1x32xf32> to vector<8x32xf32>
      %c0_13 = arith.constant 0 : index
      %c0_14 = arith.constant 0 : index
      %25 = vector.load %arg13[%c0_13, %c0_14] : memref<1x32xf32, #tpu.memory_space<vmem>>, vector<1x32xf32>
      %26 = vector.shape_cast %25 : vector<1x32xf32> to vector<1x32xf32>
      %27 = vector.broadcast %26 : vector<1x32xf32> to vector<8x32xf32>
      %c0_15 = arith.constant 0 : index
      %c0_16 = arith.constant 0 : index
      %28 = vector.load %arg5[%c0_15, %c0_16] : memref<8x1xi32, #tpu.memory_space<vmem>>, vector<8x1xi32>
      %c8_i32_17 = arith.constant 8 : i32
      %29 = arith.muli %arg1, %c8_i32_17 : i32
      %c0_i32_18 = arith.constant 0 : i32
      %30 = arith.subi %c0_i32_18, %arg1 : i32
      %c8_i32_19 = arith.constant 8 : i32
      %31 = arith.muli %30, %c8_i32_19 : i32
      %c7_i32 = arith.constant 7 : i32
      %32 = arith.addi %31, %c7_i32 : i32
      %c0_20 = arith.constant 0 : index
      %c0_21 = arith.constant 0 : index
      %33 = vector.load %arg20[%c0_20, %c0_21] : memref<8x32xf32, #tpu.memory_space<vmem>>, vector<8x32xf32>
      %c0_22 = arith.constant 0 : index
      %c0_23 = arith.constant 0 : index
      %34 = vector.load %arg21[%c0_22, %c0_23] : memref<8x32xf32, #tpu.memory_space<vmem>>, vector<8x32xf32>
      %c0_i32_24 = arith.constant 0 : i32
      %c8_i32_25 = arith.constant 8 : i32
      %35 = arith.muli %c0_i32_24, %c8_i32_25 : i32
      %36 = tpu.assume_multiple %35, 8 : i32
      %c7_i32_26 = arith.constant 7 : i32
      %37 = arith.subi %c7_i32_26, %c0_i32_24 : i32
      %c8_i32_27 = arith.constant 8 : i32
      %38 = arith.muli %37, %c8_i32_27 : i32
      %39 = tpu.assume_multiple %38, 8 : i32
      %40 = arith.index_cast %36 : i32 to index
      %c0_28 = arith.constant 0 : index
      %41 = vector.load %arg18[%40, %c0_28] : memref<64x96xf32, #tpu.memory_space<vmem>>, vector<8x96xf32>
      %42 = arith.index_cast %39 : i32 to index
      %c0_29 = arith.constant 0 : index
      %43 = vector.load %arg19[%42, %c0_29] : memref<64x96xf32, #tpu.memory_space<vmem>>, vector<8x96xf32>
      %44 = arith.addi %29, %c0_i32_24 : i32
      %45 = vector.broadcast %44 : i32 to vector<8x1xi32>
      %46 = arith.cmpi slt, %45, %28 : vector<8x1xi32>
      %cst = arith.constant dense<0.000000e+00> : vector<8x96xf32>
      %47 = tpu.matmul %33, %20, %cst {dimension_numbers = #tpu.dot_dimension_numbers<[1], [0], [0], [1], [0, 0, 1, 1], [], []>} : vector<8x32xf32>, vector<32x96xf32>, vector<8x96xf32> -> vector<8x96xf32>
      %48 = vector.extract_strided_slice %41 {offsets = [0, 0], sizes = [8, 32], strides = [1, 1]} : vector<8x96xf32> to vector<8x32xf32>
      %49 = vector.extract_strided_slice %47 {offsets = [0, 0], sizes = [8, 32], strides = [1, 1]} : vector<8x96xf32> to vector<8x32xf32>
      %50 = arith.addf %48, %49 : vector<8x32xf32>
      %51 = arith.negf %50 : vector<8x32xf32>
      %52 = math.exp %51 : vector<8x32xf32>
      %cst_30 = arith.constant 1.000000e+00 : f32
      %53 = vector.broadcast %cst_30 : f32 to vector<8x32xf32>
      %54 = arith.addf %53, %52 : vector<8x32xf32>
      %55 = arith.divf %53, %54 : vector<8x32xf32>
      %56 = vector.extract_strided_slice %41 {offsets = [0, 32], sizes = [8, 32], strides = [1, 1]} : vector<8x96xf32> to vector<8x32xf32>
      %57 = vector.extract_strided_slice %47 {offsets = [0, 32], sizes = [8, 32], strides = [1, 1]} : vector<8x96xf32> to vector<8x32xf32>
      %58 = arith.addf %56, %57 : vector<8x32xf32>
      %59 = arith.negf %58 : vector<8x32xf32>
      %60 = math.exp %59 : vector<8x32xf32>
      %cst_31 = arith.constant 1.000000e+00 : f32
      %61 = vector.broadcast %cst_31 : f32 to vector<8x32xf32>
      %62 = arith.addf %61, %60 : vector<8x32xf32>
      %63 = arith.divf %61, %62 : vector<8x32xf32>
      %64 = vector.extract_strided_slice %41 {offsets = [0, 64], sizes = [8, 32], strides = [1, 1]} : vector<8x96xf32> to vector<8x32xf32>
      %65 = vector.extract_strided_slice %47 {offsets = [0, 64], sizes = [8, 32], strides = [1, 1]} : vector<8x96xf32> to vector<8x32xf32>
      %66 = arith.addf %65, %24 : vector<8x32xf32>
      %67 = arith.mulf %55, %66 : vector<8x32xf32>
      %68 = arith.addf %64, %67 : vector<8x32xf32>
      %69 = math.tanh %68 : vector<8x32xf32>
      %cst_32 = arith.constant 1.000000e+00 : f32
      %70 = vector.broadcast %cst_32 : f32 to vector<8x32xf32>
      %71 = arith.subf %70, %63 : vector<8x32xf32>
      %72 = arith.mulf %71, %69 : vector<8x32xf32>
      %73 = arith.mulf %63, %33 : vector<8x32xf32>
      %74 = arith.addf %72, %73 : vector<8x32xf32>
      %75 = vector.shape_cast %46 : vector<8x1xi1> to vector<8x1xi1>
      %76 = vector.broadcast %75 : vector<8x1xi1> to vector<8x32xi1>
      %77 = arith.select %76, %74, %33 : vector<8x32xi1>, vector<8x32xf32>
      %78 = arith.subi %32, %c0_i32_24 : i32
      %79 = vector.broadcast %78 : i32 to vector<8x1xi32>
      %80 = arith.cmpi slt, %79, %28 : vector<8x1xi32>
      %cst_33 = arith.constant dense<0.000000e+00> : vector<8x96xf32>
      %81 = tpu.matmul %34, %21, %cst_33 {dimension_numbers = #tpu.dot_dimension_numbers<[1], [0], [0], [1], [0, 0, 1, 1], [], []>} : vector<8x32xf32>, vector<32x96xf32>, vector<8x96xf32> -> vector<8x96xf32>
      %82 = vector.extract_strided_slice %43 {offsets = [0, 0], sizes = [8, 32], strides = [1, 1]} : vector<8x96xf32> to vector<8x32xf32>
      %83 = vector.extract_strided_slice %81 {offsets = [0, 0], sizes = [8, 32], strides = [1, 1]} : vector<8x96xf32> to vector<8x32xf32>
      %84 = arith.addf %82, %83 : vector<8x32xf32>
      %85 = arith.negf %84 : vector<8x32xf32>
      %86 = math.exp %85 : vector<8x32xf32>
      %cst_34 = arith.constant 1.000000e+00 : f32
      %87 = vector.broadcast %cst_34 : f32 to vector<8x32xf32>
      %88 = arith.addf %87, %86 : vector<8x32xf32>
      %89 = arith.divf %87, %88 : vector<8x32xf32>
      %90 = vector.extract_strided_slice %43 {offsets = [0, 32], sizes = [8, 32], strides = [1, 1]} : vector<8x96xf32> to vector<8x32xf32>
      %91 = vector.extract_strided_slice %81 {offsets = [0, 32], sizes = [8, 32], strides = [1, 1]} : vector<8x96xf32> to vector<8x32xf32>
      %92 = arith.addf %90, %91 : vector<8x32xf32>
      %93 = arith.negf %92 : vector<8x32xf32>
      %94 = math.exp %93 : vector<8x32xf32>
      %cst_35 = arith.constant 1.000000e+00 : f32
      %95 = vector.broadcast %cst_35 : f32 to vector<8x32xf32>
      %96 = arith.addf %95, %94 : vector<8x32xf32>
      %97 = arith.divf %95, %96 : vector<8x32xf32>
      %98 = vector.extract_strided_slice %43 {offsets = [0, 64], sizes = [8, 32], strides = [1, 1]} : vector<8x96xf32> to vector<8x32xf32>
      %99 = vector.extract_strided_slice %81 {offsets = [0, 64], sizes = [8, 32], strides = [1, 1]} : vector<8x96xf32> to vector<8x32xf32>
      %100 = arith.addf %99, %27 : vector<8x32xf32>
      %101 = arith.mulf %89, %100 : vector<8x32xf32>
      %102 = arith.addf %98, %101 : vector<8x32xf32>
      %103 = math.tanh %102 : vector<8x32xf32>
      %cst_36 = arith.constant 1.000000e+00 : f32
      %104 = vector.broadcast %cst_36 : f32 to vector<8x32xf32>
      %105 = arith.subf %104, %97 : vector<8x32xf32>
      %106 = arith.mulf %105, %103 : vector<8x32xf32>
      %107 = arith.mulf %97, %34 : vector<8x32xf32>
      %108 = arith.addf %106, %107 : vector<8x32xf32>
      %109 = vector.shape_cast %80 : vector<8x1xi1> to vector<8x1xi1>
      %110 = vector.broadcast %109 : vector<8x1xi1> to vector<8x32xi1>
      %111 = arith.select %110, %108, %34 : vector<8x32xi1>, vector<8x32xf32>
      %c1_i32 = arith.constant 1 : i32
      %c8_i32_37 = arith.constant 8 : i32
      %112 = arith.muli %c1_i32, %c8_i32_37 : i32
      %113 = tpu.assume_multiple %112, 8 : i32
      %c7_i32_38 = arith.constant 7 : i32
      %114 = arith.subi %c7_i32_38, %c1_i32 : i32
      %c8_i32_39 = arith.constant 8 : i32
      %115 = arith.muli %114, %c8_i32_39 : i32
      %116 = tpu.assume_multiple %115, 8 : i32
      %117 = arith.index_cast %113 : i32 to index
      %c0_40 = arith.constant 0 : index
      %118 = vector.load %arg18[%117, %c0_40] : memref<64x96xf32, #tpu.memory_space<vmem>>, vector<8x96xf32>
      %119 = arith.index_cast %116 : i32 to index
      %c0_41 = arith.constant 0 : index
      %120 = vector.load %arg19[%119, %c0_41] : memref<64x96xf32, #tpu.memory_space<vmem>>, vector<8x96xf32>
      %121 = arith.addi %29, %c1_i32 : i32
      %122 = vector.broadcast %121 : i32 to vector<8x1xi32>
      %123 = arith.cmpi slt, %122, %28 : vector<8x1xi32>
      %cst_42 = arith.constant dense<0.000000e+00> : vector<8x96xf32>
      %124 = tpu.matmul %77, %20, %cst_42 {dimension_numbers = #tpu.dot_dimension_numbers<[1], [0], [0], [1], [0, 0, 1, 1], [], []>} : vector<8x32xf32>, vector<32x96xf32>, vector<8x96xf32> -> vector<8x96xf32>
      %125 = vector.extract_strided_slice %118 {offsets = [0, 0], sizes = [8, 32], strides = [1, 1]} : vector<8x96xf32> to vector<8x32xf32>
      %126 = vector.extract_strided_slice %124 {offsets = [0, 0], sizes = [8, 32], strides = [1, 1]} : vector<8x96xf32> to vector<8x32xf32>
      %127 = arith.addf %125, %126 : vector<8x32xf32>
      %128 = arith.negf %127 : vector<8x32xf32>
      %129 = math.exp %128 : vector<8x32xf32>
      %cst_43 = arith.constant 1.000000e+00 : f32
      %130 = vector.broadcast %cst_43 : f32 to vector<8x32xf32>
      %131 = arith.addf %130, %129 : vector<8x32xf32>
      %132 = arith.divf %130, %131 : vector<8x32xf32>
      %133 = vector.extract_strided_slice %118 {offsets = [0, 32], sizes = [8, 32], strides = [1, 1]} : vector<8x96xf32> to vector<8x32xf32>
      %134 = vector.extract_strided_slice %124 {offsets = [0, 32], sizes = [8, 32], strides = [1, 1]} : vector<8x96xf32> to vector<8x32xf32>
      %135 = arith.addf %133, %134 : vector<8x32xf32>
      %136 = arith.negf %135 : vector<8x32xf32>
      %137 = math.exp %136 : vector<8x32xf32>
      %cst_44 = arith.constant 1.000000e+00 : f32
      %138 = vector.broadcast %cst_44 : f32 to vector<8x32xf32>
      %139 = arith.addf %138, %137 : vector<8x32xf32>
      %140 = arith.divf %138, %139 : vector<8x32xf32>
      %141 = vector.extract_strided_slice %118 {offsets = [0, 64], sizes = [8, 32], strides = [1, 1]} : vector<8x96xf32> to vector<8x32xf32>
      %142 = vector.extract_strided_slice %124 {offsets = [0, 64], sizes = [8, 32], strides = [1, 1]} : vector<8x96xf32> to vector<8x32xf32>
      %143 = arith.addf %142, %24 : vector<8x32xf32>
      %144 = arith.mulf %132, %143 : vector<8x32xf32>
      %145 = arith.addf %141, %144 : vector<8x32xf32>
      %146 = math.tanh %145 : vector<8x32xf32>
      %cst_45 = arith.constant 1.000000e+00 : f32
      %147 = vector.broadcast %cst_45 : f32 to vector<8x32xf32>
      %148 = arith.subf %147, %140 : vector<8x32xf32>
      %149 = arith.mulf %148, %146 : vector<8x32xf32>
      %150 = arith.mulf %140, %77 : vector<8x32xf32>
      %151 = arith.addf %149, %150 : vector<8x32xf32>
      %152 = vector.shape_cast %123 : vector<8x1xi1> to vector<8x1xi1>
      %153 = vector.broadcast %152 : vector<8x1xi1> to vector<8x32xi1>
      %154 = arith.select %153, %151, %77 : vector<8x32xi1>, vector<8x32xf32>
      %155 = arith.subi %32, %c1_i32 : i32
      %156 = vector.broadcast %155 : i32 to vector<8x1xi32>
      %157 = arith.cmpi slt, %156, %28 : vector<8x1xi32>
      %cst_46 = arith.constant dense<0.000000e+00> : vector<8x96xf32>
      %158 = tpu.matmul %111, %21, %cst_46 {dimension_numbers = #tpu.dot_dimension_numbers<[1], [0], [0], [1], [0, 0, 1, 1], [], []>} : vector<8x32xf32>, vector<32x96xf32>, vector<8x96xf32> -> vector<8x96xf32>
      %159 = vector.extract_strided_slice %120 {offsets = [0, 0], sizes = [8, 32], strides = [1, 1]} : vector<8x96xf32> to vector<8x32xf32>
      %160 = vector.extract_strided_slice %158 {offsets = [0, 0], sizes = [8, 32], strides = [1, 1]} : vector<8x96xf32> to vector<8x32xf32>
      %161 = arith.addf %159, %160 : vector<8x32xf32>
      %162 = arith.negf %161 : vector<8x32xf32>
      %163 = math.exp %162 : vector<8x32xf32>
      %cst_47 = arith.constant 1.000000e+00 : f32
      %164 = vector.broadcast %cst_47 : f32 to vector<8x32xf32>
      %165 = arith.addf %164, %163 : vector<8x32xf32>
      %166 = arith.divf %164, %165 : vector<8x32xf32>
      %167 = vector.extract_strided_slice %120 {offsets = [0, 32], sizes = [8, 32], strides = [1, 1]} : vector<8x96xf32> to vector<8x32xf32>
      %168 = vector.extract_strided_slice %158 {offsets = [0, 32], sizes = [8, 32], strides = [1, 1]} : vector<8x96xf32> to vector<8x32xf32>
      %169 = arith.addf %167, %168 : vector<8x32xf32>
      %170 = arith.negf %169 : vector<8x32xf32>
      %171 = math.exp %170 : vector<8x32xf32>
      %cst_48 = arith.constant 1.000000e+00 : f32
      %172 = vector.broadcast %cst_48 : f32 to vector<8x32xf32>
      %173 = arith.addf %172, %171 : vector<8x32xf32>
      %174 = arith.divf %172, %173 : vector<8x32xf32>
      %175 = vector.extract_strided_slice %120 {offsets = [0, 64], sizes = [8, 32], strides = [1, 1]} : vector<8x96xf32> to vector<8x32xf32>
      %176 = vector.extract_strided_slice %158 {offsets = [0, 64], sizes = [8, 32], strides = [1, 1]} : vector<8x96xf32> to vector<8x32xf32>
      %177 = arith.addf %176, %27 : vector<8x32xf32>
      %178 = arith.mulf %166, %177 : vector<8x32xf32>
      %179 = arith.addf %175, %178 : vector<8x32xf32>
      %180 = math.tanh %179 : vector<8x32xf32>
      %cst_49 = arith.constant 1.000000e+00 : f32
      %181 = vector.broadcast %cst_49 : f32 to vector<8x32xf32>
      %182 = arith.subf %181, %174 : vector<8x32xf32>
      %183 = arith.mulf %182, %180 : vector<8x32xf32>
      %184 = arith.mulf %174, %111 : vector<8x32xf32>
      %185 = arith.addf %183, %184 : vector<8x32xf32>
      %186 = vector.shape_cast %157 : vector<8x1xi1> to vector<8x1xi1>
      %187 = vector.broadcast %186 : vector<8x1xi1> to vector<8x32xi1>
      %188 = arith.select %187, %185, %111 : vector<8x32xi1>, vector<8x32xf32>
      %c2_i32 = arith.constant 2 : i32
      %c8_i32_50 = arith.constant 8 : i32
      %189 = arith.muli %c2_i32, %c8_i32_50 : i32
      %190 = tpu.assume_multiple %189, 8 : i32
      %c7_i32_51 = arith.constant 7 : i32
      %191 = arith.subi %c7_i32_51, %c2_i32 : i32
      %c8_i32_52 = arith.constant 8 : i32
      %192 = arith.muli %191, %c8_i32_52 : i32
      %193 = tpu.assume_multiple %192, 8 : i32
      %194 = arith.index_cast %190 : i32 to index
      %c0_53 = arith.constant 0 : index
      %195 = vector.load %arg18[%194, %c0_53] : memref<64x96xf32, #tpu.memory_space<vmem>>, vector<8x96xf32>
      %196 = arith.index_cast %193 : i32 to index
      %c0_54 = arith.constant 0 : index
      %197 = vector.load %arg19[%196, %c0_54] : memref<64x96xf32, #tpu.memory_space<vmem>>, vector<8x96xf32>
      %198 = arith.addi %29, %c2_i32 : i32
      %199 = vector.broadcast %198 : i32 to vector<8x1xi32>
      %200 = arith.cmpi slt, %199, %28 : vector<8x1xi32>
      %cst_55 = arith.constant dense<0.000000e+00> : vector<8x96xf32>
      %201 = tpu.matmul %154, %20, %cst_55 {dimension_numbers = #tpu.dot_dimension_numbers<[1], [0], [0], [1], [0, 0, 1, 1], [], []>} : vector<8x32xf32>, vector<32x96xf32>, vector<8x96xf32> -> vector<8x96xf32>
      %202 = vector.extract_strided_slice %195 {offsets = [0, 0], sizes = [8, 32], strides = [1, 1]} : vector<8x96xf32> to vector<8x32xf32>
      %203 = vector.extract_strided_slice %201 {offsets = [0, 0], sizes = [8, 32], strides = [1, 1]} : vector<8x96xf32> to vector<8x32xf32>
      %204 = arith.addf %202, %203 : vector<8x32xf32>
      %205 = arith.negf %204 : vector<8x32xf32>
      %206 = math.exp %205 : vector<8x32xf32>
      %cst_56 = arith.constant 1.000000e+00 : f32
      %207 = vector.broadcast %cst_56 : f32 to vector<8x32xf32>
      %208 = arith.addf %207, %206 : vector<8x32xf32>
      %209 = arith.divf %207, %208 : vector<8x32xf32>
      %210 = vector.extract_strided_slice %195 {offsets = [0, 32], sizes = [8, 32], strides = [1, 1]} : vector<8x96xf32> to vector<8x32xf32>
      %211 = vector.extract_strided_slice %201 {offsets = [0, 32], sizes = [8, 32], strides = [1, 1]} : vector<8x96xf32> to vector<8x32xf32>
      %212 = arith.addf %210, %211 : vector<8x32xf32>
      %213 = arith.negf %212 : vector<8x32xf32>
      %214 = math.exp %213 : vector<8x32xf32>
      %cst_57 = arith.constant 1.000000e+00 : f32
      %215 = vector.broadcast %cst_57 : f32 to vector<8x32xf32>
      %216 = arith.addf %215, %214 : vector<8x32xf32>
      %217 = arith.divf %215, %216 : vector<8x32xf32>
      %218 = vector.extract_strided_slice %195 {offsets = [0, 64], sizes = [8, 32], strides = [1, 1]} : vector<8x96xf32> to vector<8x32xf32>
      %219 = vector.extract_strided_slice %201 {offsets = [0, 64], sizes = [8, 32], strides = [1, 1]} : vector<8x96xf32> to vector<8x32xf32>
      %220 = arith.addf %219, %24 : vector<8x32xf32>
      %221 = arith.mulf %209, %220 : vector<8x32xf32>
      %222 = arith.addf %218, %221 : vector<8x32xf32>
      %223 = math.tanh %222 : vector<8x32xf32>
      %cst_58 = arith.constant 1.000000e+00 : f32
      %224 = vector.broadcast %cst_58 : f32 to vector<8x32xf32>
      %225 = arith.subf %224, %217 : vector<8x32xf32>
      %226 = arith.mulf %225, %223 : vector<8x32xf32>
      %227 = arith.mulf %217, %154 : vector<8x32xf32>
      %228 = arith.addf %226, %227 : vector<8x32xf32>
      %229 = vector.shape_cast %200 : vector<8x1xi1> to vector<8x1xi1>
      %230 = vector.broadcast %229 : vector<8x1xi1> to vector<8x32xi1>
      %231 = arith.select %230, %228, %154 : vector<8x32xi1>, vector<8x32xf32>
      %232 = arith.subi %32, %c2_i32 : i32
      %233 = vector.broadcast %232 : i32 to vector<8x1xi32>
      %234 = arith.cmpi slt, %233, %28 : vector<8x1xi32>
      %cst_59 = arith.constant dense<0.000000e+00> : vector<8x96xf32>
      %235 = tpu.matmul %188, %21, %cst_59 {dimension_numbers = #tpu.dot_dimension_numbers<[1], [0], [0], [1], [0, 0, 1, 1], [], []>} : vector<8x32xf32>, vector<32x96xf32>, vector<8x96xf32> -> vector<8x96xf32>
      %236 = vector.extract_strided_slice %197 {offsets = [0, 0], sizes = [8, 32], strides = [1, 1]} : vector<8x96xf32> to vector<8x32xf32>
      %237 = vector.extract_strided_slice %235 {offsets = [0, 0], sizes = [8, 32], strides = [1, 1]} : vector<8x96xf32> to vector<8x32xf32>
      %238 = arith.addf %236, %237 : vector<8x32xf32>
      %239 = arith.negf %238 : vector<8x32xf32>
      %240 = math.exp %239 : vector<8x32xf32>
      %cst_60 = arith.constant 1.000000e+00 : f32
      %241 = vector.broadcast %cst_60 : f32 to vector<8x32xf32>
      %242 = arith.addf %241, %240 : vector<8x32xf32>
      %243 = arith.divf %241, %242 : vector<8x32xf32>
      %244 = vector.extract_strided_slice %197 {offsets = [0, 32], sizes = [8, 32], strides = [1, 1]} : vector<8x96xf32> to vector<8x32xf32>
      %245 = vector.extract_strided_slice %235 {offsets = [0, 32], sizes = [8, 32], strides = [1, 1]} : vector<8x96xf32> to vector<8x32xf32>
      %246 = arith.addf %244, %245 : vector<8x32xf32>
      %247 = arith.negf %246 : vector<8x32xf32>
      %248 = math.exp %247 : vector<8x32xf32>
      %cst_61 = arith.constant 1.000000e+00 : f32
      %249 = vector.broadcast %cst_61 : f32 to vector<8x32xf32>
      %250 = arith.addf %249, %248 : vector<8x32xf32>
      %251 = arith.divf %249, %250 : vector<8x32xf32>
      %252 = vector.extract_strided_slice %197 {offsets = [0, 64], sizes = [8, 32], strides = [1, 1]} : vector<8x96xf32> to vector<8x32xf32>
      %253 = vector.extract_strided_slice %235 {offsets = [0, 64], sizes = [8, 32], strides = [1, 1]} : vector<8x96xf32> to vector<8x32xf32>
      %254 = arith.addf %253, %27 : vector<8x32xf32>
      %255 = arith.mulf %243, %254 : vector<8x32xf32>
      %256 = arith.addf %252, %255 : vector<8x32xf32>
      %257 = math.tanh %256 : vector<8x32xf32>
      %cst_62 = arith.constant 1.000000e+00 : f32
      %258 = vector.broadcast %cst_62 : f32 to vector<8x32xf32>
      %259 = arith.subf %258, %251 : vector<8x32xf32>
      %260 = arith.mulf %259, %257 : vector<8x32xf32>
      %261 = arith.mulf %251, %188 : vector<8x32xf32>
      %262 = arith.addf %260, %261 : vector<8x32xf32>
      %263 = vector.shape_cast %234 : vector<8x1xi1> to vector<8x1xi1>
      %264 = vector.broadcast %263 : vector<8x1xi1> to vector<8x32xi1>
      %265 = arith.select %264, %262, %188 : vector<8x32xi1>, vector<8x32xf32>
      %c3_i32 = arith.constant 3 : i32
      %c8_i32_63 = arith.constant 8 : i32
      %266 = arith.muli %c3_i32, %c8_i32_63 : i32
      %267 = tpu.assume_multiple %266, 8 : i32
      %c7_i32_64 = arith.constant 7 : i32
      %268 = arith.subi %c7_i32_64, %c3_i32 : i32
      %c8_i32_65 = arith.constant 8 : i32
      %269 = arith.muli %268, %c8_i32_65 : i32
      %270 = tpu.assume_multiple %269, 8 : i32
      %271 = arith.index_cast %267 : i32 to index
      %c0_66 = arith.constant 0 : index
      %272 = vector.load %arg18[%271, %c0_66] : memref<64x96xf32, #tpu.memory_space<vmem>>, vector<8x96xf32>
      %273 = arith.index_cast %270 : i32 to index
      %c0_67 = arith.constant 0 : index
      %274 = vector.load %arg19[%273, %c0_67] : memref<64x96xf32, #tpu.memory_space<vmem>>, vector<8x96xf32>
      %275 = arith.addi %29, %c3_i32 : i32
      %276 = vector.broadcast %275 : i32 to vector<8x1xi32>
      %277 = arith.cmpi slt, %276, %28 : vector<8x1xi32>
      %cst_68 = arith.constant dense<0.000000e+00> : vector<8x96xf32>
      %278 = tpu.matmul %231, %20, %cst_68 {dimension_numbers = #tpu.dot_dimension_numbers<[1], [0], [0], [1], [0, 0, 1, 1], [], []>} : vector<8x32xf32>, vector<32x96xf32>, vector<8x96xf32> -> vector<8x96xf32>
      %279 = vector.extract_strided_slice %272 {offsets = [0, 0], sizes = [8, 32], strides = [1, 1]} : vector<8x96xf32> to vector<8x32xf32>
      %280 = vector.extract_strided_slice %278 {offsets = [0, 0], sizes = [8, 32], strides = [1, 1]} : vector<8x96xf32> to vector<8x32xf32>
      %281 = arith.addf %279, %280 : vector<8x32xf32>
      %282 = arith.negf %281 : vector<8x32xf32>
      %283 = math.exp %282 : vector<8x32xf32>
      %cst_69 = arith.constant 1.000000e+00 : f32
      %284 = vector.broadcast %cst_69 : f32 to vector<8x32xf32>
      %285 = arith.addf %284, %283 : vector<8x32xf32>
      %286 = arith.divf %284, %285 : vector<8x32xf32>
      %287 = vector.extract_strided_slice %272 {offsets = [0, 32], sizes = [8, 32], strides = [1, 1]} : vector<8x96xf32> to vector<8x32xf32>
      %288 = vector.extract_strided_slice %278 {offsets = [0, 32], sizes = [8, 32], strides = [1, 1]} : vector<8x96xf32> to vector<8x32xf32>
      %289 = arith.addf %287, %288 : vector<8x32xf32>
      %290 = arith.negf %289 : vector<8x32xf32>
      %291 = math.exp %290 : vector<8x32xf32>
      %cst_70 = arith.constant 1.000000e+00 : f32
      %292 = vector.broadcast %cst_70 : f32 to vector<8x32xf32>
      %293 = arith.addf %292, %291 : vector<8x32xf32>
      %294 = arith.divf %292, %293 : vector<8x32xf32>
      %295 = vector.extract_strided_slice %272 {offsets = [0, 64], sizes = [8, 32], strides = [1, 1]} : vector<8x96xf32> to vector<8x32xf32>
      %296 = vector.extract_strided_slice %278 {offsets = [0, 64], sizes = [8, 32], strides = [1, 1]} : vector<8x96xf32> to vector<8x32xf32>
      %297 = arith.addf %296, %24 : vector<8x32xf32>
      %298 = arith.mulf %286, %297 : vector<8x32xf32>
      %299 = arith.addf %295, %298 : vector<8x32xf32>
      %300 = math.tanh %299 : vector<8x32xf32>
      %cst_71 = arith.constant 1.000000e+00 : f32
      %301 = vector.broadcast %cst_71 : f32 to vector<8x32xf32>
      %302 = arith.subf %301, %294 : vector<8x32xf32>
      %303 = arith.mulf %302, %300 : vector<8x32xf32>
      %304 = arith.mulf %294, %231 : vector<8x32xf32>
      %305 = arith.addf %303, %304 : vector<8x32xf32>
      %306 = vector.shape_cast %277 : vector<8x1xi1> to vector<8x1xi1>
      %307 = vector.broadcast %306 : vector<8x1xi1> to vector<8x32xi1>
      %308 = arith.select %307, %305, %231 : vector<8x32xi1>, vector<8x32xf32>
      %309 = arith.subi %32, %c3_i32 : i32
      %310 = vector.broadcast %309 : i32 to vector<8x1xi32>
      %311 = arith.cmpi slt, %310, %28 : vector<8x1xi32>
      %cst_72 = arith.constant dense<0.000000e+00> : vector<8x96xf32>
      %312 = tpu.matmul %265, %21, %cst_72 {dimension_numbers = #tpu.dot_dimension_numbers<[1], [0], [0], [1], [0, 0, 1, 1], [], []>} : vector<8x32xf32>, vector<32x96xf32>, vector<8x96xf32> -> vector<8x96xf32>
      %313 = vector.extract_strided_slice %274 {offsets = [0, 0], sizes = [8, 32], strides = [1, 1]} : vector<8x96xf32> to vector<8x32xf32>
      %314 = vector.extract_strided_slice %312 {offsets = [0, 0], sizes = [8, 32], strides = [1, 1]} : vector<8x96xf32> to vector<8x32xf32>
      %315 = arith.addf %313, %314 : vector<8x32xf32>
      %316 = arith.negf %315 : vector<8x32xf32>
      %317 = math.exp %316 : vector<8x32xf32>
      %cst_73 = arith.constant 1.000000e+00 : f32
      %318 = vector.broadcast %cst_73 : f32 to vector<8x32xf32>
      %319 = arith.addf %318, %317 : vector<8x32xf32>
      %320 = arith.divf %318, %319 : vector<8x32xf32>
      %321 = vector.extract_strided_slice %274 {offsets = [0, 32], sizes = [8, 32], strides = [1, 1]} : vector<8x96xf32> to vector<8x32xf32>
      %322 = vector.extract_strided_slice %312 {offsets = [0, 32], sizes = [8, 32], strides = [1, 1]} : vector<8x96xf32> to vector<8x32xf32>
      %323 = arith.addf %321, %322 : vector<8x32xf32>
      %324 = arith.negf %323 : vector<8x32xf32>
      %325 = math.exp %324 : vector<8x32xf32>
      %cst_74 = arith.constant 1.000000e+00 : f32
      %326 = vector.broadcast %cst_74 : f32 to vector<8x32xf32>
      %327 = arith.addf %326, %325 : vector<8x32xf32>
      %328 = arith.divf %326, %327 : vector<8x32xf32>
      %329 = vector.extract_strided_slice %274 {offsets = [0, 64], sizes = [8, 32], strides = [1, 1]} : vector<8x96xf32> to vector<8x32xf32>
      %330 = vector.extract_strided_slice %312 {offsets = [0, 64], sizes = [8, 32], strides = [1, 1]} : vector<8x96xf32> to vector<8x32xf32>
      %331 = arith.addf %330, %27 : vector<8x32xf32>
      %332 = arith.mulf %320, %331 : vector<8x32xf32>
      %333 = arith.addf %329, %332 : vector<8x32xf32>
      %334 = math.tanh %333 : vector<8x32xf32>
      %cst_75 = arith.constant 1.000000e+00 : f32
      %335 = vector.broadcast %cst_75 : f32 to vector<8x32xf32>
      %336 = arith.subf %335, %328 : vector<8x32xf32>
      %337 = arith.mulf %336, %334 : vector<8x32xf32>
      %338 = arith.mulf %328, %265 : vector<8x32xf32>
      %339 = arith.addf %337, %338 : vector<8x32xf32>
      %340 = vector.shape_cast %311 : vector<8x1xi1> to vector<8x1xi1>
      %341 = vector.broadcast %340 : vector<8x1xi1> to vector<8x32xi1>
      %342 = arith.select %341, %339, %265 : vector<8x32xi1>, vector<8x32xf32>
      %c4_i32 = arith.constant 4 : i32
      %c8_i32_76 = arith.constant 8 : i32
      %343 = arith.muli %c4_i32, %c8_i32_76 : i32
      %344 = tpu.assume_multiple %343, 8 : i32
      %c7_i32_77 = arith.constant 7 : i32
      %345 = arith.subi %c7_i32_77, %c4_i32 : i32
      %c8_i32_78 = arith.constant 8 : i32
      %346 = arith.muli %345, %c8_i32_78 : i32
      %347 = tpu.assume_multiple %346, 8 : i32
      %348 = arith.index_cast %344 : i32 to index
      %c0_79 = arith.constant 0 : index
      %349 = vector.load %arg18[%348, %c0_79] : memref<64x96xf32, #tpu.memory_space<vmem>>, vector<8x96xf32>
      %350 = arith.index_cast %347 : i32 to index
      %c0_80 = arith.constant 0 : index
      %351 = vector.load %arg19[%350, %c0_80] : memref<64x96xf32, #tpu.memory_space<vmem>>, vector<8x96xf32>
      %352 = arith.addi %29, %c4_i32 : i32
      %353 = vector.broadcast %352 : i32 to vector<8x1xi32>
      %354 = arith.cmpi slt, %353, %28 : vector<8x1xi32>
      %cst_81 = arith.constant dense<0.000000e+00> : vector<8x96xf32>
      %355 = tpu.matmul %308, %20, %cst_81 {dimension_numbers = #tpu.dot_dimension_numbers<[1], [0], [0], [1], [0, 0, 1, 1], [], []>} : vector<8x32xf32>, vector<32x96xf32>, vector<8x96xf32> -> vector<8x96xf32>
      %356 = vector.extract_strided_slice %349 {offsets = [0, 0], sizes = [8, 32], strides = [1, 1]} : vector<8x96xf32> to vector<8x32xf32>
      %357 = vector.extract_strided_slice %355 {offsets = [0, 0], sizes = [8, 32], strides = [1, 1]} : vector<8x96xf32> to vector<8x32xf32>
      %358 = arith.addf %356, %357 : vector<8x32xf32>
      %359 = arith.negf %358 : vector<8x32xf32>
      %360 = math.exp %359 : vector<8x32xf32>
      %cst_82 = arith.constant 1.000000e+00 : f32
      %361 = vector.broadcast %cst_82 : f32 to vector<8x32xf32>
      %362 = arith.addf %361, %360 : vector<8x32xf32>
      %363 = arith.divf %361, %362 : vector<8x32xf32>
      %364 = vector.extract_strided_slice %349 {offsets = [0, 32], sizes = [8, 32], strides = [1, 1]} : vector<8x96xf32> to vector<8x32xf32>
      %365 = vector.extract_strided_slice %355 {offsets = [0, 32], sizes = [8, 32], strides = [1, 1]} : vector<8x96xf32> to vector<8x32xf32>
      %366 = arith.addf %364, %365 : vector<8x32xf32>
      %367 = arith.negf %366 : vector<8x32xf32>
      %368 = math.exp %367 : vector<8x32xf32>
      %cst_83 = arith.constant 1.000000e+00 : f32
      %369 = vector.broadcast %cst_83 : f32 to vector<8x32xf32>
      %370 = arith.addf %369, %368 : vector<8x32xf32>
      %371 = arith.divf %369, %370 : vector<8x32xf32>
      %372 = vector.extract_strided_slice %349 {offsets = [0, 64], sizes = [8, 32], strides = [1, 1]} : vector<8x96xf32> to vector<8x32xf32>
      %373 = vector.extract_strided_slice %355 {offsets = [0, 64], sizes = [8, 32], strides = [1, 1]} : vector<8x96xf32> to vector<8x32xf32>
      %374 = arith.addf %373, %24 : vector<8x32xf32>
      %375 = arith.mulf %363, %374 : vector<8x32xf32>
      %376 = arith.addf %372, %375 : vector<8x32xf32>
      %377 = math.tanh %376 : vector<8x32xf32>
      %cst_84 = arith.constant 1.000000e+00 : f32
      %378 = vector.broadcast %cst_84 : f32 to vector<8x32xf32>
      %379 = arith.subf %378, %371 : vector<8x32xf32>
      %380 = arith.mulf %379, %377 : vector<8x32xf32>
      %381 = arith.mulf %371, %308 : vector<8x32xf32>
      %382 = arith.addf %380, %381 : vector<8x32xf32>
      %383 = vector.shape_cast %354 : vector<8x1xi1> to vector<8x1xi1>
      %384 = vector.broadcast %383 : vector<8x1xi1> to vector<8x32xi1>
      %385 = arith.select %384, %382, %308 : vector<8x32xi1>, vector<8x32xf32>
      %386 = arith.subi %32, %c4_i32 : i32
      %387 = vector.broadcast %386 : i32 to vector<8x1xi32>
      %388 = arith.cmpi slt, %387, %28 : vector<8x1xi32>
      %cst_85 = arith.constant dense<0.000000e+00> : vector<8x96xf32>
      %389 = tpu.matmul %342, %21, %cst_85 {dimension_numbers = #tpu.dot_dimension_numbers<[1], [0], [0], [1], [0, 0, 1, 1], [], []>} : vector<8x32xf32>, vector<32x96xf32>, vector<8x96xf32> -> vector<8x96xf32>
      %390 = vector.extract_strided_slice %351 {offsets = [0, 0], sizes = [8, 32], strides = [1, 1]} : vector<8x96xf32> to vector<8x32xf32>
      %391 = vector.extract_strided_slice %389 {offsets = [0, 0], sizes = [8, 32], strides = [1, 1]} : vector<8x96xf32> to vector<8x32xf32>
      %392 = arith.addf %390, %391 : vector<8x32xf32>
      %393 = arith.negf %392 : vector<8x32xf32>
      %394 = math.exp %393 : vector<8x32xf32>
      %cst_86 = arith.constant 1.000000e+00 : f32
      %395 = vector.broadcast %cst_86 : f32 to vector<8x32xf32>
      %396 = arith.addf %395, %394 : vector<8x32xf32>
      %397 = arith.divf %395, %396 : vector<8x32xf32>
      %398 = vector.extract_strided_slice %351 {offsets = [0, 32], sizes = [8, 32], strides = [1, 1]} : vector<8x96xf32> to vector<8x32xf32>
      %399 = vector.extract_strided_slice %389 {offsets = [0, 32], sizes = [8, 32], strides = [1, 1]} : vector<8x96xf32> to vector<8x32xf32>
      %400 = arith.addf %398, %399 : vector<8x32xf32>
      %401 = arith.negf %400 : vector<8x32xf32>
      %402 = math.exp %401 : vector<8x32xf32>
      %cst_87 = arith.constant 1.000000e+00 : f32
      %403 = vector.broadcast %cst_87 : f32 to vector<8x32xf32>
      %404 = arith.addf %403, %402 : vector<8x32xf32>
      %405 = arith.divf %403, %404 : vector<8x32xf32>
      %406 = vector.extract_strided_slice %351 {offsets = [0, 64], sizes = [8, 32], strides = [1, 1]} : vector<8x96xf32> to vector<8x32xf32>
      %407 = vector.extract_strided_slice %389 {offsets = [0, 64], sizes = [8, 32], strides = [1, 1]} : vector<8x96xf32> to vector<8x32xf32>
      %408 = arith.addf %407, %27 : vector<8x32xf32>
      %409 = arith.mulf %397, %408 : vector<8x32xf32>
      %410 = arith.addf %406, %409 : vector<8x32xf32>
      %411 = math.tanh %410 : vector<8x32xf32>
      %cst_88 = arith.constant 1.000000e+00 : f32
      %412 = vector.broadcast %cst_88 : f32 to vector<8x32xf32>
      %413 = arith.subf %412, %405 : vector<8x32xf32>
      %414 = arith.mulf %413, %411 : vector<8x32xf32>
      %415 = arith.mulf %405, %342 : vector<8x32xf32>
      %416 = arith.addf %414, %415 : vector<8x32xf32>
      %417 = vector.shape_cast %388 : vector<8x1xi1> to vector<8x1xi1>
      %418 = vector.broadcast %417 : vector<8x1xi1> to vector<8x32xi1>
      %419 = arith.select %418, %416, %342 : vector<8x32xi1>, vector<8x32xf32>
      %c5_i32 = arith.constant 5 : i32
      %c8_i32_89 = arith.constant 8 : i32
      %420 = arith.muli %c5_i32, %c8_i32_89 : i32
      %421 = tpu.assume_multiple %420, 8 : i32
      %c7_i32_90 = arith.constant 7 : i32
      %422 = arith.subi %c7_i32_90, %c5_i32 : i32
      %c8_i32_91 = arith.constant 8 : i32
      %423 = arith.muli %422, %c8_i32_91 : i32
      %424 = tpu.assume_multiple %423, 8 : i32
      %425 = arith.index_cast %421 : i32 to index
      %c0_92 = arith.constant 0 : index
      %426 = vector.load %arg18[%425, %c0_92] : memref<64x96xf32, #tpu.memory_space<vmem>>, vector<8x96xf32>
      %427 = arith.index_cast %424 : i32 to index
      %c0_93 = arith.constant 0 : index
      %428 = vector.load %arg19[%427, %c0_93] : memref<64x96xf32, #tpu.memory_space<vmem>>, vector<8x96xf32>
      %429 = arith.addi %29, %c5_i32 : i32
      %430 = vector.broadcast %429 : i32 to vector<8x1xi32>
      %431 = arith.cmpi slt, %430, %28 : vector<8x1xi32>
      %cst_94 = arith.constant dense<0.000000e+00> : vector<8x96xf32>
      %432 = tpu.matmul %385, %20, %cst_94 {dimension_numbers = #tpu.dot_dimension_numbers<[1], [0], [0], [1], [0, 0, 1, 1], [], []>} : vector<8x32xf32>, vector<32x96xf32>, vector<8x96xf32> -> vector<8x96xf32>
      %433 = vector.extract_strided_slice %426 {offsets = [0, 0], sizes = [8, 32], strides = [1, 1]} : vector<8x96xf32> to vector<8x32xf32>
      %434 = vector.extract_strided_slice %432 {offsets = [0, 0], sizes = [8, 32], strides = [1, 1]} : vector<8x96xf32> to vector<8x32xf32>
      %435 = arith.addf %433, %434 : vector<8x32xf32>
      %436 = arith.negf %435 : vector<8x32xf32>
      %437 = math.exp %436 : vector<8x32xf32>
      %cst_95 = arith.constant 1.000000e+00 : f32
      %438 = vector.broadcast %cst_95 : f32 to vector<8x32xf32>
      %439 = arith.addf %438, %437 : vector<8x32xf32>
      %440 = arith.divf %438, %439 : vector<8x32xf32>
      %441 = vector.extract_strided_slice %426 {offsets = [0, 32], sizes = [8, 32], strides = [1, 1]} : vector<8x96xf32> to vector<8x32xf32>
      %442 = vector.extract_strided_slice %432 {offsets = [0, 32], sizes = [8, 32], strides = [1, 1]} : vector<8x96xf32> to vector<8x32xf32>
      %443 = arith.addf %441, %442 : vector<8x32xf32>
      %444 = arith.negf %443 : vector<8x32xf32>
      %445 = math.exp %444 : vector<8x32xf32>
      %cst_96 = arith.constant 1.000000e+00 : f32
      %446 = vector.broadcast %cst_96 : f32 to vector<8x32xf32>
      %447 = arith.addf %446, %445 : vector<8x32xf32>
      %448 = arith.divf %446, %447 : vector<8x32xf32>
      %449 = vector.extract_strided_slice %426 {offsets = [0, 64], sizes = [8, 32], strides = [1, 1]} : vector<8x96xf32> to vector<8x32xf32>
      %450 = vector.extract_strided_slice %432 {offsets = [0, 64], sizes = [8, 32], strides = [1, 1]} : vector<8x96xf32> to vector<8x32xf32>
      %451 = arith.addf %450, %24 : vector<8x32xf32>
      %452 = arith.mulf %440, %451 : vector<8x32xf32>
      %453 = arith.addf %449, %452 : vector<8x32xf32>
      %454 = math.tanh %453 : vector<8x32xf32>
      %cst_97 = arith.constant 1.000000e+00 : f32
      %455 = vector.broadcast %cst_97 : f32 to vector<8x32xf32>
      %456 = arith.subf %455, %448 : vector<8x32xf32>
      %457 = arith.mulf %456, %454 : vector<8x32xf32>
      %458 = arith.mulf %448, %385 : vector<8x32xf32>
      %459 = arith.addf %457, %458 : vector<8x32xf32>
      %460 = vector.shape_cast %431 : vector<8x1xi1> to vector<8x1xi1>
      %461 = vector.broadcast %460 : vector<8x1xi1> to vector<8x32xi1>
      %462 = arith.select %461, %459, %385 : vector<8x32xi1>, vector<8x32xf32>
      %463 = arith.subi %32, %c5_i32 : i32
      %464 = vector.broadcast %463 : i32 to vector<8x1xi32>
      %465 = arith.cmpi slt, %464, %28 : vector<8x1xi32>
      %cst_98 = arith.constant dense<0.000000e+00> : vector<8x96xf32>
      %466 = tpu.matmul %419, %21, %cst_98 {dimension_numbers = #tpu.dot_dimension_numbers<[1], [0], [0], [1], [0, 0, 1, 1], [], []>} : vector<8x32xf32>, vector<32x96xf32>, vector<8x96xf32> -> vector<8x96xf32>
      %467 = vector.extract_strided_slice %428 {offsets = [0, 0], sizes = [8, 32], strides = [1, 1]} : vector<8x96xf32> to vector<8x32xf32>
      %468 = vector.extract_strided_slice %466 {offsets = [0, 0], sizes = [8, 32], strides = [1, 1]} : vector<8x96xf32> to vector<8x32xf32>
      %469 = arith.addf %467, %468 : vector<8x32xf32>
      %470 = arith.negf %469 : vector<8x32xf32>
      %471 = math.exp %470 : vector<8x32xf32>
      %cst_99 = arith.constant 1.000000e+00 : f32
      %472 = vector.broadcast %cst_99 : f32 to vector<8x32xf32>
      %473 = arith.addf %472, %471 : vector<8x32xf32>
      %474 = arith.divf %472, %473 : vector<8x32xf32>
      %475 = vector.extract_strided_slice %428 {offsets = [0, 32], sizes = [8, 32], strides = [1, 1]} : vector<8x96xf32> to vector<8x32xf32>
      %476 = vector.extract_strided_slice %466 {offsets = [0, 32], sizes = [8, 32], strides = [1, 1]} : vector<8x96xf32> to vector<8x32xf32>
      %477 = arith.addf %475, %476 : vector<8x32xf32>
      %478 = arith.negf %477 : vector<8x32xf32>
      %479 = math.exp %478 : vector<8x32xf32>
      %cst_100 = arith.constant 1.000000e+00 : f32
      %480 = vector.broadcast %cst_100 : f32 to vector<8x32xf32>
      %481 = arith.addf %480, %479 : vector<8x32xf32>
      %482 = arith.divf %480, %481 : vector<8x32xf32>
      %483 = vector.extract_strided_slice %428 {offsets = [0, 64], sizes = [8, 32], strides = [1, 1]} : vector<8x96xf32> to vector<8x32xf32>
      %484 = vector.extract_strided_slice %466 {offsets = [0, 64], sizes = [8, 32], strides = [1, 1]} : vector<8x96xf32> to vector<8x32xf32>
      %485 = arith.addf %484, %27 : vector<8x32xf32>
      %486 = arith.mulf %474, %485 : vector<8x32xf32>
      %487 = arith.addf %483, %486 : vector<8x32xf32>
      %488 = math.tanh %487 : vector<8x32xf32>
      %cst_101 = arith.constant 1.000000e+00 : f32
      %489 = vector.broadcast %cst_101 : f32 to vector<8x32xf32>
      %490 = arith.subf %489, %482 : vector<8x32xf32>
      %491 = arith.mulf %490, %488 : vector<8x32xf32>
      %492 = arith.mulf %482, %419 : vector<8x32xf32>
      %493 = arith.addf %491, %492 : vector<8x32xf32>
      %494 = vector.shape_cast %465 : vector<8x1xi1> to vector<8x1xi1>
      %495 = vector.broadcast %494 : vector<8x1xi1> to vector<8x32xi1>
      %496 = arith.select %495, %493, %419 : vector<8x32xi1>, vector<8x32xf32>
      %c6_i32 = arith.constant 6 : i32
      %c8_i32_102 = arith.constant 8 : i32
      %497 = arith.muli %c6_i32, %c8_i32_102 : i32
      %498 = tpu.assume_multiple %497, 8 : i32
      %c7_i32_103 = arith.constant 7 : i32
      %499 = arith.subi %c7_i32_103, %c6_i32 : i32
      %c8_i32_104 = arith.constant 8 : i32
      %500 = arith.muli %499, %c8_i32_104 : i32
      %501 = tpu.assume_multiple %500, 8 : i32
      %502 = arith.index_cast %498 : i32 to index
      %c0_105 = arith.constant 0 : index
      %503 = vector.load %arg18[%502, %c0_105] : memref<64x96xf32, #tpu.memory_space<vmem>>, vector<8x96xf32>
      %504 = arith.index_cast %501 : i32 to index
      %c0_106 = arith.constant 0 : index
      %505 = vector.load %arg19[%504, %c0_106] : memref<64x96xf32, #tpu.memory_space<vmem>>, vector<8x96xf32>
      %506 = arith.addi %29, %c6_i32 : i32
      %507 = vector.broadcast %506 : i32 to vector<8x1xi32>
      %508 = arith.cmpi slt, %507, %28 : vector<8x1xi32>
      %cst_107 = arith.constant dense<0.000000e+00> : vector<8x96xf32>
      %509 = tpu.matmul %462, %20, %cst_107 {dimension_numbers = #tpu.dot_dimension_numbers<[1], [0], [0], [1], [0, 0, 1, 1], [], []>} : vector<8x32xf32>, vector<32x96xf32>, vector<8x96xf32> -> vector<8x96xf32>
      %510 = vector.extract_strided_slice %503 {offsets = [0, 0], sizes = [8, 32], strides = [1, 1]} : vector<8x96xf32> to vector<8x32xf32>
      %511 = vector.extract_strided_slice %509 {offsets = [0, 0], sizes = [8, 32], strides = [1, 1]} : vector<8x96xf32> to vector<8x32xf32>
      %512 = arith.addf %510, %511 : vector<8x32xf32>
      %513 = arith.negf %512 : vector<8x32xf32>
      %514 = math.exp %513 : vector<8x32xf32>
      %cst_108 = arith.constant 1.000000e+00 : f32
      %515 = vector.broadcast %cst_108 : f32 to vector<8x32xf32>
      %516 = arith.addf %515, %514 : vector<8x32xf32>
      %517 = arith.divf %515, %516 : vector<8x32xf32>
      %518 = vector.extract_strided_slice %503 {offsets = [0, 32], sizes = [8, 32], strides = [1, 1]} : vector<8x96xf32> to vector<8x32xf32>
      %519 = vector.extract_strided_slice %509 {offsets = [0, 32], sizes = [8, 32], strides = [1, 1]} : vector<8x96xf32> to vector<8x32xf32>
      %520 = arith.addf %518, %519 : vector<8x32xf32>
      %521 = arith.negf %520 : vector<8x32xf32>
      %522 = math.exp %521 : vector<8x32xf32>
      %cst_109 = arith.constant 1.000000e+00 : f32
      %523 = vector.broadcast %cst_109 : f32 to vector<8x32xf32>
      %524 = arith.addf %523, %522 : vector<8x32xf32>
      %525 = arith.divf %523, %524 : vector<8x32xf32>
      %526 = vector.extract_strided_slice %503 {offsets = [0, 64], sizes = [8, 32], strides = [1, 1]} : vector<8x96xf32> to vector<8x32xf32>
      %527 = vector.extract_strided_slice %509 {offsets = [0, 64], sizes = [8, 32], strides = [1, 1]} : vector<8x96xf32> to vector<8x32xf32>
      %528 = arith.addf %527, %24 : vector<8x32xf32>
      %529 = arith.mulf %517, %528 : vector<8x32xf32>
      %530 = arith.addf %526, %529 : vector<8x32xf32>
      %531 = math.tanh %530 : vector<8x32xf32>
      %cst_110 = arith.constant 1.000000e+00 : f32
      %532 = vector.broadcast %cst_110 : f32 to vector<8x32xf32>
      %533 = arith.subf %532, %525 : vector<8x32xf32>
      %534 = arith.mulf %533, %531 : vector<8x32xf32>
      %535 = arith.mulf %525, %462 : vector<8x32xf32>
      %536 = arith.addf %534, %535 : vector<8x32xf32>
      %537 = vector.shape_cast %508 : vector<8x1xi1> to vector<8x1xi1>
      %538 = vector.broadcast %537 : vector<8x1xi1> to vector<8x32xi1>
      %539 = arith.select %538, %536, %462 : vector<8x32xi1>, vector<8x32xf32>
      %540 = arith.subi %32, %c6_i32 : i32
      %541 = vector.broadcast %540 : i32 to vector<8x1xi32>
      %542 = arith.cmpi slt, %541, %28 : vector<8x1xi32>
      %cst_111 = arith.constant dense<0.000000e+00> : vector<8x96xf32>
      %543 = tpu.matmul %496, %21, %cst_111 {dimension_numbers = #tpu.dot_dimension_numbers<[1], [0], [0], [1], [0, 0, 1, 1], [], []>} : vector<8x32xf32>, vector<32x96xf32>, vector<8x96xf32> -> vector<8x96xf32>
      %544 = vector.extract_strided_slice %505 {offsets = [0, 0], sizes = [8, 32], strides = [1, 1]} : vector<8x96xf32> to vector<8x32xf32>
      %545 = vector.extract_strided_slice %543 {offsets = [0, 0], sizes = [8, 32], strides = [1, 1]} : vector<8x96xf32> to vector<8x32xf32>
      %546 = arith.addf %544, %545 : vector<8x32xf32>
      %547 = arith.negf %546 : vector<8x32xf32>
      %548 = math.exp %547 : vector<8x32xf32>
      %cst_112 = arith.constant 1.000000e+00 : f32
      %549 = vector.broadcast %cst_112 : f32 to vector<8x32xf32>
      %550 = arith.addf %549, %548 : vector<8x32xf32>
      %551 = arith.divf %549, %550 : vector<8x32xf32>
      %552 = vector.extract_strided_slice %505 {offsets = [0, 32], sizes = [8, 32], strides = [1, 1]} : vector<8x96xf32> to vector<8x32xf32>
      %553 = vector.extract_strided_slice %543 {offsets = [0, 32], sizes = [8, 32], strides = [1, 1]} : vector<8x96xf32> to vector<8x32xf32>
      %554 = arith.addf %552, %553 : vector<8x32xf32>
      %555 = arith.negf %554 : vector<8x32xf32>
      %556 = math.exp %555 : vector<8x32xf32>
      %cst_113 = arith.constant 1.000000e+00 : f32
      %557 = vector.broadcast %cst_113 : f32 to vector<8x32xf32>
      %558 = arith.addf %557, %556 : vector<8x32xf32>
      %559 = arith.divf %557, %558 : vector<8x32xf32>
      %560 = vector.extract_strided_slice %505 {offsets = [0, 64], sizes = [8, 32], strides = [1, 1]} : vector<8x96xf32> to vector<8x32xf32>
      %561 = vector.extract_strided_slice %543 {offsets = [0, 64], sizes = [8, 32], strides = [1, 1]} : vector<8x96xf32> to vector<8x32xf32>
      %562 = arith.addf %561, %27 : vector<8x32xf32>
      %563 = arith.mulf %551, %562 : vector<8x32xf32>
      %564 = arith.addf %560, %563 : vector<8x32xf32>
      %565 = math.tanh %564 : vector<8x32xf32>
      %cst_114 = arith.constant 1.000000e+00 : f32
      %566 = vector.broadcast %cst_114 : f32 to vector<8x32xf32>
      %567 = arith.subf %566, %559 : vector<8x32xf32>
      %568 = arith.mulf %567, %565 : vector<8x32xf32>
      %569 = arith.mulf %559, %496 : vector<8x32xf32>
      %570 = arith.addf %568, %569 : vector<8x32xf32>
      %571 = vector.shape_cast %542 : vector<8x1xi1> to vector<8x1xi1>
      %572 = vector.broadcast %571 : vector<8x1xi1> to vector<8x32xi1>
      %573 = arith.select %572, %570, %496 : vector<8x32xi1>, vector<8x32xf32>
      %c7_i32_115 = arith.constant 7 : i32
      %c8_i32_116 = arith.constant 8 : i32
      %574 = arith.muli %c7_i32_115, %c8_i32_116 : i32
      %575 = tpu.assume_multiple %574, 8 : i32
      %c7_i32_117 = arith.constant 7 : i32
      %576 = arith.subi %c7_i32_117, %c7_i32_115 : i32
      %c8_i32_118 = arith.constant 8 : i32
      %577 = arith.muli %576, %c8_i32_118 : i32
      %578 = tpu.assume_multiple %577, 8 : i32
      %579 = arith.index_cast %575 : i32 to index
      %c0_119 = arith.constant 0 : index
      %580 = vector.load %arg18[%579, %c0_119] : memref<64x96xf32, #tpu.memory_space<vmem>>, vector<8x96xf32>
      %581 = arith.index_cast %578 : i32 to index
      %c0_120 = arith.constant 0 : index
      %582 = vector.load %arg19[%581, %c0_120] : memref<64x96xf32, #tpu.memory_space<vmem>>, vector<8x96xf32>
      %583 = arith.addi %29, %c7_i32_115 : i32
      %584 = vector.broadcast %583 : i32 to vector<8x1xi32>
      %585 = arith.cmpi slt, %584, %28 : vector<8x1xi32>
      %cst_121 = arith.constant dense<0.000000e+00> : vector<8x96xf32>
      %586 = tpu.matmul %539, %20, %cst_121 {dimension_numbers = #tpu.dot_dimension_numbers<[1], [0], [0], [1], [0, 0, 1, 1], [], []>} : vector<8x32xf32>, vector<32x96xf32>, vector<8x96xf32> -> vector<8x96xf32>
      %587 = vector.extract_strided_slice %580 {offsets = [0, 0], sizes = [8, 32], strides = [1, 1]} : vector<8x96xf32> to vector<8x32xf32>
      %588 = vector.extract_strided_slice %586 {offsets = [0, 0], sizes = [8, 32], strides = [1, 1]} : vector<8x96xf32> to vector<8x32xf32>
      %589 = arith.addf %587, %588 : vector<8x32xf32>
      %590 = arith.negf %589 : vector<8x32xf32>
      %591 = math.exp %590 : vector<8x32xf32>
      %cst_122 = arith.constant 1.000000e+00 : f32
      %592 = vector.broadcast %cst_122 : f32 to vector<8x32xf32>
      %593 = arith.addf %592, %591 : vector<8x32xf32>
      %594 = arith.divf %592, %593 : vector<8x32xf32>
      %595 = vector.extract_strided_slice %580 {offsets = [0, 32], sizes = [8, 32], strides = [1, 1]} : vector<8x96xf32> to vector<8x32xf32>
      %596 = vector.extract_strided_slice %586 {offsets = [0, 32], sizes = [8, 32], strides = [1, 1]} : vector<8x96xf32> to vector<8x32xf32>
      %597 = arith.addf %595, %596 : vector<8x32xf32>
      %598 = arith.negf %597 : vector<8x32xf32>
      %599 = math.exp %598 : vector<8x32xf32>
      %cst_123 = arith.constant 1.000000e+00 : f32
      %600 = vector.broadcast %cst_123 : f32 to vector<8x32xf32>
      %601 = arith.addf %600, %599 : vector<8x32xf32>
      %602 = arith.divf %600, %601 : vector<8x32xf32>
      %603 = vector.extract_strided_slice %580 {offsets = [0, 64], sizes = [8, 32], strides = [1, 1]} : vector<8x96xf32> to vector<8x32xf32>
      %604 = vector.extract_strided_slice %586 {offsets = [0, 64], sizes = [8, 32], strides = [1, 1]} : vector<8x96xf32> to vector<8x32xf32>
      %605 = arith.addf %604, %24 : vector<8x32xf32>
      %606 = arith.mulf %594, %605 : vector<8x32xf32>
      %607 = arith.addf %603, %606 : vector<8x32xf32>
      %608 = math.tanh %607 : vector<8x32xf32>
      %cst_124 = arith.constant 1.000000e+00 : f32
      %609 = vector.broadcast %cst_124 : f32 to vector<8x32xf32>
      %610 = arith.subf %609, %602 : vector<8x32xf32>
      %611 = arith.mulf %610, %608 : vector<8x32xf32>
      %612 = arith.mulf %602, %539 : vector<8x32xf32>
      %613 = arith.addf %611, %612 : vector<8x32xf32>
      %614 = vector.shape_cast %585 : vector<8x1xi1> to vector<8x1xi1>
      %615 = vector.broadcast %614 : vector<8x1xi1> to vector<8x32xi1>
      %616 = arith.select %615, %613, %539 : vector<8x32xi1>, vector<8x32xf32>
      %617 = arith.subi %32, %c7_i32_115 : i32
      %618 = vector.broadcast %617 : i32 to vector<8x1xi32>
      %619 = arith.cmpi slt, %618, %28 : vector<8x1xi32>
      %cst_125 = arith.constant dense<0.000000e+00> : vector<8x96xf32>
      %620 = tpu.matmul %573, %21, %cst_125 {dimension_numbers = #tpu.dot_dimension_numbers<[1], [0], [0], [1], [0, 0, 1, 1], [], []>} : vector<8x32xf32>, vector<32x96xf32>, vector<8x96xf32> -> vector<8x96xf32>
      %621 = vector.extract_strided_slice %582 {offsets = [0, 0], sizes = [8, 32], strides = [1, 1]} : vector<8x96xf32> to vector<8x32xf32>
      %622 = vector.extract_strided_slice %620 {offsets = [0, 0], sizes = [8, 32], strides = [1, 1]} : vector<8x96xf32> to vector<8x32xf32>
      %623 = arith.addf %621, %622 : vector<8x32xf32>
      %624 = arith.negf %623 : vector<8x32xf32>
      %625 = math.exp %624 : vector<8x32xf32>
      %cst_126 = arith.constant 1.000000e+00 : f32
      %626 = vector.broadcast %cst_126 : f32 to vector<8x32xf32>
      %627 = arith.addf %626, %625 : vector<8x32xf32>
      %628 = arith.divf %626, %627 : vector<8x32xf32>
      %629 = vector.extract_strided_slice %582 {offsets = [0, 32], sizes = [8, 32], strides = [1, 1]} : vector<8x96xf32> to vector<8x32xf32>
      %630 = vector.extract_strided_slice %620 {offsets = [0, 32], sizes = [8, 32], strides = [1, 1]} : vector<8x96xf32> to vector<8x32xf32>
      %631 = arith.addf %629, %630 : vector<8x32xf32>
      %632 = arith.negf %631 : vector<8x32xf32>
      %633 = math.exp %632 : vector<8x32xf32>
      %cst_127 = arith.constant 1.000000e+00 : f32
      %634 = vector.broadcast %cst_127 : f32 to vector<8x32xf32>
      %635 = arith.addf %634, %633 : vector<8x32xf32>
      %636 = arith.divf %634, %635 : vector<8x32xf32>
      %637 = vector.extract_strided_slice %582 {offsets = [0, 64], sizes = [8, 32], strides = [1, 1]} : vector<8x96xf32> to vector<8x32xf32>
      %638 = vector.extract_strided_slice %620 {offsets = [0, 64], sizes = [8, 32], strides = [1, 1]} : vector<8x96xf32> to vector<8x32xf32>
      %639 = arith.addf %638, %27 : vector<8x32xf32>
      %640 = arith.mulf %628, %639 : vector<8x32xf32>
      %641 = arith.addf %637, %640 : vector<8x32xf32>
      %642 = math.tanh %641 : vector<8x32xf32>
      %cst_128 = arith.constant 1.000000e+00 : f32
      %643 = vector.broadcast %cst_128 : f32 to vector<8x32xf32>
      %644 = arith.subf %643, %636 : vector<8x32xf32>
      %645 = arith.mulf %644, %642 : vector<8x32xf32>
      %646 = arith.mulf %636, %573 : vector<8x32xf32>
      %647 = arith.addf %645, %646 : vector<8x32xf32>
      %648 = vector.shape_cast %619 : vector<8x1xi1> to vector<8x1xi1>
      %649 = vector.broadcast %648 : vector<8x1xi1> to vector<8x32xi1>
      %650 = arith.select %649, %647, %573 : vector<8x32xi1>, vector<8x32xf32>
      %c8_i32_129 = arith.constant 8 : i32
      %c0_130 = arith.constant 0 : index
      %c0_131 = arith.constant 0 : index
      %651 = vector.load %arg20[%c0_130, %c0_131] : memref<8x32xf32, #tpu.memory_space<vmem>>, vector<8x32xf32>
      tpu.vector_store %arg20[%c0_130, %c0_131], %616 {strides = array<i32>} : memref<8x32xf32, #tpu.memory_space<vmem>>, vector<8x32xf32>,
      %c0_132 = arith.constant 0 : index
      %c0_133 = arith.constant 0 : index
      %652 = vector.load %arg21[%c0_132, %c0_133] : memref<8x32xf32, #tpu.memory_space<vmem>>, vector<8x32xf32>
      tpu.vector_store %arg21[%c0_132, %c0_133], %650 {strides = array<i32>} : memref<8x32xf32, #tpu.memory_space<vmem>>, vector<8x32xf32>,
    } else {
    }
    %c0_i32_6 = arith.constant 0 : i32
    %17 = arith.cmpi eq, %arg1, %c0_i32_6 : i32
    %18 = arith.extui %17 : i1 to i32
    %c0_i32_7 = arith.constant 0 : i32
    %19 = arith.cmpi ne, %18, %c0_i32_7 : i32
    scf.if %19 {
      %c0 = arith.constant 0 : index
      %c0_8 = arith.constant 0 : index
      %20 = vector.load %arg20[%c0, %c0_8] : memref<8x32xf32, #tpu.memory_space<vmem>>, vector<8x32xf32>
      %c0_9 = arith.constant 0 : index
      %c0_10 = arith.constant 0 : index
      %21 = vector.load %arg14[%c0_9, %c0_10] : memref<32x1xf32, #tpu.memory_space<vmem>>, vector<32x1xf32>
      %cst = arith.constant dense<0.000000e+00> : vector<8x1xf32>
      %22 = tpu.matmul %20, %21, %cst {dimension_numbers = #tpu.dot_dimension_numbers<[1], [0], [0], [1], [0, 0, 1, 1], [], []>} : vector<8x32xf32>, vector<32x1xf32>, vector<8x1xf32> -> vector<8x1xf32>
      %c0_11 = arith.constant 0 : index
      %c0_12 = arith.constant 0 : index
      %23 = vector.load %arg21[%c0_11, %c0_12] : memref<8x32xf32, #tpu.memory_space<vmem>>, vector<8x32xf32>
      %c0_13 = arith.constant 0 : index
      %c0_14 = arith.constant 0 : index
      %24 = vector.load %arg15[%c0_13, %c0_14] : memref<32x1xf32, #tpu.memory_space<vmem>>, vector<32x1xf32>
      %cst_15 = arith.constant dense<0.000000e+00> : vector<8x1xf32>
      %25 = tpu.matmul %23, %24, %cst_15 {dimension_numbers = #tpu.dot_dimension_numbers<[1], [0], [0], [1], [0, 0, 1, 1], [], []>} : vector<8x32xf32>, vector<32x1xf32>, vector<8x1xf32> -> vector<8x1xf32>
      %26 = arith.addf %22, %25 : vector<8x1xf32>
      %c0_16 = arith.constant 0 : index
      %c0_17 = arith.constant 0 : index
      %27 = vector.load %arg16[%c0_16, %c0_17] : memref<1x1xf32, #tpu.memory_space<vmem>>, vector<1x1xf32>
      %28 = vector.broadcast %27 : vector<1x1xf32> to vector<8x1xf32>
      %29 = arith.addf %26, %28 : vector<8x1xf32>
      %c0_18 = arith.constant 0 : index
      %c0_19 = arith.constant 0 : index
      %30 = vector.load %arg17[%c0_18, %c0_19] : memref<8x1xf32, #tpu.memory_space<vmem>>, vector<8x1xf32>
      tpu.vector_store %arg17[%c0_18, %c0_19], %29 {strides = array<i32>} : memref<8x1xf32, #tpu.memory_space<vmem>>, vector<8x1xf32>,
    } else {
    }
    return
  }
  func.func @transform_0(%arg0: i32, %arg1: i32, %arg2: memref<1xi32, #tpu.memory_space<smem>>) -> (i32, i32, i32) {
    %c0_i32 = arith.constant 0 : i32
    %c0_i32_0 = arith.constant 0 : i32
    return %arg1, %arg0, %c0_i32 : i32, i32, i32
  }
  func.func @transform_1(%arg0: i32, %arg1: i32, %arg2: memref<1xi32, #tpu.memory_space<smem>>) -> (i32, i32, i32) {
    %c0_i32 = arith.constant 0 : i32
    %0 = arith.subi %c0_i32, %arg1 : i32
    %c0_i32_0 = arith.constant 0 : i32
    %c0_i32_1 = arith.constant 0 : i32
    return %0, %arg0, %c0_i32_0 : i32, i32, i32
  }
  func.func @transform_2(%arg0: i32, %arg1: i32, %arg2: memref<1xi32, #tpu.memory_space<smem>>) -> (i32, i32) {
    %c0_i32 = arith.constant 0 : i32
    %c0_i32_0 = arith.constant 0 : i32
    return %arg0, %c0_i32 : i32, i32
  }
  func.func @transform_3(%arg0: i32, %arg1: i32, %arg2: memref<1xi32, #tpu.memory_space<smem>>) -> (i32, i32) {
    %c0_i32 = arith.constant 0 : i32
    %c0_i32_0 = arith.constant 0 : i32
    %c0_i32_1 = arith.constant 0 : i32
    return %c0_i32, %c0_i32_0 : i32, i32
  }
  func.func @transform_4(%arg0: i32, %arg1: i32, %arg2: memref<1xi32, #tpu.memory_space<smem>>) -> (i32, i32) {
    %c0_i32 = arith.constant 0 : i32
    %c0_i32_0 = arith.constant 0 : i32
    %c0_i32_1 = arith.constant 0 : i32
    return %c0_i32, %c0_i32_0 : i32, i32
  }
  func.func @transform_5(%arg0: i32, %arg1: i32, %arg2: memref<1xi32, #tpu.memory_space<smem>>) -> (i32, i32) {
    %c0_i32 = arith.constant 0 : i32
    %c0_i32_0 = arith.constant 0 : i32
    %c0_i32_1 = arith.constant 0 : i32
    return %c0_i32, %c0_i32_0 : i32, i32
  }
  func.func @transform_6(%arg0: i32, %arg1: i32, %arg2: memref<1xi32, #tpu.memory_space<smem>>) -> (i32, i32) {
    %c0_i32 = arith.constant 0 : i32
    %c0_i32_0 = arith.constant 0 : i32
    %c0_i32_1 = arith.constant 0 : i32
    return %c0_i32, %c0_i32_0 : i32, i32
  }
  func.func @transform_7(%arg0: i32, %arg1: i32, %arg2: memref<1xi32, #tpu.memory_space<smem>>) -> (i32, i32) {
    %c0_i32 = arith.constant 0 : i32
    %c0_i32_0 = arith.constant 0 : i32
    %c0_i32_1 = arith.constant 0 : i32
    return %c0_i32, %c0_i32_0 : i32, i32
  }
  func.func @transform_8(%arg0: i32, %arg1: i32, %arg2: memref<1xi32, #tpu.memory_space<smem>>) -> (i32, i32) {
    %c0_i32 = arith.constant 0 : i32
    %c0_i32_0 = arith.constant 0 : i32
    %c0_i32_1 = arith.constant 0 : i32
    return %c0_i32, %c0_i32_0 : i32, i32
  }
  func.func @transform_9(%arg0: i32, %arg1: i32, %arg2: memref<1xi32, #tpu.memory_space<smem>>) -> (i32, i32) {
    %c0_i32 = arith.constant 0 : i32
    %c0_i32_0 = arith.constant 0 : i32
    %c0_i32_1 = arith.constant 0 : i32
    return %c0_i32, %c0_i32_0 : i32, i32
  }
  func.func @transform_10(%arg0: i32, %arg1: i32, %arg2: memref<1xi32, #tpu.memory_space<smem>>) -> (i32, i32) {
    %c0_i32 = arith.constant 0 : i32
    %c0_i32_0 = arith.constant 0 : i32
    %c0_i32_1 = arith.constant 0 : i32
    return %c0_i32, %c0_i32_0 : i32, i32
  }
  func.func @transform_11(%arg0: i32, %arg1: i32, %arg2: memref<1xi32, #tpu.memory_space<smem>>) -> (i32, i32) {
    %c0_i32 = arith.constant 0 : i32
    %c0_i32_0 = arith.constant 0 : i32
    %c0_i32_1 = arith.constant 0 : i32
    return %c0_i32, %c0_i32_0 : i32, i32
  }
  func.func @transform_12(%arg0: i32, %arg1: i32, %arg2: memref<1xi32, #tpu.memory_space<smem>>) -> (i32, i32) {
    %c0_i32 = arith.constant 0 : i32
    %c0_i32_0 = arith.constant 0 : i32
    %c0_i32_1 = arith.constant 0 : i32
    return %c0_i32, %c0_i32_0 : i32, i32
  }
  func.func @transform_13(%arg0: i32, %arg1: i32, %arg2: memref<1xi32, #tpu.memory_space<smem>>) -> (i32, i32) {
    %c0_i32 = arith.constant 0 : i32
    %c0_i32_0 = arith.constant 0 : i32
    %c0_i32_1 = arith.constant 0 : i32
    return %c0_i32, %c0_i32_0 : i32, i32
  }
  func.func @transform_14(%arg0: i32, %arg1: i32, %arg2: memref<1xi32, #tpu.memory_space<smem>>) -> (i32, i32) {
    %c0_i32 = arith.constant 0 : i32
    %c0_i32_0 = arith.constant 0 : i32
    return %arg0, %c0_i32 : i32, i32
  }
}

</mosaic_0001>

<llo_original>
// kernel: fine_tune_head.1
$region0: #{fine_tune_head.1}
  #allocation0 [shape = 'u32[]', space=smem, size = 0x4, offset = 0x4, fixed_abs, tag = 'smem constant byte address 0x4 - core index']
  #allocation1 [shape = 'u32[144,128]{1,0:T(1,128)}', space=vmem, size = 0x12000, scoped, tag = 'internal scratch']
  #allocation2 [shape = 'f32[64,96]{1,0:T(8,128)}', space=vmem, size = 0x8000, scoped, tag = 'scratch operand']
  #allocation3 [shape = 'f32[64,96]{1,0:T(8,128)}', space=vmem, size = 0x8000, scoped, tag = 'scratch operand']
  #allocation4 [shape = 'f32[8,32]{1,0:T(8,128)}', space=vmem, size = 0x1000, scoped, tag = 'scratch operand']
  #allocation5 [shape = 'f32[8,32]{1,0:T(8,128)}', space=vmem, size = 0x1000, scoped, tag = 'scratch operand']
  #allocation6 [shape = 's32[1]{0}', space=sflag, size = 0x4, scoped, tag = 'scoped memory for fine_tune_head.1']
  #allocation7 [shape = 's32[1]{0:T(128)S(6)}', space=smem, size = 0x200, scoped, tag = 'prefetched SMEM operand 0']
  #allocation8 [shape = 'f32[1,1]{1,0:T(1,128)S(1)}', space=vmem, size = 0x200, scoped, tag = 'scoped memory for fine_tune_head.1']
  %s0 = inlined_call_operand.<no memory space> [shape: s32[1], index: 0, kind: input, shape index: {}]
  %s1 = inlined_call_operand.vmem [shape: f32[8,8,32], index: 1, kind: input, shape index: {}, may-alias: {1,2}]
  %s2 = inlined_call_operand.vmem [shape: f32[8,8,32], index: 2, kind: input, shape index: {}, may-alias: {1,2}]
  %s3 = inlined_call_operand.vmem [shape: s32[8,1], index: 3, kind: input, shape index: {}]
  %s4 = inlined_call_operand.vmem [shape: f32[32,96], index: 4, kind: input, shape index: {}]
  %s5 = inlined_call_operand.vmem [shape: f32[32,96], index: 5, kind: input, shape index: {}]
  %s6 = inlined_call_operand.vmem [shape: f32[1,96], index: 6, kind: input, shape index: {}]
  %s7 = inlined_call_operand.vmem [shape: f32[1,32], index: 7, kind: input, shape index: {}]
  %s8 = inlined_call_operand.vmem [shape: f32[32,96], index: 8, kind: input, shape index: {}]
  %s9 = inlined_call_operand.vmem [shape: f32[32,96], index: 9, kind: input, shape index: {}]
  %s10 = inlined_call_operand.vmem [shape: f32[1,96], index: 10, kind: input, shape index: {}]
  %s11 = inlined_call_operand.vmem [shape: f32[1,32], index: 11, kind: input, shape index: {}]
  %s12 = inlined_call_operand.vmem [shape: f32[32,1], index: 12, kind: input, shape index: {}]
  %s13 = inlined_call_operand.vmem [shape: f32[32,1], index: 13, kind: input, shape index: {}]
  %s14 = inlined_call_operand.<no memory space> [shape: f32[1,1], index: 14, kind: input, shape index: {}]
  %s15 = inlined_call_operand.vmem [shape: f32[8,1], index: 15, kind: output, shape index: {}]
  %s16 = sld [smem:[#allocation0]]
  $region86: #{fine_tune_head.1} parent=0
    _
  %s18 = ssub.s32 1, %s16
  %s19 = scalar_select 0, %s18, %s16
  %20 = sst [smem:[#allocation7]] %s0
  %v21 = vstv %s14
  %22 = vst [vmem:[#allocation8] sm:$0x1] %v21
  // Predicated region
  $region2: #{fine_tune_head.1} parent=0 // pred_check
    _
  $region3: #{fine_tune_head.1} parent=0 // pred_check_branch
    %24 = sbr.rel (0) target = $region5
  $region4: #{fine_tune_head.1} parent=0 // pred_region
    _
  $region5: #{fine_tune_head.1} parent=0 // pred_fallthru
    _
  // Predicated region
  $region6: #{fine_tune_head.1} parent=0 // pred_check
    _
  $region7: #{fine_tune_head.1} parent=0 // pred_check_branch
    %26 = sbr.rel (0) target = $region9
  $region8: #{fine_tune_head.1} parent=0 // pred_region
    %s27 = ssub.s32 0, 0
    %s28 = smul.u32 8, %s27
    %p29 = scmp.lt.s32.totalorder %s28, 7
    %s30 = scalar_select %p29, %s28, 7
    %s31 = smul.addr %s30, 8
    %s32 = scalar_lea.vmem %s2, %s31
    %s33 = ssub.s32 0, 0
    %s34 = smul.u32 8, %s33
  $region9: #{fine_tune_head.1} parent=0 // pred_fallthru
    _
  // Predicated region
  $region10: #{fine_tune_head.1} parent=0 // pred_check
    _
  $region11: #{fine_tune_head.1} parent=0 // pred_check_branch
    %36 = sbr.rel (0) target = $region13
  $region12: #{fine_tune_head.1} parent=0 // pred_region
    _
  $region13: #{fine_tune_head.1} parent=0 // pred_fallthru
    _
  // Predicated region
  $region14: #{fine_tune_head.1} parent=0 // pred_check
    _
  $region15: #{fine_tune_head.1} parent=0 // pred_check_branch
    %38 = sbr.rel (0) target = $region17
  $region16: #{fine_tune_head.1} parent=0 // pred_region
    _
  $region17: #{fine_tune_head.1} parent=0 // pred_fallthru
    _
  // Predicated region
  $region18: #{fine_tune_head.1} parent=0 // pred_check
    _
  $region19: #{fine_tune_head.1} parent=0 // pred_check_branch
    %40 = sbr.rel (0) target = $region21
  $region20: #{fine_tune_head.1} parent=0 // pred_region
    _
  $region21: #{fine_tune_head.1} parent=0 // pred_fallthru
    _
  // Predicated region
  $region22: #{fine_tune_head.1} parent=0 // pred_check
    _
  $region23: #{fine_tune_head.1} parent=0 // pred_check_branch
    %42 = sbr.rel (0) target = $region25
  $region24: #{fine_tune_head.1} parent=0 // pred_region
    _
  $region25: #{fine_tune_head.1} parent=0 // pred_fallthru
    _
  // Predicated region
  $region26: #{fine_tune_head.1} parent=0 // pred_check
    _
  $region27: #{fine_tune_head.1} parent=0 // pred_check_branch
    %44 = sbr.rel (0) target = $region29
  $region28: #{fine_tune_head.1} parent=0 // pred_region
    _
  $region29: #{fine_tune_head.1} parent=0 // pred_fallthru
    _
  // Predicated region
  $region30: #{fine_tune_head.1} parent=0 // pred_check
    _
  $region31: #{fine_tune_head.1} parent=0 // pred_check_branch
    %46 = sbr.rel (0) target = $region33
  $region32: #{fine_tune_head.1} parent=0 // pred_region
    _
  $region33: #{fine_tune_head.1} parent=0 // pred_fallthru
    _
  // Predicated region
  $region34: #{fine_tune_head.1} parent=0 // pred_check
    _
  $region35: #{fine_tune_head.1} parent=0 // pred_check_branch
    %48 = sbr.rel (0) target = $region37
  $region36: #{fine_tune_head.1} parent=0 // pred_region
    _
  $region37: #{fine_tune_head.1} parent=0 // pred_fallthru
    _
  // Predicated region
  $region38: #{fine_tune_head.1} parent=0 // pred_check
    _
  $region39: #{fine_tune_head.1} parent=0 // pred_check_branch
    %50 = sbr.rel (0) target = $region41
  $region40: #{fine_tune_head.1} parent=0 // pred_region
    _
  $region41: #{fine_tune_head.1} parent=0 // pred_fallthru
    _
  // Predicated region
  $region42: #{fine_tune_head.1} parent=0 // pred_check
    _
  $region43: #{fine_tune_head.1} parent=0 // pred_check_branch
    %52 = sbr.rel (0) target = $region45
  $region44: #{fine_tune_head.1} parent=0 // pred_region
    _
  $region45: #{fine_tune_head.1} parent=0 // pred_fallthru
    _
  // Predicated region
  $region46: #{fine_tune_head.1} parent=0 // pred_check
    _
  $region47: #{fine_tune_head.1} parent=0 // pred_check_branch
    %54 = sbr.rel (0) target = $region49
  $region48: #{fine_tune_head.1} parent=0 // pred_region
    _
  $region49: #{fine_tune_head.1} parent=0 // pred_fallthru
    _
  // Predicated region
  $region50: #{fine_tune_head.1} parent=0 // pred_check
    _
  $region51: #{fine_tune_head.1} parent=0 // pred_check_branch
    %56 = sbr.rel (0) target = $region53
  $region52: #{fine_tune_head.1} parent=0 // pred_region
    _
  $region53: #{fine_tune_head.1} parent=0 // pred_fallthru
    _
  // Predicated region
  $region54: #{fine_tune_head.1} parent=0 // pred_check
    _
  $region55: #{fine_tune_head.1} parent=0 // pred_check_branch
    %58 = sbr.rel (0) target = $region57
  $region56: #{fine_tune_head.1} parent=0 // pred_region
    _
  $region57: #{fine_tune_head.1} parent=0 // pred_fallthru
    _
  %s59 = ssub.s32 0, 0
  %s60 = smul.u32 8, %s59
  %p61 = scmp.lt.s32.totalorder %s60, 7
  %s62 = scalar_select %p61, %s60, 7
  %s63 = smul.addr %s62, 8
  %s64 = scalar_lea.vmem %s2, %s63
  %s65 = ssub.s32 0, 0
  %s66 = smul.u32 8, %s65
  %p67 = scmp.lt.s32.totalorder %s66, 7
  %s68 = scalar_select %p67, %s66, 7
  %s69 = smul.addr %s68, 8
  %s70 = scalar_lea.vmem %s2, %s69
  %s71 = ssub.s32 0, 0
  %s72 = smul.u32 8, %s71
  %p73 = scmp.eq.s32.totalorder 0, 0
  // Predicated region
  $region58: #{fine_tune_head.1} parent=0 // pred_check
    %p74 = pneg %p73
  $region59: #{fine_tune_head.1} parent=0 // pred_check_branch
    %76 = sbr.rel (%p74) target = $region61
  $region60: #{fine_tune_head.1} parent=0 // pred_region
    %vm77 = vcmask 261120
    %78 = vst.msk [vmem:[#allocation4] sm:$0xff] %vm77, 0.0
    %79 = vst.msk [vmem:[#allocation5] sm:$0xff] %vm77, 0.0
  $region61: #{fine_tune_head.1} parent=0 // pred_fallthru
    _
  %s80 = sld [smem:[#allocation7]]
  %s81 = smul.u32 0, 8
  %p82 = scmp.lt.s32.totalorder %s81, %s80
  %s83 = ssub.s32 0, 0
  %s84 = smul.u32 %s83, 8
  %p85 = scmp.lt.s32.totalorder %s84, %s80
  // Predicated region
  $region62: #{fine_tune_head.1} parent=0 // pred_check
    %p86 = pneg %p82
  $region63: #{fine_tune_head.1} parent=0 // pred_check_branch
    %88 = sbr.rel (%p86) target = $region65
  $region64: #{fine_tune_head.1} parent=0 // pred_region
    %v89 = vld [vmem:[%s1] sm:$0xff]
    %v90 = vld [vmem:[%s1 + $0x8] sm:$0xff]
    %v91 = vld [vmem:[%s1 + $0x10] sm:$0xff]
    %v92 = vld [vmem:[%s1 + $0x18] sm:$0xff]
    %v93 = vld [vmem:[%s1 + $0x20] sm:$0xff]
    %v94 = vld [vmem:[%s1 + $0x28] sm:$0xff]
    %v95 = vld [vmem:[%s1 + $0x30] sm:$0xff]
    %v96 = vld [vmem:[%s1 + $0x38] sm:$0xff]
    %v97 = vld [vmem:[%s4] sm:$0xff]
    %v98 = vld [vmem:[%s4 + $0x8] sm:$0xff]
    %v99 = vld [vmem:[%s4 + $0x10] sm:$0xff]
    %v100 = vld [vmem:[%s4 + $0x18] sm:$0xff]
    %v101 = vld [vmem:[%s6] sm:$0x1]
    %v103 = vlaneseq
    %v104 = vshrl.u32 %v103, 7
    %v105 = vsub.s32 0, %v104
    %v106 = vrot.slane %v101, %v105
    %vm108 = vcmask 261120
    %v110 = vsel %vm108, %v89, 0
    %v113 = vsel %vm108, %v90, 0
    %v116 = vsel %vm108, %v91, 0
    %v119 = vsel %vm108, %v92, 0
    %v122 = vsel %vm108, %v93, 0
    %v125 = vsel %vm108, %v94, 0
    %v128 = vsel %vm108, %v95, 0
    %v131 = vsel %vm108, %v96, 0
    %133 = vmatprep.subr.mxu0 0.0
    %134 = vmatpush1.msra.mxu0 0.0
    %135 = vmatprep.subr.mxu0 0.0
    %136 = vmatpush1.msra.mxu0 0.0
    %137 = vmatprep.subr.mxu0 0.0
    %138 = vmatpush1.msra.mxu0 0.0
    %139 = vmatprep.subr.mxu0 0.0
    %140 = vmatpush1.msra.mxu0 0.0
    %141 = vmatprep.subr.mxu0 0.0
    %142 = vmatpush1.msra.mxu0 0.0
    %143 = vmatprep.subr.mxu0 0.0
    %144 = vmatpush1.msra.mxu0 0.0
    %145 = vmatprep.subr.mxu0 0.0
    %146 = vmatpush1.msra.mxu0 0.0
    %147 = vmatprep.subr.mxu0 0.0
    %148 = vmatpush1.msra.mxu0 0.0
    %149 = vmatprep.subr.mxu0 0.0
    %150 = vmatpush1.msra.mxu0 0.0
    %151 = vmatprep.subr.mxu0 0.0
    %152 = vmatpush1.msra.mxu0 0.0
    %153 = vmatprep.subr.mxu0 0.0
    %154 = vmatpush1.msra.mxu0 0.0
    %155 = vmatprep.subr.mxu0 0.0
    %156 = vmatpush1.msra.mxu0 0.0
    %157 = vmatprep.subr.mxu0 0.0
    %158 = vmatpush1.msra.mxu0 %v100
    %159 = vmatprep.subr.mxu0 0.0
    %160 = vmatpush1.msra.mxu0 %v99
    %161 = vmatprep.subr.mxu0 0.0
    %162 = vmatpush1.msra.mxu0 %v98
    %163 = vmatprep.subr.mxu0 0.0
    %164 = vmatpush1.msra.mxu0 %v97
    %165 = vmatprep.subr.mxu0 0.0
    %166 = vmatpush2.msra.mxu0 0.0
    %167 = vmatprep.subr.mxu0 0.0
    %168 = vmatpush2.msra.mxu0 0.0
    %169 = vmatprep.subr.mxu0 0.0
    %170 = vmatpush2.msra.mxu0 0.0
    %171 = vmatprep.subr.mxu0 0.0
    %172 = vmatpush2.msra.mxu0 0.0
    %173 = vmatprep.subr.mxu0 0.0
    %174 = vmatpush2.msra.mxu0 0.0
    %175 = vmatprep.subr.mxu0 0.0
    %176 = vmatpush2.msra.mxu0 0.0
    %177 = vmatprep.subr.mxu0 0.0
    %178 = vmatpush2.msra.mxu0 0.0
    %179 = vmatprep.subr.mxu0 0.0
    %180 = vmatpush2.msra.mxu0 0.0
    %181 = vmatprep.subr.mxu0 0.0
    %182 = vmatpush2.msra.mxu0 0.0
    %183 = vmatprep.subr.mxu0 0.0
    %184 = vmatpush2.msra.mxu0 0.0
    %185 = vmatprep.subr.mxu0 0.0
    %186 = vmatpush2.msra.mxu0 0.0
    %187 = vmatprep.subr.mxu0 0.0
    %188 = vmatpush2.msra.mxu0 0.0
    %189 = vmatprep.subr.mxu0 0.0
    %190 = vmatpush2.msra.mxu0 0.0
    %191 = vmatprep.subr.mxu0 0.0
    %192 = vmatpush2.msra.mxu0 0.0
    %193 = vmatprep.subr.mxu0 0.0
    %194 = vmatpush2.msra.mxu0 0.0
    %195 = vmatprep.subr.mxu0 0.0
    %196 = vmatpush2.msra.mxu0 0.0
    %197 = vmatprep.mubr.f32.mxu0 0.0
    %198 = vmatmul.mubr.f32.gmra.mxu0 %v110
    %v199 = vpop.f32.mrf.mxu0
    %v200 = vadd.f32 %v106, %v199
    %v201 = vpop.f32.mrf.mxu0
    %202 = vmatprep.mubr.f32.mxu0 0.0
    %203 = vmatmul.mubr.f32.gmra.mxu0 %v113
    %v204 = vpop.f32.mrf.mxu0
    %v205 = vadd.f32 %v106, %v204
    %v206 = vpop.f32.mrf.mxu0
    %207 = vmatprep.mubr.f32.mxu0 0.0
    %208 = vmatmul.mubr.f32.gmra.mxu0 %v116
    %v209 = vpop.f32.mrf.mxu0
    %v210 = vadd.f32 %v106, %v209
    %v211 = vpop.f32.mrf.mxu0
    %212 = vmatprep.mubr.f32.mxu0 0.0
    %213 = vmatmul.mubr.f32.gmra.mxu0 %v119
    %v214 = vpop.f32.mrf.mxu0
    %v215 = vadd.f32 %v106, %v214
    %v216 = vpop.f32.mrf.mxu0
    %217 = vmatprep.mubr.f32.mxu0 0.0
    %218 = vmatmul.mubr.f32.gmra.mxu0 %v122
    %v219 = vpop.f32.mrf.mxu0
    %v220 = vadd.f32 %v106, %v219
    %v221 = vpop.f32.mrf.mxu0
    %222 = vmatprep.mubr.f32.mxu0 0.0
    %223 = vmatmul.mubr.f32.gmra.mxu0 %v125
    %v224 = vpop.f32.mrf.mxu0
    %v225 = vadd.f32 %v106, %v224
    %v226 = vpop.f32.mrf.mxu0
    %227 = vmatprep.mubr.f32.mxu0 0.0
    %228 = vmatmul.mubr.f32.gmra.mxu0 %v128
    %v229 = vpop.f32.mrf.mxu0
    %v230 = vadd.f32 %v106, %v229
    %v231 = vpop.f32.mrf.mxu0
    %232 = vmatprep.mubr.f32.mxu0 0.0
    %233 = vmatmul.mubr.f32.gmra.mxu0 %v131
    %v234 = vpop.f32.mrf.mxu0
    %v235 = vadd.f32 %v106, %v234
    %v236 = vpop.f32.mrf.mxu0
    %237 = vdwg.mxu0
    %vm238 = vcmask 785408
    %239 = vst.msk [vmem:[#allocation2] sm:$0xff] %vm238, %v200
    %240 = vst.msk [vmem:[#allocation2 + $0x8] sm:$0xff] %vm238, %v205
    %241 = vst.msk [vmem:[#allocation2 + $0x10] sm:$0xff] %vm238, %v210
    %242 = vst.msk [vmem:[#allocation2 + $0x18] sm:$0xff] %vm238, %v215
    %243 = vst.msk [vmem:[#allocation2 + $0x20] sm:$0xff] %vm238, %v220
    %244 = vst.msk [vmem:[#allocation2 + $0x28] sm:$0xff] %vm238, %v225
    %245 = vst.msk [vmem:[#allocation2 + $0x30] sm:$0xff] %vm238, %v230
    %246 = vst.msk [vmem:[#allocation2 + $0x38] sm:$0xff] %vm238, %v235
  $region65: #{fine_tune_head.1} parent=0 // pred_fallthru
    _
  // Predicated region
  $region66: #{fine_tune_head.1} parent=0 // pred_check
    %p247 = pneg %p85
  $region67: #{fine_tune_head.1} parent=0 // pred_check_branch
    %249 = sbr.rel (%p247) target = $region69
  $region68: #{fine_tune_head.1} parent=0 // pred_region
    %v250 = vld [vmem:[%s70] sm:$0xff]
    %v251 = vld [vmem:[%s70 + $0x8] sm:$0xff]
    %v252 = vld [vmem:[%s70 + $0x10] sm:$0xff]
    %v253 = vld [vmem:[%s70 + $0x18] sm:$0xff]
    %v254 = vld [vmem:[%s70 + $0x20] sm:$0xff]
    %v255 = vld [vmem:[%s70 + $0x28] sm:$0xff]
    %v256 = vld [vmem:[%s70 + $0x30] sm:$0xff]
    %v257 = vld [vmem:[%s70 + $0x38] sm:$0xff]
    %v258 = vld [vmem:[%s8] sm:$0xff]
    %v259 = vld [vmem:[%s8 + $0x8] sm:$0xff]
    %v260 = vld [vmem:[%s8 + $0x10] sm:$0xff]
    %v261 = vld [vmem:[%s8 + $0x18] sm:$0xff]
    %v262 = vld [vmem:[%s10] sm:$0x1]
    %v264 = vlaneseq
    %v265 = vshrl.u32 %v264, 7
    %v266 = vsub.s32 0, %v265
    %v267 = vrot.slane %v262, %v266
    %vm269 = vcmask 261120
    %v271 = vsel %vm269, %v250, 0
    %v274 = vsel %vm269, %v251, 0
    %v277 = vsel %vm269, %v252, 0
    %v280 = vsel %vm269, %v253, 0
    %v283 = vsel %vm269, %v254, 0
    %v286 = vsel %vm269, %v255, 0
    %v289 = vsel %vm269, %v256, 0
    %v292 = vsel %vm269, %v257, 0
    %294 = vmatprep.subr.mxu0 0.0
    %295 = vmatpush1.msra.mxu0 0.0
    %296 = vmatprep.subr.mxu0 0.0
    %297 = vmatpush1.msra.mxu0 0.0
    %298 = vmatprep.subr.mxu0 0.0
    %299 = vmatpush1.msra.mxu0 0.0
    %300 = vmatprep.subr.mxu0 0.0
    %301 = vmatpush1.msra.mxu0 0.0
    %302 = vmatprep.subr.mxu0 0.0
    %303 = vmatpush1.msra.mxu0 0.0
    %304 = vmatprep.subr.mxu0 0.0
    %305 = vmatpush1.msra.mxu0 0.0
    %306 = vmatprep.subr.mxu0 0.0
    %307 = vmatpush1.msra.mxu0 0.0
    %308 = vmatprep.subr.mxu0 0.0
    %309 = vmatpush1.msra.mxu0 0.0
    %310 = vmatprep.subr.mxu0 0.0
    %311 = vmatpush1.msra.mxu0 0.0
    %312 = vmatprep.subr.mxu0 0.0
    %313 = vmatpush1.msra.mxu0 0.0
    %314 = vmatprep.subr.mxu0 0.0
    %315 = vmatpush1.msra.mxu0 0.0
    %316 = vmatprep.subr.mxu0 0.0
    %317 = vmatpush1.msra.mxu0 0.0
    %318 = vmatprep.subr.mxu0 0.0
    %319 = vmatpush1.msra.mxu0 %v261
    %320 = vmatprep.subr.mxu0 0.0
    %321 = vmatpush1.msra.mxu0 %v260
    %322 = vmatprep.subr.mxu0 0.0
    %323 = vmatpush1.msra.mxu0 %v259
    %324 = vmatprep.subr.mxu0 0.0
    %325 = vmatpush1.msra.mxu0 %v258
    %326 = vmatprep.subr.mxu0 0.0
    %327 = vmatpush2.msra.mxu0 0.0
    %328 = vmatprep.subr.mxu0 0.0
    %329 = vmatpush2.msra.mxu0 0.0
    %330 = vmatprep.subr.mxu0 0.0
    %331 = vmatpush2.msra.mxu0 0.0
    %332 = vmatprep.subr.mxu0 0.0
    %333 = vmatpush2.msra.mxu0 0.0
    %334 = vmatprep.subr.mxu0 0.0
    %335 = vmatpush2.msra.mxu0 0.0
    %336 = vmatprep.subr.mxu0 0.0
    %337 = vmatpush2.msra.mxu0 0.0
    %338 = vmatprep.subr.mxu0 0.0
    %339 = vmatpush2.msra.mxu0 0.0
    %340 = vmatprep.subr.mxu0 0.0
    %341 = vmatpush2.msra.mxu0 0.0
    %342 = vmatprep.subr.mxu0 0.0
    %343 = vmatpush2.msra.mxu0 0.0
    %344 = vmatprep.subr.mxu0 0.0
    %345 = vmatpush2.msra.mxu0 0.0
    %346 = vmatprep.subr.mxu0 0.0
    %347 = vmatpush2.msra.mxu0 0.0
    %348 = vmatprep.subr.mxu0 0.0
    %349 = vmatpush2.msra.mxu0 0.0
    %350 = vmatprep.subr.mxu0 0.0
    %351 = vmatpush2.msra.mxu0 0.0
    %352 = vmatprep.subr.mxu0 0.0
    %353 = vmatpush2.msra.mxu0 0.0
    %354 = vmatprep.subr.mxu0 0.0
    %355 = vmatpush2.msra.mxu0 0.0
    %356 = vmatprep.subr.mxu0 0.0
    %357 = vmatpush2.msra.mxu0 0.0
    %358 = vmatprep.mubr.f32.mxu0 0.0
    %359 = vmatmul.mubr.f32.gmra.mxu0 %v271
    %v360 = vpop.f32.mrf.mxu0
    %v361 = vadd.f32 %v267, %v360
    %v362 = vpop.f32.mrf.mxu0
    %363 = vmatprep.mubr.f32.mxu0 0.0
    %364 = vmatmul.mubr.f32.gmra.mxu0 %v274
    %v365 = vpop.f32.mrf.mxu0
    %v366 = vadd.f32 %v267, %v365
    %v367 = vpop.f32.mrf.mxu0
    %368 = vmatprep.mubr.f32.mxu0 0.0
    %369 = vmatmul.mubr.f32.gmra.mxu0 %v277
    %v370 = vpop.f32.mrf.mxu0
    %v371 = vadd.f32 %v267, %v370
    %v372 = vpop.f32.mrf.mxu0
    %373 = vmatprep.mubr.f32.mxu0 0.0
    %374 = vmatmul.mubr.f32.gmra.mxu0 %v280
    %v375 = vpop.f32.mrf.mxu0
    %v376 = vadd.f32 %v267, %v375
    %v377 = vpop.f32.mrf.mxu0
    %378 = vmatprep.mubr.f32.mxu0 0.0
    %379 = vmatmul.mubr.f32.gmra.mxu0 %v283
    %v380 = vpop.f32.mrf.mxu0
    %v381 = vadd.f32 %v267, %v380
    %v382 = vpop.f32.mrf.mxu0
    %383 = vmatprep.mubr.f32.mxu0 0.0
    %384 = vmatmul.mubr.f32.gmra.mxu0 %v286
    %v385 = vpop.f32.mrf.mxu0
    %v386 = vadd.f32 %v267, %v385
    %v387 = vpop.f32.mrf.mxu0
    %388 = vmatprep.mubr.f32.mxu0 0.0
    %389 = vmatmul.mubr.f32.gmra.mxu0 %v289
    %v390 = vpop.f32.mrf.mxu0
    %v391 = vadd.f32 %v267, %v390
    %v392 = vpop.f32.mrf.mxu0
    %393 = vmatprep.mubr.f32.mxu0 0.0
    %394 = vmatmul.mubr.f32.gmra.mxu0 %v292
    %v395 = vpop.f32.mrf.mxu0
    %v396 = vadd.f32 %v267, %v395
    %v397 = vpop.f32.mrf.mxu0
    %398 = vdwg.mxu0
    %vm399 = vcmask 785408
    %400 = vst.msk [vmem:[#allocation3] sm:$0xff] %vm399, %v361
    %401 = vst.msk [vmem:[#allocation3 + $0x8] sm:$0xff] %vm399, %v366
    %402 = vst.msk [vmem:[#allocation3 + $0x10] sm:$0xff] %vm399, %v371
    %403 = vst.msk [vmem:[#allocation3 + $0x18] sm:$0xff] %vm399, %v376
    %404 = vst.msk [vmem:[#allocation3 + $0x20] sm:$0xff] %vm399, %v381
    %405 = vst.msk [vmem:[#allocation3 + $0x28] sm:$0xff] %vm399, %v386
    %406 = vst.msk [vmem:[#allocation3 + $0x30] sm:$0xff] %vm399, %v391
    %407 = vst.msk [vmem:[#allocation3 + $0x38] sm:$0xff] %vm399, %v396
  $region69: #{fine_tune_head.1} parent=0 // pred_fallthru
    _
  %p408 = por %p82, %p85
  // Predicated region
  $region70: #{fine_tune_head.1} parent=0 // pred_check
    %p409 = pneg %p408
  $region71: #{fine_tune_head.1} parent=0 // pred_check_branch
    %411 = sbr.rel (%p409) target = $region73
  $region72: #{fine_tune_head.1} parent=0 // pred_region
    %v412 = vld [vmem:[%s5] sm:$0xff]
    %v413 = vld [vmem:[%s5 + $0x8] sm:$0xff]
    %v414 = vld [vmem:[%s5 + $0x10] sm:$0xff]
    %v415 = vld [vmem:[%s5 + $0x18] sm:$0xff]
    %v416 = vld [vmem:[%s9] sm:$0xff]
    %v417 = vld [vmem:[%s9 + $0x8] sm:$0xff]
    %v418 = vld [vmem:[%s9 + $0x10] sm:$0xff]
    %v419 = vld [vmem:[%s9 + $0x18] sm:$0xff]
    %v420 = vld [vmem:[%s7] sm:$0x1]
    %v422 = vlaneseq
    %v423 = vshrl.u32 %v422, 7
    %v424 = vsub.s32 0, %v423
    %v425 = vrot.slane %v420, %v424
    %v426 = vld [vmem:[%s11] sm:$0x1]
    %v428 = vlaneseq
    %v429 = vshrl.u32 %v428, 7
    %v430 = vsub.s32 0, %v429
    %v431 = vrot.slane %v426, %v430
    %v432 = vld [vmem:[%s3] sm:$0xff]
    %s433 = sadd.s32 %s84, 7
    %v434 = vld [vmem:[#allocation4] sm:$0xff]
    %v435 = vld [vmem:[#allocation5] sm:$0xff]
    %v436 = vld [vmem:[#allocation2] sm:$0xff]
    %s437 = scalar_lea.vmem [#allocation3], 56
    %v438 = vld [vmem:[%s437] sm:$0xff]
    %v439 = vstv %s81
    %vm440 = vcmp.lt.s32.totalorder %v439, %v432
    %vm441 = vcmask 261120
    %v443 = vsel %vm441, %v434, 0
    %445 = vmatprep.subr.mxu0 0.0
    %446 = vmatpush1.msra.mxu0 0.0
    %447 = vmatprep.subr.mxu0 0.0
    %448 = vmatpush1.msra.mxu0 0.0
    %449 = vmatprep.subr.mxu0 0.0
    %450 = vmatpush1.msra.mxu0 0.0
    %451 = vmatprep.subr.mxu0 0.0
    %452 = vmatpush1.msra.mxu0 0.0
    %453 = vmatprep.subr.mxu0 0.0
    %454 = vmatpush1.msra.mxu0 0.0
    %455 = vmatprep.subr.mxu0 0.0
    %456 = vmatpush1.msra.mxu0 0.0
    %457 = vmatprep.subr.mxu0 0.0
    %458 = vmatpush1.msra.mxu0 0.0
    %459 = vmatprep.subr.mxu0 0.0
    %460 = vmatpush1.msra.mxu0 0.0
    %461 = vmatprep.subr.mxu0 0.0
    %462 = vmatpush1.msra.mxu0 0.0
    %463 = vmatprep.subr.mxu0 0.0
    %464 = vmatpush1.msra.mxu0 0.0
    %465 = vmatprep.subr.mxu0 0.0
    %466 = vmatpush1.msra.mxu0 0.0
    %467 = vmatprep.subr.mxu0 0.0
    %468 = vmatpush1.msra.mxu0 0.0
    %469 = vmatprep.subr.mxu0 0.0
    %470 = vmatpush1.msra.mxu0 %v415
    %471 = vmatprep.subr.mxu0 0.0
    %472 = vmatpush1.msra.mxu0 %v414
    %473 = vmatprep.subr.mxu0 0.0
    %474 = vmatpush1.msra.mxu0 %v413
    %475 = vmatprep.subr.mxu0 0.0
    %476 = vmatpush1.msra.mxu0 %v412
    %477 = vmatprep.subr.mxu0 0.0
    %478 = vmatpush2.msra.mxu0 0.0
    %479 = vmatprep.subr.mxu0 0.0
    %480 = vmatpush2.msra.mxu0 0.0
    %481 = vmatprep.subr.mxu0 0.0
    %482 = vmatpush2.msra.mxu0 0.0
    %483 = vmatprep.subr.mxu0 0.0
    %484 = vmatpush2.msra.mxu0 0.0
    %485 = vmatprep.subr.mxu0 0.0
    %486 = vmatpush2.msra.mxu0 0.0
    %487 = vmatprep.subr.mxu0 0.0
    %488 = vmatpush2.msra.mxu0 0.0
    %489 = vmatprep.subr.mxu0 0.0
    %490 = vmatpush2.msra.mxu0 0.0
    %491 = vmatprep.subr.mxu0 0.0
    %492 = vmatpush2.msra.mxu0 0.0
    %493 = vmatprep.subr.mxu0 0.0
    %494 = vmatpush2.msra.mxu0 0.0
    %495 = vmatprep.subr.mxu0 0.0
    %496 = vmatpush2.msra.mxu0 0.0
    %497 = vmatprep.subr.mxu0 0.0
    %498 = vmatpush2.msra.mxu0 0.0
    %499 = vmatprep.subr.mxu0 0.0
    %500 = vmatpush2.msra.mxu0 0.0
    %501 = vmatprep.subr.mxu0 0.0
    %502 = vmatpush2.msra.mxu0 0.0
    %503 = vmatprep.subr.mxu0 0.0
    %504 = vmatpush2.msra.mxu0 0.0
    %505 = vmatprep.subr.mxu0 0.0
    %506 = vmatpush2.msra.mxu0 0.0
    %507 = vmatprep.subr.mxu0 0.0
    %508 = vmatpush2.msra.mxu0 0.0
    %509 = vmatprep.mubr.f32.mxu0 0.0
    %510 = vmatmul.mubr.f32.gmra.mxu0 %v443
    %v511 = vpop.f32.mrf.mxu0
    %v512 = vadd.f32 0.0, %v511
    %v513 = vpop.f32.mrf.mxu0
    %514 = vdwg.mxu0
    %v515 = vadd.f32 %v436, %v512
    %v516 = vxor.u32 %v515, 2147483648
    %v517 = vmul.f32 %v516, 1.442695
    %v518 = vpow.pop %v517
    %v519 = vadd.f32 %v518, 1.0
    %v520 = vrcp.pop %v519
    %v521 = vmul.f32 1.0, %v520
    %522 = vrot.lane.b32.xlu0 %v425, 64
    %v523 = vpop.permute.xlu0 %522
    %v525 = vadd.f32 %v512, %v523
    %527 = vrot.lane.b32.xlu0 %v525, 64
    %v528 = vpop.permute.xlu0 %527
    %v530 = vmul.f32 %v521, %v528
    %532 = vrot.lane.b32.xlu0 %v530, 64
    %v533 = vpop.permute.xlu0 %532
    %v535 = vadd.f32 %v436, %v533
    %v536 = vtanh.pop %v535
    %v537 = vsub.f32 1.0, %v521
    %539 = vrot.lane.b32.xlu0 %v536, 96
    %v540 = vpop.permute.xlu0 %539
    %v542 = vmul.f32 %v537, %v540
    %543 = vrot.lane.b32.xlu0 %v434, 32
    %v544 = vpop.permute.xlu0 %543
    %v546 = vmul.f32 %v521, %v544
    %v547 = vadd.f32 %v542, %v546
    %v548 = vsel %vm440, 1, 0
    %549 = vset.pattern.permute.xlu0 0
    %550 = vperm.xlu0 %549, %v548
    %v551 = vpop.permute.xlu0 %550
    %vm552 = vcmp.eq.s32.totalorder %v551, 1
    %v553 = vsel %vm552, %v547, %v544
    %v554 = vstv %s433
    %vm555 = vcmp.lt.s32.totalorder %v554, %v432
    %v557 = vsel %vm441, %v435, 0
    %559 = vmatprep.subr.mxu0 0.0
    %560 = vmatpush1.msra.mxu0 0.0
    %561 = vmatprep.subr.mxu0 0.0
    %562 = vmatpush1.msra.mxu0 0.0
    %563 = vmatprep.subr.mxu0 0.0
    %564 = vmatpush1.msra.mxu0 0.0
    %565 = vmatprep.subr.mxu0 0.0
    %566 = vmatpush1.msra.mxu0 0.0
    %567 = vmatprep.subr.mxu0 0.0
    %568 = vmatpush1.msra.mxu0 0.0
    %569 = vmatprep.subr.mxu0 0.0
    %570 = vmatpush1.msra.mxu0 0.0
    %571 = vmatprep.subr.mxu0 0.0
    %572 = vmatpush1.msra.mxu0 0.0
    %573 = vmatprep.subr.mxu0 0.0
    %574 = vmatpush1.msra.mxu0 0.0
    %575 = vmatprep.subr.mxu0 0.0
    %576 = vmatpush1.msra.mxu0 0.0
    %577 = vmatprep.subr.mxu0 0.0
    %578 = vmatpush1.msra.mxu0 0.0
    %579 = vmatprep.subr.mxu0 0.0
    %580 = vmatpush1.msra.mxu0 0.0
    %581 = vmatprep.subr.mxu0 0.0
    %582 = vmatpush1.msra.mxu0 0.0
    %583 = vmatprep.subr.mxu0 0.0
    %584 = vmatpush1.msra.mxu0 %v419
    %585 = vmatprep.subr.mxu0 0.0
    %586 = vmatpush1.msra.mxu0 %v418
    %587 = vmatprep.subr.mxu0 0.0
    %588 = vmatpush1.msra.mxu0 %v417
    %589 = vmatprep.subr.mxu0 0.0
    %590 = vmatpush1.msra.mxu0 %v416
    %591 = vmatprep.subr.mxu0 0.0
    %592 = vmatpush2.msra.mxu0 0.0
    %593 = vmatprep.subr.mxu0 0.0
    %594 = vmatpush2.msra.mxu0 0.0
    %595 = vmatprep.subr.mxu0 0.0
    %596 = vmatpush2.msra.mxu0 0.0
    %597 = vmatprep.subr.mxu0 0.0
    %598 = vmatpush2.msra.mxu0 0.0
    %599 = vmatprep.subr.mxu0 0.0
    %600 = vmatpush2.msra.mxu0 0.0
    %601 = vmatprep.subr.mxu0 0.0
    %602 = vmatpush2.msra.mxu0 0.0
    %603 = vmatprep.subr.mxu0 0.0
    %604 = vmatpush2.msra.mxu0 0.0
    %605 = vmatprep.subr.mxu0 0.0
    %606 = vmatpush2.msra.mxu0 0.0
    %607 = vmatprep.subr.mxu0 0.0
    %608 = vmatpush2.msra.mxu0 0.0
    %609 = vmatprep.subr.mxu0 0.0
    %610 = vmatpush2.msra.mxu0 0.0
    %611 = vmatprep.subr.mxu0 0.0
    %612 = vmatpush2.msra.mxu0 0.0
    %613 = vmatprep.subr.mxu0 0.0
    %614 = vmatpush2.msra.mxu0 0.0
    %615 = vmatprep.subr.mxu0 0.0
    %616 = vmatpush2.msra.mxu0 0.0
    %617 = vmatprep.subr.mxu0 0.0
    %618 = vmatpush2.msra.mxu0 0.0
    %619 = vmatprep.subr.mxu0 0.0
    %620 = vmatpush2.msra.mxu0 0.0
    %621 = vmatprep.subr.mxu0 0.0
    %622 = vmatpush2.msra.mxu0 0.0
    %623 = vmatprep.mubr.f32.mxu0 0.0
    %624 = vmatmul.mubr.f32.gmra.mxu0 %v557
    %v625 = vpop.f32.mrf.mxu0
    %v626 = vadd.f32 0.0, %v625
    %v627 = vpop.f32.mrf.mxu0
    %628 = vdwg.mxu0
    %v629 = vadd.f32 %v438, %v626
    %v630 = vxor.u32 %v629, 2147483648
    %v631 = vmul.f32 %v630, 1.442695
    %v632 = vpow.pop %v631
    %v633 = vadd.f32 %v632, 1.0
    %v634 = vrcp.pop %v633
    %v635 = vmul.f32 1.0, %v634
    %636 = vrot.lane.b32.xlu0 %v431, 64
    %v637 = vpop.permute.xlu0 %636
    %v639 = vadd.f32 %v626, %v637
    %641 = vrot.lane.b32.xlu0 %v639, 64
    %v642 = vpop.permute.xlu0 %641
    %v644 = vmul.f32 %v635, %v642
    %646 = vrot.lane.b32.xlu0 %v644, 64
    %v647 = vpop.permute.xlu0 %646
    %v649 = vadd.f32 %v438, %v647
    %v650 = vtanh.pop %v649
    %v651 = vsub.f32 1.0, %v635
    %653 = vrot.lane.b32.xlu0 %v650, 96
    %v654 = vpop.permute.xlu0 %653
    %v656 = vmul.f32 %v651, %v654
    %657 = vrot.lane.b32.xlu0 %v435, 32
    %v658 = vpop.permute.xlu0 %657
    %v660 = vmul.f32 %v635, %v658
    %v661 = vadd.f32 %v656, %v660
    %v662 = vsel %vm555, 1, 0
    %663 = vset.pattern.permute.xlu0 0
    %664 = vperm.xlu0 %663, %v662
    %v665 = vpop.permute.xlu0 %664
    %vm666 = vcmp.eq.s32.totalorder %v665, 1
    %v667 = vsel %vm666, %v661, %v658
    %s668 = scalar_lea.vmem [#allocation2], 8
    %v669 = vld [vmem:[%s668] sm:$0xff]
    %s670 = scalar_lea.vmem [#allocation3], 48
    %v671 = vld [vmem:[%s670] sm:$0xff]
    %s672 = sadd.s32 %s81, 1
    %v673 = vstv %s672
    %vm674 = vcmp.lt.s32.totalorder %v673, %v432
    %676 = vrot.lane.b32.xlu0 %v553, 96
    %v677 = vpop.permute.xlu0 %676
    %v678 = vsel %vm441, %v677, 0
    %680 = vmatprep.subr.mxu0 0.0
    %681 = vmatpush1.msra.mxu0 0.0
    %682 = vmatprep.subr.mxu0 0.0
    %683 = vmatpush1.msra.mxu0 0.0
    %684 = vmatprep.subr.mxu0 0.0
    %685 = vmatpush1.msra.mxu0 0.0
    %686 = vmatprep.subr.mxu0 0.0
    %687 = vmatpush1.msra.mxu0 0.0
    %688 = vmatprep.subr.mxu0 0.0
    %689 = vmatpush1.msra.mxu0 0.0
    %690 = vmatprep.subr.mxu0 0.0
    %691 = vmatpush1.msra.mxu0 0.0
    %692 = vmatprep.subr.mxu0 0.0
    %693 = vmatpush1.msra.mxu0 0.0
    %694 = vmatprep.subr.mxu0 0.0
    %695 = vmatpush1.msra.mxu0 0.0
    %696 = vmatprep.subr.mxu0 0.0
    %697 = vmatpush1.msra.mxu0 0.0
    %698 = vmatprep.subr.mxu0 0.0
    %699 = vmatpush1.msra.mxu0 0.0
    %700 = vmatprep.subr.mxu0 0.0
    %701 = vmatpush1.msra.mxu0 0.0
    %702 = vmatprep.subr.mxu0 0.0
    %703 = vmatpush1.msra.mxu0 0.0
    %704 = vmatprep.subr.mxu0 0.0
    %705 = vmatpush1.msra.mxu0 %v415
    %706 = vmatprep.subr.mxu0 0.0
    %707 = vmatpush1.msra.mxu0 %v414
    %708 = vmatprep.subr.mxu0 0.0
    %709 = vmatpush1.msra.mxu0 %v413
    %710 = vmatprep.subr.mxu0 0.0
    %711 = vmatpush1.msra.mxu0 %v412
    %712 = vmatprep.subr.mxu0 0.0
    %713 = vmatpush2.msra.mxu0 0.0
    %714 = vmatprep.subr.mxu0 0.0
    %715 = vmatpush2.msra.mxu0 0.0
    %716 = vmatprep.subr.mxu0 0.0
    %717 = vmatpush2.msra.mxu0 0.0
    %718 = vmatprep.subr.mxu0 0.0
    %719 = vmatpush2.msra.mxu0 0.0
    %720 = vmatprep.subr.mxu0 0.0
    %721 = vmatpush2.msra.mxu0 0.0
    %722 = vmatprep.subr.mxu0 0.0
    %723 = vmatpush2.msra.mxu0 0.0
    %724 = vmatprep.subr.mxu0 0.0
    %725 = vmatpush2.msra.mxu0 0.0
    %726 = vmatprep.subr.mxu0 0.0
    %727 = vmatpush2.msra.mxu0 0.0
    %728 = vmatprep.subr.mxu0 0.0
    %729 = vmatpush2.msra.mxu0 0.0
    %730 = vmatprep.subr.mxu0 0.0
    %731 = vmatpush2.msra.mxu0 0.0
    %732 = vmatprep.subr.mxu0 0.0
    %733 = vmatpush2.msra.mxu0 0.0
    %734 = vmatprep.subr.mxu0 0.0
    %735 = vmatpush2.msra.mxu0 0.0
    %736 = vmatprep.subr.mxu0 0.0
    %737 = vmatpush2.msra.mxu0 0.0
    %738 = vmatprep.subr.mxu0 0.0
    %739 = vmatpush2.msra.mxu0 0.0
    %740 = vmatprep.subr.mxu0 0.0
    %741 = vmatpush2.msra.mxu0 0.0
    %742 = vmatprep.subr.mxu0 0.0
    %743 = vmatpush2.msra.mxu0 0.0
    %744 = vmatprep.mubr.f32.mxu0 0.0
    %745 = vmatmul.mubr.f32.gmra.mxu0 %v678
    %v746 = vpop.f32.mrf.mxu0
    %v747 = vadd.f32 0.0, %v746
    %v748 = vpop.f32.mrf.mxu0
    %749 = vdwg.mxu0
    %v750 = vadd.f32 %v669, %v747
    %v751 = vxor.u32 %v750, 2147483648
    %v752 = vmul.f32 %v751, 1.442695
    %v753 = vpow.pop %v752
    %v754 = vadd.f32 %v753, 1.0
    %v755 = vrcp.pop %v754
    %v756 = vmul.f32 1.0, %v755
    %v757 = vadd.f32 %v747, %v523
    %759 = vrot.lane.b32.xlu0 %v757, 64
    %v760 = vpop.permute.xlu0 %759
    %v762 = vmul.f32 %v756, %v760
    %764 = vrot.lane.b32.xlu0 %v762, 64
    %v765 = vpop.permute.xlu0 %764
    %v767 = vadd.f32 %v669, %v765
    %v768 = vtanh.pop %v767
    %v769 = vsub.f32 1.0, %v756
    %771 = vrot.lane.b32.xlu0 %v768, 96
    %v772 = vpop.permute.xlu0 %771
    %v774 = vmul.f32 %v769, %v772
    %v775 = vmul.f32 %v756, %v553
    %v776 = vadd.f32 %v774, %v775
    %v777 = vsel %vm674, 1, 0
    %778 = vset.pattern.permute.xlu0 0
    %779 = vperm.xlu0 %778, %v777
    %v780 = vpop.permute.xlu0 %779
    %vm781 = vcmp.eq.s32.totalorder %v780, 1
    %v782 = vsel %vm781, %v776, %v553
    %s783 = sadd.s32 %s84, 6
    %v784 = vstv %s783
    %vm785 = vcmp.lt.s32.totalorder %v784, %v432
    %787 = vrot.lane.b32.xlu0 %v667, 96
    %v788 = vpop.permute.xlu0 %787
    %v789 = vsel %vm441, %v788, 0
    %791 = vmatprep.subr.mxu0 0.0
    %792 = vmatpush1.msra.mxu0 0.0
    %793 = vmatprep.subr.mxu0 0.0
    %794 = vmatpush1.msra.mxu0 0.0
    %795 = vmatprep.subr.mxu0 0.0
    %796 = vmatpush1.msra.mxu0 0.0
    %797 = vmatprep.subr.mxu0 0.0
    %798 = vmatpush1.msra.mxu0 0.0
    %799 = vmatprep.subr.mxu0 0.0
    %800 = vmatpush1.msra.mxu0 0.0
    %801 = vmatprep.subr.mxu0 0.0
    %802 = vmatpush1.msra.mxu0 0.0
    %803 = vmatprep.subr.mxu0 0.0
    %804 = vmatpush1.msra.mxu0 0.0
    %805 = vmatprep.subr.mxu0 0.0
    %806 = vmatpush1.msra.mxu0 0.0
    %807 = vmatprep.subr.mxu0 0.0
    %808 = vmatpush1.msra.mxu0 0.0
    %809 = vmatprep.subr.mxu0 0.0
    %810 = vmatpush1.msra.mxu0 0.0
    %811 = vmatprep.subr.mxu0 0.0
    %812 = vmatpush1.msra.mxu0 0.0
    %813 = vmatprep.subr.mxu0 0.0
    %814 = vmatpush1.msra.mxu0 0.0
    %815 = vmatprep.subr.mxu0 0.0
    %816 = vmatpush1.msra.mxu0 %v419
    %817 = vmatprep.subr.mxu0 0.0
    %818 = vmatpush1.msra.mxu0 %v418
    %819 = vmatprep.subr.mxu0 0.0
    %820 = vmatpush1.msra.mxu0 %v417
    %821 = vmatprep.subr.mxu0 0.0
    %822 = vmatpush1.msra.mxu0 %v416
    %823 = vmatprep.subr.mxu0 0.0
    %824 = vmatpush2.msra.mxu0 0.0
    %825 = vmatprep.subr.mxu0 0.0
    %826 = vmatpush2.msra.mxu0 0.0
    %827 = vmatprep.subr.mxu0 0.0
    %828 = vmatpush2.msra.mxu0 0.0
    %829 = vmatprep.subr.mxu0 0.0
    %830 = vmatpush2.msra.mxu0 0.0
    %831 = vmatprep.subr.mxu0 0.0
    %832 = vmatpush2.msra.mxu0 0.0
    %833 = vmatprep.subr.mxu0 0.0
    %834 = vmatpush2.msra.mxu0 0.0
    %835 = vmatprep.subr.mxu0 0.0
    %836 = vmatpush2.msra.mxu0 0.0
    %837 = vmatprep.subr.mxu0 0.0
    %838 = vmatpush2.msra.mxu0 0.0
    %839 = vmatprep.subr.mxu0 0.0
    %840 = vmatpush2.msra.mxu0 0.0
    %841 = vmatprep.subr.mxu0 0.0
    %842 = vmatpush2.msra.mxu0 0.0
    %843 = vmatprep.subr.mxu0 0.0
    %844 = vmatpush2.msra.mxu0 0.0
    %845 = vmatprep.subr.mxu0 0.0
    %846 = vmatpush2.msra.mxu0 0.0
    %847 = vmatprep.subr.mxu0 0.0
    %848 = vmatpush2.msra.mxu0 0.0
    %849 = vmatprep.subr.mxu0 0.0
    %850 = vmatpush2.msra.mxu0 0.0
    %851 = vmatprep.subr.mxu0 0.0
    %852 = vmatpush2.msra.mxu0 0.0
    %853 = vmatprep.subr.mxu0 0.0
    %854 = vmatpush2.msra.mxu0 0.0
    %855 = vmatprep.mubr.f32.mxu0 0.0
    %856 = vmatmul.mubr.f32.gmra.mxu0 %v789
    %v857 = vpop.f32.mrf.mxu0
    %v858 = vadd.f32 0.0, %v857
    %v859 = vpop.f32.mrf.mxu0
    %860 = vdwg.mxu0
    %v861 = vadd.f32 %v671, %v858
    %v862 = vxor.u32 %v861, 2147483648
    %v863 = vmul.f32 %v862, 1.442695
    %v864 = vpow.pop %v863
    %v865 = vadd.f32 %v864, 1.0
    %v866 = vrcp.pop %v865
    %v867 = vmul.f32 1.0, %v866
    %v868 = vadd.f32 %v858, %v637
    %870 = vrot.lane.b32.xlu0 %v868, 64
    %v871 = vpop.permute.xlu0 %870
    %v873 = vmul.f32 %v867, %v871
    %875 = vrot.lane.b32.xlu0 %v873, 64
    %v876 = vpop.permute.xlu0 %875
    %v878 = vadd.f32 %v671, %v876
    %v879 = vtanh.pop %v878
    %v880 = vsub.f32 1.0, %v867
    %882 = vrot.lane.b32.xlu0 %v879, 96
    %v883 = vpop.permute.xlu0 %882
    %v885 = vmul.f32 %v880, %v883
    %v886 = vmul.f32 %v867, %v667
    %v887 = vadd.f32 %v885, %v886
    %v888 = vsel %vm785, 1, 0
    %889 = vset.pattern.permute.xlu0 0
    %890 = vperm.xlu0 %889, %v888
    %v891 = vpop.permute.xlu0 %890
    %vm892 = vcmp.eq.s32.totalorder %v891, 1
    %v893 = vsel %vm892, %v887, %v667
    %s894 = scalar_lea.vmem [#allocation2], 16
    %v895 = vld [vmem:[%s894] sm:$0xff]
    %s896 = scalar_lea.vmem [#allocation3], 40
    %v897 = vld [vmem:[%s896] sm:$0xff]
    %s898 = sadd.s32 %s81, 2
    %v899 = vstv %s898
    %vm900 = vcmp.lt.s32.totalorder %v899, %v432
    %902 = vrot.lane.b32.xlu0 %v782, 96
    %v903 = vpop.permute.xlu0 %902
    %v904 = vsel %vm441, %v903, 0
    %906 = vmatprep.subr.mxu0 0.0
    %907 = vmatpush1.msra.mxu0 0.0
    %908 = vmatprep.subr.mxu0 0.0
    %909 = vmatpush1.msra.mxu0 0.0
    %910 = vmatprep.subr.mxu0 0.0
    %911 = vmatpush1.msra.mxu0 0.0
    %912 = vmatprep.subr.mxu0 0.0
    %913 = vmatpush1.msra.mxu0 0.0
    %914 = vmatprep.subr.mxu0 0.0
    %915 = vmatpush1.msra.mxu0 0.0
    %916 = vmatprep.subr.mxu0 0.0
    %917 = vmatpush1.msra.mxu0 0.0
    %918 = vmatprep.subr.mxu0 0.0
    %919 = vmatpush1.msra.mxu0 0.0
    %920 = vmatprep.subr.mxu0 0.0
    %921 = vmatpush1.msra.mxu0 0.0
    %922 = vmatprep.subr.mxu0 0.0
    %923 = vmatpush1.msra.mxu0 0.0
    %924 = vmatprep.subr.mxu0 0.0
    %925 = vmatpush1.msra.mxu0 0.0
    %926 = vmatprep.subr.mxu0 0.0
    %927 = vmatpush1.msra.mxu0 0.0
    %928 = vmatprep.subr.mxu0 0.0
    %929 = vmatpush1.msra.mxu0 0.0
    %930 = vmatprep.subr.mxu0 0.0
    %931 = vmatpush1.msra.mxu0 %v415
    %932 = vmatprep.subr.mxu0 0.0
    %933 = vmatpush1.msra.mxu0 %v414
    %934 = vmatprep.subr.mxu0 0.0
    %935 = vmatpush1.msra.mxu0 %v413
    %936 = vmatprep.subr.mxu0 0.0
    %937 = vmatpush1.msra.mxu0 %v412
    %938 = vmatprep.subr.mxu0 0.0
    %939 = vmatpush2.msra.mxu0 0.0
    %940 = vmatprep.subr.mxu0 0.0
    %941 = vmatpush2.msra.mxu0 0.0
    %942 = vmatprep.subr.mxu0 0.0
    %943 = vmatpush2.msra.mxu0 0.0
    %944 = vmatprep.subr.mxu0 0.0
    %945 = vmatpush2.msra.mxu0 0.0
    %946 = vmatprep.subr.mxu0 0.0
    %947 = vmatpush2.msra.mxu0 0.0
    %948 = vmatprep.subr.mxu0 0.0
    %949 = vmatpush2.msra.mxu0 0.0
    %950 = vmatprep.subr.mxu0 0.0
    %951 = vmatpush2.msra.mxu0 0.0
    %952 = vmatprep.subr.mxu0 0.0
    %953 = vmatpush2.msra.mxu0 0.0
    %954 = vmatprep.subr.mxu0 0.0
    %955 = vmatpush2.msra.mxu0 0.0
    %956 = vmatprep.subr.mxu0 0.0
    %957 = vmatpush2.msra.mxu0 0.0
    %958 = vmatprep.subr.mxu0 0.0
    %959 = vmatpush2.msra.mxu0 0.0
    %960 = vmatprep.subr.mxu0 0.0
    %961 = vmatpush2.msra.mxu0 0.0
    %962 = vmatprep.subr.mxu0 0.0
    %963 = vmatpush2.msra.mxu0 0.0
    %964 = vmatprep.subr.mxu0 0.0
    %965 = vmatpush2.msra.mxu0 0.0
    %966 = vmatprep.subr.mxu0 0.0
    %967 = vmatpush2.msra.mxu0 0.0
    %968 = vmatprep.subr.mxu0 0.0
    %969 = vmatpush2.msra.mxu0 0.0
    %970 = vmatprep.mubr.f32.mxu0 0.0
    %971 = vmatmul.mubr.f32.gmra.mxu0 %v904
    %v972 = vpop.f32.mrf.mxu0
    %v973 = vadd.f32 0.0, %v972
    %v974 = vpop.f32.mrf.mxu0
    %975 = vdwg.mxu0
    %v976 = vadd.f32 %v895, %v973
    %v977 = vxor.u32 %v976, 2147483648
    %v978 = vmul.f32 %v977, 1.442695
    %v979 = vpow.pop %v978
    %v980 = vadd.f32 %v979, 1.0
    %v981 = vrcp.pop %v980
    %v982 = vmul.f32 1.0, %v981
    %v983 = vadd.f32 %v973, %v523
    %985 = vrot.lane.b32.xlu0 %v983, 64
    %v986 = vpop.permute.xlu0 %985
    %v988 = vmul.f32 %v982, %v986
    %990 = vrot.lane.b32.xlu0 %v988, 64
    %v991 = vpop.permute.xlu0 %990
    %v993 = vadd.f32 %v895, %v991
    %v994 = vtanh.pop %v993
    %v995 = vsub.f32 1.0, %v982
    %997 = vrot.lane.b32.xlu0 %v994, 96
    %v998 = vpop.permute.xlu0 %997
    %v1000 = vmul.f32 %v995, %v998
    %v1001 = vmul.f32 %v982, %v782
    %v1002 = vadd.f32 %v1000, %v1001
    %v1003 = vsel %vm900, 1, 0
    %1004 = vset.pattern.permute.xlu0 0
    %1005 = vperm.xlu0 %1004, %v1003
    %v1006 = vpop.permute.xlu0 %1005
    %vm1007 = vcmp.eq.s32.totalorder %v1006, 1
    %v1008 = vsel %vm1007, %v1002, %v782
    %s1009 = sadd.s32 %s84, 5
    %v1010 = vstv %s1009
    %vm1011 = vcmp.lt.s32.totalorder %v1010, %v432
    %1013 = vrot.lane.b32.xlu0 %v893, 96
    %v1014 = vpop.permute.xlu0 %1013
    %v1015 = vsel %vm441, %v1014, 0
    %1017 = vmatprep.subr.mxu0 0.0
    %1018 = vmatpush1.msra.mxu0 0.0
    %1019 = vmatprep.subr.mxu0 0.0
    %1020 = vmatpush1.msra.mxu0 0.0
    %1021 = vmatprep.subr.mxu0 0.0
    %1022 = vmatpush1.msra.mxu0 0.0
    %1023 = vmatprep.subr.mxu0 0.0
    %1024 = vmatpush1.msra.mxu0 0.0
    %1025 = vmatprep.subr.mxu0 0.0
    %1026 = vmatpush1.msra.mxu0 0.0
    %1027 = vmatprep.subr.mxu0 0.0
    %1028 = vmatpush1.msra.mxu0 0.0
    %1029 = vmatprep.subr.mxu0 0.0
    %1030 = vmatpush1.msra.mxu0 0.0
    %1031 = vmatprep.subr.mxu0 0.0
    %1032 = vmatpush1.msra.mxu0 0.0
    %1033 = vmatprep.subr.mxu0 0.0
    %1034 = vmatpush1.msra.mxu0 0.0
    %1035 = vmatprep.subr.mxu0 0.0
    %1036 = vmatpush1.msra.mxu0 0.0
    %1037 = vmatprep.subr.mxu0 0.0
    %1038 = vmatpush1.msra.mxu0 0.0
    %1039 = vmatprep.subr.mxu0 0.0
    %1040 = vmatpush1.msra.mxu0 0.0
    %1041 = vmatprep.subr.mxu0 0.0
    %1042 = vmatpush1.msra.mxu0 %v419
    %1043 = vmatprep.subr.mxu0 0.0
    %1044 = vmatpush1.msra.mxu0 %v418
    %1045 = vmatprep.subr.mxu0 0.0
    %1046 = vmatpush1.msra.mxu0 %v417
    %1047 = vmatprep.subr.mxu0 0.0
    %1048 = vmatpush1.msra.mxu0 %v416
    %1049 = vmatprep.subr.mxu0 0.0
    %1050 = vmatpush2.msra.mxu0 0.0
    %1051 = vmatprep.subr.mxu0 0.0
    %1052 = vmatpush2.msra.mxu0 0.0
    %1053 = vmatprep.subr.mxu0 0.0
    %1054 = vmatpush2.msra.mxu0 0.0
    %1055 = vmatprep.subr.mxu0 0.0
    %1056 = vmatpush2.msra.mxu0 0.0
    %1057 = vmatprep.subr.mxu0 0.0
    %1058 = vmatpush2.msra.mxu0 0.0
    %1059 = vmatprep.subr.mxu0 0.0
    %1060 = vmatpush2.msra.mxu0 0.0
    %1061 = vmatprep.subr.mxu0 0.0
    %1062 = vmatpush2.msra.mxu0 0.0
    %1063 = vmatprep.subr.mxu0 0.0
    %1064 = vmatpush2.msra.mxu0 0.0
    %1065 = vmatprep.subr.mxu0 0.0
    %1066 = vmatpush2.msra.mxu0 0.0
    %1067 = vmatprep.subr.mxu0 0.0
    %1068 = vmatpush2.msra.mxu0 0.0
    %1069 = vmatprep.subr.mxu0 0.0
    %1070 = vmatpush2.msra.mxu0 0.0
    %1071 = vmatprep.subr.mxu0 0.0
    %1072 = vmatpush2.msra.mxu0 0.0
    %1073 = vmatprep.subr.mxu0 0.0
    %1074 = vmatpush2.msra.mxu0 0.0
    %1075 = vmatprep.subr.mxu0 0.0
    %1076 = vmatpush2.msra.mxu0 0.0
    %1077 = vmatprep.subr.mxu0 0.0
    %1078 = vmatpush2.msra.mxu0 0.0
    %1079 = vmatprep.subr.mxu0 0.0
    %1080 = vmatpush2.msra.mxu0 0.0
    %1081 = vmatprep.mubr.f32.mxu0 0.0
    %1082 = vmatmul.mubr.f32.gmra.mxu0 %v1015
    %v1083 = vpop.f32.mrf.mxu0
    %v1084 = vadd.f32 0.0, %v1083
    %v1085 = vpop.f32.mrf.mxu0
    %1086 = vdwg.mxu0
    %v1087 = vadd.f32 %v897, %v1084
    %v1088 = vxor.u32 %v1087, 2147483648
    %v1089 = vmul.f32 %v1088, 1.442695
    %v1090 = vpow.pop %v1089
    %v1091 = vadd.f32 %v1090, 1.0
    %v1092 = vrcp.pop %v1091
    %v1093 = vmul.f32 1.0, %v1092
    %v1094 = vadd.f32 %v1084, %v637
    %1096 = vrot.lane.b32.xlu0 %v1094, 64
    %v1097 = vpop.permute.xlu0 %1096
    %v1099 = vmul.f32 %v1093, %v1097
    %1101 = vrot.lane.b32.xlu0 %v1099, 64
    %v1102 = vpop.permute.xlu0 %1101
    %v1104 = vadd.f32 %v897, %v1102
    %v1105 = vtanh.pop %v1104
    %v1106 = vsub.f32 1.0, %v1093
    %1108 = vrot.lane.b32.xlu0 %v1105, 96
    %v1109 = vpop.permute.xlu0 %1108
    %v1111 = vmul.f32 %v1106, %v1109
    %v1112 = vmul.f32 %v1093, %v893
    %v1113 = vadd.f32 %v1111, %v1112
    %v1114 = vsel %vm1011, 1, 0
    %1115 = vset.pattern.permute.xlu0 0
    %1116 = vperm.xlu0 %1115, %v1114
    %v1117 = vpop.permute.xlu0 %1116
    %vm1118 = vcmp.eq.s32.totalorder %v1117, 1
    %v1119 = vsel %vm1118, %v1113, %v893
    %s1120 = scalar_lea.vmem [#allocation2], 24
    %v1121 = vld [vmem:[%s1120] sm:$0xff]
    %s1122 = scalar_lea.vmem [#allocation3], 32
    %v1123 = vld [vmem:[%s1122] sm:$0xff]
    %s1124 = sadd.s32 %s81, 3
    %v1125 = vstv %s1124
    %vm1126 = vcmp.lt.s32.totalorder %v1125, %v432
    %1128 = vrot.lane.b32.xlu0 %v1008, 96
    %v1129 = vpop.permute.xlu0 %1128
    %v1130 = vsel %vm441, %v1129, 0
    %1132 = vmatprep.subr.mxu0 0.0
    %1133 = vmatpush1.msra.mxu0 0.0
    %1134 = vmatprep.subr.mxu0 0.0
    %1135 = vmatpush1.msra.mxu0 0.0
    %1136 = vmatprep.subr.mxu0 0.0
    %1137 = vmatpush1.msra.mxu0 0.0
    %1138 = vmatprep.subr.mxu0 0.0
    %1139 = vmatpush1.msra.mxu0 0.0
    %1140 = vmatprep.subr.mxu0 0.0
    %1141 = vmatpush1.msra.mxu0 0.0
    %1142 = vmatprep.subr.mxu0 0.0
    %1143 = vmatpush1.msra.mxu0 0.0
    %1144 = vmatprep.subr.mxu0 0.0
    %1145 = vmatpush1.msra.mxu0 0.0
    %1146 = vmatprep.subr.mxu0 0.0
    %1147 = vmatpush1.msra.mxu0 0.0
    %1148 = vmatprep.subr.mxu0 0.0
    %1149 = vmatpush1.msra.mxu0 0.0
    %1150 = vmatprep.subr.mxu0 0.0
    %1151 = vmatpush1.msra.mxu0 0.0
    %1152 = vmatprep.subr.mxu0 0.0
    %1153 = vmatpush1.msra.mxu0 0.0
    %1154 = vmatprep.subr.mxu0 0.0
    %1155 = vmatpush1.msra.mxu0 0.0
    %1156 = vmatprep.subr.mxu0 0.0
    %1157 = vmatpush1.msra.mxu0 %v415
    %1158 = vmatprep.subr.mxu0 0.0
    %1159 = vmatpush1.msra.mxu0 %v414
    %1160 = vmatprep.subr.mxu0 0.0
    %1161 = vmatpush1.msra.mxu0 %v413
    %1162 = vmatprep.subr.mxu0 0.0
    %1163 = vmatpush1.msra.mxu0 %v412
    %1164 = vmatprep.subr.mxu0 0.0
    %1165 = vmatpush2.msra.mxu0 0.0
    %1166 = vmatprep.subr.mxu0 0.0
    %1167 = vmatpush2.msra.mxu0 0.0
    %1168 = vmatprep.subr.mxu0 0.0
    %1169 = vmatpush2.msra.mxu0 0.0
    %1170 = vmatprep.subr.mxu0 0.0
    %1171 = vmatpush2.msra.mxu0 0.0
    %1172 = vmatprep.subr.mxu0 0.0
    %1173 = vmatpush2.msra.mxu0 0.0
    %1174 = vmatprep.subr.mxu0 0.0
    %1175 = vmatpush2.msra.mxu0 0.0
    %1176 = vmatprep.subr.mxu0 0.0
    %1177 = vmatpush2.msra.mxu0 0.0
    %1178 = vmatprep.subr.mxu0 0.0
    %1179 = vmatpush2.msra.mxu0 0.0
    %1180 = vmatprep.subr.mxu0 0.0
    %1181 = vmatpush2.msra.mxu0 0.0
    %1182 = vmatprep.subr.mxu0 0.0
    %1183 = vmatpush2.msra.mxu0 0.0
    %1184 = vmatprep.subr.mxu0 0.0
    %1185 = vmatpush2.msra.mxu0 0.0
    %1186 = vmatprep.subr.mxu0 0.0
    %1187 = vmatpush2.msra.mxu0 0.0
    %1188 = vmatprep.subr.mxu0 0.0
    %1189 = vmatpush2.msra.mxu0 0.0
    %1190 = vmatprep.subr.mxu0 0.0
    %1191 = vmatpush2.msra.mxu0 0.0
    %1192 = vmatprep.subr.mxu0 0.0
    %1193 = vmatpush2.msra.mxu0 0.0
    %1194 = vmatprep.subr.mxu0 0.0
    %1195 = vmatpush2.msra.mxu0 0.0
    %1196 = vmatprep.mubr.f32.mxu0 0.0
    %1197 = vmatmul.mubr.f32.gmra.mxu0 %v1130
    %v1198 = vpop.f32.mrf.mxu0
    %v1199 = vadd.f32 0.0, %v1198
    %v1200 = vpop.f32.mrf.mxu0
    %1201 = vdwg.mxu0
    %v1202 = vadd.f32 %v1121, %v1199
    %v1203 = vxor.u32 %v1202, 2147483648
    %v1204 = vmul.f32 %v1203, 1.442695
    %v1205 = vpow.pop %v1204
    %v1206 = vadd.f32 %v1205, 1.0
    %v1207 = vrcp.pop %v1206
    %v1208 = vmul.f32 1.0, %v1207
    %v1209 = vadd.f32 %v1199, %v523
    %1211 = vrot.lane.b32.xlu0 %v1209, 64
    %v1212 = vpop.permute.xlu0 %1211
    %v1214 = vmul.f32 %v1208, %v1212
    %1216 = vrot.lane.b32.xlu0 %v1214, 64
    %v1217 = vpop.permute.xlu0 %1216
    %v1219 = vadd.f32 %v1121, %v1217
    %v1220 = vtanh.pop %v1219
    %v1221 = vsub.f32 1.0, %v1208
    %1223 = vrot.lane.b32.xlu0 %v1220, 96
    %v1224 = vpop.permute.xlu0 %1223
    %v1226 = vmul.f32 %v1221, %v1224
    %v1227 = vmul.f32 %v1208, %v1008
    %v1228 = vadd.f32 %v1226, %v1227
    %v1229 = vsel %vm1126, 1, 0
    %1230 = vset.pattern.permute.xlu0 0
    %1231 = vperm.xlu0 %1230, %v1229
    %v1232 = vpop.permute.xlu0 %1231
    %vm1233 = vcmp.eq.s32.totalorder %v1232, 1
    %v1234 = vsel %vm1233, %v1228, %v1008
    %s1235 = sadd.s32 %s84, 4
    %v1236 = vstv %s1235
    %vm1237 = vcmp.lt.s32.totalorder %v1236, %v432
    %1239 = vrot.lane.b32.xlu0 %v1119, 96
    %v1240 = vpop.permute.xlu0 %1239
    %v1241 = vsel %vm441, %v1240, 0
    %1243 = vmatprep.subr.mxu0 0.0
    %1244 = vmatpush1.msra.mxu0 0.0
    %1245 = vmatprep.subr.mxu0 0.0
    %1246 = vmatpush1.msra.mxu0 0.0
    %1247 = vmatprep.subr.mxu0 0.0
    %1248 = vmatpush1.msra.mxu0 0.0
    %1249 = vmatprep.subr.mxu0 0.0
    %1250 = vmatpush1.msra.mxu0 0.0
    %1251 = vmatprep.subr.mxu0 0.0
    %1252 = vmatpush1.msra.mxu0 0.0
    %1253 = vmatprep.subr.mxu0 0.0
    %1254 = vmatpush1.msra.mxu0 0.0
    %1255 = vmatprep.subr.mxu0 0.0
    %1256 = vmatpush1.msra.mxu0 0.0
    %1257 = vmatprep.subr.mxu0 0.0
    %1258 = vmatpush1.msra.mxu0 0.0
    %1259 = vmatprep.subr.mxu0 0.0
    %1260 = vmatpush1.msra.mxu0 0.0
    %1261 = vmatprep.subr.mxu0 0.0
    %1262 = vmatpush1.msra.mxu0 0.0
    %1263 = vmatprep.subr.mxu0 0.0
    %1264 = vmatpush1.msra.mxu0 0.0
    %1265 = vmatprep.subr.mxu0 0.0
    %1266 = vmatpush1.msra.mxu0 0.0
    %1267 = vmatprep.subr.mxu0 0.0
    %1268 = vmatpush1.msra.mxu0 %v419
    %1269 = vmatprep.subr.mxu0 0.0
    %1270 = vmatpush1.msra.mxu0 %v418
    %1271 = vmatprep.subr.mxu0 0.0
    %1272 = vmatpush1.msra.mxu0 %v417
    %1273 = vmatprep.subr.mxu0 0.0
    %1274 = vmatpush1.msra.mxu0 %v416
    %1275 = vmatprep.subr.mxu0 0.0
    %1276 = vmatpush2.msra.mxu0 0.0
    %1277 = vmatprep.subr.mxu0 0.0
    %1278 = vmatpush2.msra.mxu0 0.0
    %1279 = vmatprep.subr.mxu0 0.0
    %1280 = vmatpush2.msra.mxu0 0.0
    %1281 = vmatprep.subr.mxu0 0.0
    %1282 = vmatpush2.msra.mxu0 0.0
    %1283 = vmatprep.subr.mxu0 0.0
    %1284 = vmatpush2.msra.mxu0 0.0
    %1285 = vmatprep.subr.mxu0 0.0
    %1286 = vmatpush2.msra.mxu0 0.0
    %1287 = vmatprep.subr.mxu0 0.0
    %1288 = vmatpush2.msra.mxu0 0.0
    %1289 = vmatprep.subr.mxu0 0.0
    %1290 = vmatpush2.msra.mxu0 0.0
    %1291 = vmatprep.subr.mxu0 0.0
    %1292 = vmatpush2.msra.mxu0 0.0
    %1293 = vmatprep.subr.mxu0 0.0
    %1294 = vmatpush2.msra.mxu0 0.0
    %1295 = vmatprep.subr.mxu0 0.0
    %1296 = vmatpush2.msra.mxu0 0.0
    %1297 = vmatprep.subr.mxu0 0.0
    %1298 = vmatpush2.msra.mxu0 0.0
    %1299 = vmatprep.subr.mxu0 0.0
    %1300 = vmatpush2.msra.mxu0 0.0
    %1301 = vmatprep.subr.mxu0 0.0
    %1302 = vmatpush2.msra.mxu0 0.0
    %1303 = vmatprep.subr.mxu0 0.0
    %1304 = vmatpush2.msra.mxu0 0.0
    %1305 = vmatprep.subr.mxu0 0.0
    %1306 = vmatpush2.msra.mxu0 0.0
    %1307 = vmatprep.mubr.f32.mxu0 0.0
    %1308 = vmatmul.mubr.f32.gmra.mxu0 %v1241
    %v1309 = vpop.f32.mrf.mxu0
    %v1310 = vadd.f32 0.0, %v1309
    %v1311 = vpop.f32.mrf.mxu0
    %1312 = vdwg.mxu0
    %v1313 = vadd.f32 %v1123, %v1310
    %v1314 = vxor.u32 %v1313, 2147483648
    %v1315 = vmul.f32 %v1314, 1.442695
    %v1316 = vpow.pop %v1315
    %v1317 = vadd.f32 %v1316, 1.0
    %v1318 = vrcp.pop %v1317
    %v1319 = vmul.f32 1.0, %v1318
    %v1320 = vadd.f32 %v1310, %v637
    %1322 = vrot.lane.b32.xlu0 %v1320, 64
    %v1323 = vpop.permute.xlu0 %1322
    %v1325 = vmul.f32 %v1319, %v1323
    %1327 = vrot.lane.b32.xlu0 %v1325, 64
    %v1328 = vpop.permute.xlu0 %1327
    %v1330 = vadd.f32 %v1123, %v1328
    %v1331 = vtanh.pop %v1330
    %v1332 = vsub.f32 1.0, %v1319
    %1334 = vrot.lane.b32.xlu0 %v1331, 96
    %v1335 = vpop.permute.xlu0 %1334
    %v1337 = vmul.f32 %v1332, %v1335
    %v1338 = vmul.f32 %v1319, %v1119
    %v1339 = vadd.f32 %v1337, %v1338
    %v1340 = vsel %vm1237, 1, 0
    %1341 = vset.pattern.permute.xlu0 0
    %1342 = vperm.xlu0 %1341, %v1340
    %v1343 = vpop.permute.xlu0 %1342
    %vm1344 = vcmp.eq.s32.totalorder %v1343, 1
    %v1345 = vsel %vm1344, %v1339, %v1119
    %s1346 = scalar_lea.vmem [#allocation2], 32
    %v1347 = vld [vmem:[%s1346] sm:$0xff]
    %s1348 = scalar_lea.vmem [#allocation3], 24
    %v1349 = vld [vmem:[%s1348] sm:$0xff]
    %s1350 = sadd.s32 %s81, 4
    %v1351 = vstv %s1350
    %vm1352 = vcmp.lt.s32.totalorder %v1351, %v432
    %1354 = vrot.lane.b32.xlu0 %v1234, 96
    %v1355 = vpop.permute.xlu0 %1354
    %v1356 = vsel %vm441, %v1355, 0
    %1358 = vmatprep.subr.mxu0 0.0
    %1359 = vmatpush1.msra.mxu0 0.0
    %1360 = vmatprep.subr.mxu0 0.0
    %1361 = vmatpush1.msra.mxu0 0.0
    %1362 = vmatprep.subr.mxu0 0.0
    %1363 = vmatpush1.msra.mxu0 0.0
    %1364 = vmatprep.subr.mxu0 0.0
    %1365 = vmatpush1.msra.mxu0 0.0
    %1366 = vmatprep.subr.mxu0 0.0
    %1367 = vmatpush1.msra.mxu0 0.0
    %1368 = vmatprep.subr.mxu0 0.0
    %1369 = vmatpush1.msra.mxu0 0.0
    %1370 = vmatprep.subr.mxu0 0.0
    %1371 = vmatpush1.msra.mxu0 0.0
    %1372 = vmatprep.subr.mxu0 0.0
    %1373 = vmatpush1.msra.mxu0 0.0
    %1374 = vmatprep.subr.mxu0 0.0
    %1375 = vmatpush1.msra.mxu0 0.0
    %1376 = vmatprep.subr.mxu0 0.0
    %1377 = vmatpush1.msra.mxu0 0.0
    %1378 = vmatprep.subr.mxu0 0.0
    %1379 = vmatpush1.msra.mxu0 0.0
    %1380 = vmatprep.subr.mxu0 0.0
    %1381 = vmatpush1.msra.mxu0 0.0
    %1382 = vmatprep.subr.mxu0 0.0
    %1383 = vmatpush1.msra.mxu0 %v415
    %1384 = vmatprep.subr.mxu0 0.0
    %1385 = vmatpush1.msra.mxu0 %v414
    %1386 = vmatprep.subr.mxu0 0.0
    %1387 = vmatpush1.msra.mxu0 %v413
    %1388 = vmatprep.subr.mxu0 0.0
    %1389 = vmatpush1.msra.mxu0 %v412
    %1390 = vmatprep.subr.mxu0 0.0
    %1391 = vmatpush2.msra.mxu0 0.0
    %1392 = vmatprep.subr.mxu0 0.0
    %1393 = vmatpush2.msra.mxu0 0.0
    %1394 = vmatprep.subr.mxu0 0.0
    %1395 = vmatpush2.msra.mxu0 0.0
    %1396 = vmatprep.subr.mxu0 0.0
    %1397 = vmatpush2.msra.mxu0 0.0
    %1398 = vmatprep.subr.mxu0 0.0
    %1399 = vmatpush2.msra.mxu0 0.0
    %1400 = vmatprep.subr.mxu0 0.0
    %1401 = vmatpush2.msra.mxu0 0.0
    %1402 = vmatprep.subr.mxu0 0.0
    %1403 = vmatpush2.msra.mxu0 0.0
    %1404 = vmatprep.subr.mxu0 0.0
    %1405 = vmatpush2.msra.mxu0 0.0
    %1406 = vmatprep.subr.mxu0 0.0
    %1407 = vmatpush2.msra.mxu0 0.0
    %1408 = vmatprep.subr.mxu0 0.0
    %1409 = vmatpush2.msra.mxu0 0.0
    %1410 = vmatprep.subr.mxu0 0.0
    %1411 = vmatpush2.msra.mxu0 0.0
    %1412 = vmatprep.subr.mxu0 0.0
    %1413 = vmatpush2.msra.mxu0 0.0
    %1414 = vmatprep.subr.mxu0 0.0
    %1415 = vmatpush2.msra.mxu0 0.0
    %1416 = vmatprep.subr.mxu0 0.0
    %1417 = vmatpush2.msra.mxu0 0.0
    %1418 = vmatprep.subr.mxu0 0.0
    %1419 = vmatpush2.msra.mxu0 0.0
    %1420 = vmatprep.subr.mxu0 0.0
    %1421 = vmatpush2.msra.mxu0 0.0
    %1422 = vmatprep.mubr.f32.mxu0 0.0
    %1423 = vmatmul.mubr.f32.gmra.mxu0 %v1356
    %v1424 = vpop.f32.mrf.mxu0
    %v1425 = vadd.f32 0.0, %v1424
    %v1426 = vpop.f32.mrf.mxu0
    %1427 = vdwg.mxu0
    %v1428 = vadd.f32 %v1347, %v1425
    %v1429 = vxor.u32 %v1428, 2147483648
    %v1430 = vmul.f32 %v1429, 1.442695
    %v1431 = vpow.pop %v1430
    %v1432 = vadd.f32 %v1431, 1.0
    %v1433 = vrcp.pop %v1432
    %v1434 = vmul.f32 1.0, %v1433
    %v1435 = vadd.f32 %v1425, %v523
    %1437 = vrot.lane.b32.xlu0 %v1435, 64
    %v1438 = vpop.permute.xlu0 %1437
    %v1440 = vmul.f32 %v1434, %v1438
    %1442 = vrot.lane.b32.xlu0 %v1440, 64
    %v1443 = vpop.permute.xlu0 %1442
    %v1445 = vadd.f32 %v1347, %v1443
    %v1446 = vtanh.pop %v1445
    %v1447 = vsub.f32 1.0, %v1434
    %1449 = vrot.lane.b32.xlu0 %v1446, 96
    %v1450 = vpop.permute.xlu0 %1449
    %v1452 = vmul.f32 %v1447, %v1450
    %v1453 = vmul.f32 %v1434, %v1234
    %v1454 = vadd.f32 %v1452, %v1453
    %v1455 = vsel %vm1352, 1, 0
    %1456 = vset.pattern.permute.xlu0 0
    %1457 = vperm.xlu0 %1456, %v1455
    %v1458 = vpop.permute.xlu0 %1457
    %vm1459 = vcmp.eq.s32.totalorder %v1458, 1
    %v1460 = vsel %vm1459, %v1454, %v1234
    %s1461 = sadd.s32 %s84, 3
    %v1462 = vstv %s1461
    %vm1463 = vcmp.lt.s32.totalorder %v1462, %v432
    %1465 = vrot.lane.b32.xlu0 %v1345, 96
    %v1466 = vpop.permute.xlu0 %1465
    %v1467 = vsel %vm441, %v1466, 0
    %1469 = vmatprep.subr.mxu0 0.0
    %1470 = vmatpush1.msra.mxu0 0.0
    %1471 = vmatprep.subr.mxu0 0.0
    %1472 = vmatpush1.msra.mxu0 0.0
    %1473 = vmatprep.subr.mxu0 0.0
    %1474 = vmatpush1.msra.mxu0 0.0
    %1475 = vmatprep.subr.mxu0 0.0
    %1476 = vmatpush1.msra.mxu0 0.0
    %1477 = vmatprep.subr.mxu0 0.0
    %1478 = vmatpush1.msra.mxu0 0.0
    %1479 = vmatprep.subr.mxu0 0.0
    %1480 = vmatpush1.msra.mxu0 0.0
    %1481 = vmatprep.subr.mxu0 0.0
    %1482 = vmatpush1.msra.mxu0 0.0
    %1483 = vmatprep.subr.mxu0 0.0
    %1484 = vmatpush1.msra.mxu0 0.0
    %1485 = vmatprep.subr.mxu0 0.0
    %1486 = vmatpush1.msra.mxu0 0.0
    %1487 = vmatprep.subr.mxu0 0.0
    %1488 = vmatpush1.msra.mxu0 0.0
    %1489 = vmatprep.subr.mxu0 0.0
    %1490 = vmatpush1.msra.mxu0 0.0
    %1491 = vmatprep.subr.mxu0 0.0
    %1492 = vmatpush1.msra.mxu0 0.0
    %1493 = vmatprep.subr.mxu0 0.0
    %1494 = vmatpush1.msra.mxu0 %v419
    %1495 = vmatprep.subr.mxu0 0.0
    %1496 = vmatpush1.msra.mxu0 %v418
    %1497 = vmatprep.subr.mxu0 0.0
    %1498 = vmatpush1.msra.mxu0 %v417
    %1499 = vmatprep.subr.mxu0 0.0
    %1500 = vmatpush1.msra.mxu0 %v416
    %1501 = vmatprep.subr.mxu0 0.0
    %1502 = vmatpush2.msra.mxu0 0.0
    %1503 = vmatprep.subr.mxu0 0.0
    %1504 = vmatpush2.msra.mxu0 0.0
    %1505 = vmatprep.subr.mxu0 0.0
    %1506 = vmatpush2.msra.mxu0 0.0
    %1507 = vmatprep.subr.mxu0 0.0
    %1508 = vmatpush2.msra.mxu0 0.0
    %1509 = vmatprep.subr.mxu0 0.0
    %1510 = vmatpush2.msra.mxu0 0.0
    %1511 = vmatprep.subr.mxu0 0.0
    %1512 = vmatpush2.msra.mxu0 0.0
    %1513 = vmatprep.subr.mxu0 0.0
    %1514 = vmatpush2.msra.mxu0 0.0
    %1515 = vmatprep.subr.mxu0 0.0
    %1516 = vmatpush2.msra.mxu0 0.0
    %1517 = vmatprep.subr.mxu0 0.0
    %1518 = vmatpush2.msra.mxu0 0.0
    %1519 = vmatprep.subr.mxu0 0.0
    %1520 = vmatpush2.msra.mxu0 0.0
    %1521 = vmatprep.subr.mxu0 0.0
    %1522 = vmatpush2.msra.mxu0 0.0
    %1523 = vmatprep.subr.mxu0 0.0
    %1524 = vmatpush2.msra.mxu0 0.0
    %1525 = vmatprep.subr.mxu0 0.0
    %1526 = vmatpush2.msra.mxu0 0.0
    %1527 = vmatprep.subr.mxu0 0.0
    %1528 = vmatpush2.msra.mxu0 0.0
    %1529 = vmatprep.subr.mxu0 0.0
    %1530 = vmatpush2.msra.mxu0 0.0
    %1531 = vmatprep.subr.mxu0 0.0
    %1532 = vmatpush2.msra.mxu0 0.0
    %1533 = vmatprep.mubr.f32.mxu0 0.0
    %1534 = vmatmul.mubr.f32.gmra.mxu0 %v1467
    %v1535 = vpop.f32.mrf.mxu0
    %v1536 = vadd.f32 0.0, %v1535
    %v1537 = vpop.f32.mrf.mxu0
    %1538 = vdwg.mxu0
    %v1539 = vadd.f32 %v1349, %v1536
    %v1540 = vxor.u32 %v1539, 2147483648
    %v1541 = vmul.f32 %v1540, 1.442695
    %v1542 = vpow.pop %v1541
    %v1543 = vadd.f32 %v1542, 1.0
    %v1544 = vrcp.pop %v1543
    %v1545 = vmul.f32 1.0, %v1544
    %v1546 = vadd.f32 %v1536, %v637
    %1548 = vrot.lane.b32.xlu0 %v1546, 64
    %v1549 = vpop.permute.xlu0 %1548
    %v1551 = vmul.f32 %v1545, %v1549
    %1553 = vrot.lane.b32.xlu0 %v1551, 64
    %v1554 = vpop.permute.xlu0 %1553
    %v1556 = vadd.f32 %v1349, %v1554
    %v1557 = vtanh.pop %v1556
    %v1558 = vsub.f32 1.0, %v1545
    %1560 = vrot.lane.b32.xlu0 %v1557, 96
    %v1561 = vpop.permute.xlu0 %1560
    %v1563 = vmul.f32 %v1558, %v1561
    %v1564 = vmul.f32 %v1545, %v1345
    %v1565 = vadd.f32 %v1563, %v1564
    %v1566 = vsel %vm1463, 1, 0
    %1567 = vset.pattern.permute.xlu0 0
    %1568 = vperm.xlu0 %1567, %v1566
    %v1569 = vpop.permute.xlu0 %1568
    %vm1570 = vcmp.eq.s32.totalorder %v1569, 1
    %v1571 = vsel %vm1570, %v1565, %v1345
    %s1572 = scalar_lea.vmem [#allocation2], 40
    %v1573 = vld [vmem:[%s1572] sm:$0xff]
    %s1574 = scalar_lea.vmem [#allocation3], 16
    %v1575 = vld [vmem:[%s1574] sm:$0xff]
    %s1576 = sadd.s32 %s81, 5
    %v1577 = vstv %s1576
    %vm1578 = vcmp.lt.s32.totalorder %v1577, %v432
    %1580 = vrot.lane.b32.xlu0 %v1460, 96
    %v1581 = vpop.permute.xlu0 %1580
    %v1582 = vsel %vm441, %v1581, 0
    %1584 = vmatprep.subr.mxu0 0.0
    %1585 = vmatpush1.msra.mxu0 0.0
    %1586 = vmatprep.subr.mxu0 0.0
    %1587 = vmatpush1.msra.mxu0 0.0
    %1588 = vmatprep.subr.mxu0 0.0
    %1589 = vmatpush1.msra.mxu0 0.0
    %1590 = vmatprep.subr.mxu0 0.0
    %1591 = vmatpush1.msra.mxu0 0.0
    %1592 = vmatprep.subr.mxu0 0.0
    %1593 = vmatpush1.msra.mxu0 0.0
    %1594 = vmatprep.subr.mxu0 0.0
    %1595 = vmatpush1.msra.mxu0 0.0
    %1596 = vmatprep.subr.mxu0 0.0
    %1597 = vmatpush1.msra.mxu0 0.0
    %1598 = vmatprep.subr.mxu0 0.0
    %1599 = vmatpush1.msra.mxu0 0.0
    %1600 = vmatprep.subr.mxu0 0.0
    %1601 = vmatpush1.msra.mxu0 0.0
    %1602 = vmatprep.subr.mxu0 0.0
    %1603 = vmatpush1.msra.mxu0 0.0
    %1604 = vmatprep.subr.mxu0 0.0
    %1605 = vmatpush1.msra.mxu0 0.0
    %1606 = vmatprep.subr.mxu0 0.0
    %1607 = vmatpush1.msra.mxu0 0.0
    %1608 = vmatprep.subr.mxu0 0.0
    %1609 = vmatpush1.msra.mxu0 %v415
    %1610 = vmatprep.subr.mxu0 0.0
    %1611 = vmatpush1.msra.mxu0 %v414
    %1612 = vmatprep.subr.mxu0 0.0
    %1613 = vmatpush1.msra.mxu0 %v413
    %1614 = vmatprep.subr.mxu0 0.0
    %1615 = vmatpush1.msra.mxu0 %v412
    %1616 = vmatprep.subr.mxu0 0.0
    %1617 = vmatpush2.msra.mxu0 0.0
    %1618 = vmatprep.subr.mxu0 0.0
    %1619 = vmatpush2.msra.mxu0 0.0
    %1620 = vmatprep.subr.mxu0 0.0
    %1621 = vmatpush2.msra.mxu0 0.0
    %1622 = vmatprep.subr.mxu0 0.0
    %1623 = vmatpush2.msra.mxu0 0.0
    %1624 = vmatprep.subr.mxu0 0.0
    %1625 = vmatpush2.msra.mxu0 0.0
    %1626 = vmatprep.subr.mxu0 0.0
    %1627 = vmatpush2.msra.mxu0 0.0
    %1628 = vmatprep.subr.mxu0 0.0
    %1629 = vmatpush2.msra.mxu0 0.0
    %1630 = vmatprep.subr.mxu0 0.0
    %1631 = vmatpush2.msra.mxu0 0.0
    %1632 = vmatprep.subr.mxu0 0.0
    %1633 = vmatpush2.msra.mxu0 0.0
    %1634 = vmatprep.subr.mxu0 0.0
    %1635 = vmatpush2.msra.mxu0 0.0
    %1636 = vmatprep.subr.mxu0 0.0
    %1637 = vmatpush2.msra.mxu0 0.0
    %1638 = vmatprep.subr.mxu0 0.0
    %1639 = vmatpush2.msra.mxu0 0.0
    %1640 = vmatprep.subr.mxu0 0.0
    %1641 = vmatpush2.msra.mxu0 0.0
    %1642 = vmatprep.subr.mxu0 0.0
    %1643 = vmatpush2.msra.mxu0 0.0
    %1644 = vmatprep.subr.mxu0 0.0
    %1645 = vmatpush2.msra.mxu0 0.0
    %1646 = vmatprep.subr.mxu0 0.0
    %1647 = vmatpush2.msra.mxu0 0.0
    %1648 = vmatprep.mubr.f32.mxu0 0.0
    %1649 = vmatmul.mubr.f32.gmra.mxu0 %v1582
    %v1650 = vpop.f32.mrf.mxu0
    %v1651 = vadd.f32 0.0, %v1650
    %v1652 = vpop.f32.mrf.mxu0
    %1653 = vdwg.mxu0
    %v1654 = vadd.f32 %v1573, %v1651
    %v1655 = vxor.u32 %v1654, 2147483648
    %v1656 = vmul.f32 %v1655, 1.442695
    %v1657 = vpow.pop %v1656
    %v1658 = vadd.f32 %v1657, 1.0
    %v1659 = vrcp.pop %v1658
    %v1660 = vmul.f32 1.0, %v1659
    %v1661 = vadd.f32 %v1651, %v523
    %1663 = vrot.lane.b32.xlu0 %v1661, 64
    %v1664 = vpop.permute.xlu0 %1663
    %v1666 = vmul.f32 %v1660, %v1664
    %1668 = vrot.lane.b32.xlu0 %v1666, 64
    %v1669 = vpop.permute.xlu0 %1668
    %v1671 = vadd.f32 %v1573, %v1669
    %v1672 = vtanh.pop %v1671
    %v1673 = vsub.f32 1.0, %v1660
    %1675 = vrot.lane.b32.xlu0 %v1672, 96
    %v1676 = vpop.permute.xlu0 %1675
    %v1678 = vmul.f32 %v1673, %v1676
    %v1679 = vmul.f32 %v1660, %v1460
    %v1680 = vadd.f32 %v1678, %v1679
    %v1681 = vsel %vm1578, 1, 0
    %1682 = vset.pattern.permute.xlu0 0
    %1683 = vperm.xlu0 %1682, %v1681
    %v1684 = vpop.permute.xlu0 %1683
    %vm1685 = vcmp.eq.s32.totalorder %v1684, 1
    %v1686 = vsel %vm1685, %v1680, %v1460
    %s1687 = sadd.s32 %s84, 2
    %v1688 = vstv %s1687
    %vm1689 = vcmp.lt.s32.totalorder %v1688, %v432
    %1691 = vrot.lane.b32.xlu0 %v1571, 96
    %v1692 = vpop.permute.xlu0 %1691
    %v1693 = vsel %vm441, %v1692, 0
    %1695 = vmatprep.subr.mxu0 0.0
    %1696 = vmatpush1.msra.mxu0 0.0
    %1697 = vmatprep.subr.mxu0 0.0
    %1698 = vmatpush1.msra.mxu0 0.0
    %1699 = vmatprep.subr.mxu0 0.0
    %1700 = vmatpush1.msra.mxu0 0.0
    %1701 = vmatprep.subr.mxu0 0.0
    %1702 = vmatpush1.msra.mxu0 0.0
    %1703 = vmatprep.subr.mxu0 0.0
    %1704 = vmatpush1.msra.mxu0 0.0
    %1705 = vmatprep.subr.mxu0 0.0
    %1706 = vmatpush1.msra.mxu0 0.0
    %1707 = vmatprep.subr.mxu0 0.0
    %1708 = vmatpush1.msra.mxu0 0.0
    %1709 = vmatprep.subr.mxu0 0.0
    %1710 = vmatpush1.msra.mxu0 0.0
    %1711 = vmatprep.subr.mxu0 0.0
    %1712 = vmatpush1.msra.mxu0 0.0
    %1713 = vmatprep.subr.mxu0 0.0
    %1714 = vmatpush1.msra.mxu0 0.0
    %1715 = vmatprep.subr.mxu0 0.0
    %1716 = vmatpush1.msra.mxu0 0.0
    %1717 = vmatprep.subr.mxu0 0.0
    %1718 = vmatpush1.msra.mxu0 0.0
    %1719 = vmatprep.subr.mxu0 0.0
    %1720 = vmatpush1.msra.mxu0 %v419
    %1721 = vmatprep.subr.mxu0 0.0
    %1722 = vmatpush1.msra.mxu0 %v418
    %1723 = vmatprep.subr.mxu0 0.0
    %1724 = vmatpush1.msra.mxu0 %v417
    %1725 = vmatprep.subr.mxu0 0.0
    %1726 = vmatpush1.msra.mxu0 %v416
    %1727 = vmatprep.subr.mxu0 0.0
    %1728 = vmatpush2.msra.mxu0 0.0
    %1729 = vmatprep.subr.mxu0 0.0
    %1730 = vmatpush2.msra.mxu0 0.0
    %1731 = vmatprep.subr.mxu0 0.0
    %1732 = vmatpush2.msra.mxu0 0.0
    %1733 = vmatprep.subr.mxu0 0.0
    %1734 = vmatpush2.msra.mxu0 0.0
    %1735 = vmatprep.subr.mxu0 0.0
    %1736 = vmatpush2.msra.mxu0 0.0
    %1737 = vmatprep.subr.mxu0 0.0
    %1738 = vmatpush2.msra.mxu0 0.0
    %1739 = vmatprep.subr.mxu0 0.0
    %1740 = vmatpush2.msra.mxu0 0.0
    %1741 = vmatprep.subr.mxu0 0.0
    %1742 = vmatpush2.msra.mxu0 0.0
    %1743 = vmatprep.subr.mxu0 0.0
    %1744 = vmatpush2.msra.mxu0 0.0
    %1745 = vmatprep.subr.mxu0 0.0
    %1746 = vmatpush2.msra.mxu0 0.0
    %1747 = vmatprep.subr.mxu0 0.0
    %1748 = vmatpush2.msra.mxu0 0.0
    %1749 = vmatprep.subr.mxu0 0.0
    %1750 = vmatpush2.msra.mxu0 0.0
    %1751 = vmatprep.subr.mxu0 0.0
    %1752 = vmatpush2.msra.mxu0 0.0
    %1753 = vmatprep.subr.mxu0 0.0
    %1754 = vmatpush2.msra.mxu0 0.0
    %1755 = vmatprep.subr.mxu0 0.0
    %1756 = vmatpush2.msra.mxu0 0.0
    %1757 = vmatprep.subr.mxu0 0.0
    %1758 = vmatpush2.msra.mxu0 0.0
    %1759 = vmatprep.mubr.f32.mxu0 0.0
    %1760 = vmatmul.mubr.f32.gmra.mxu0 %v1693
    %v1761 = vpop.f32.mrf.mxu0
    %v1762 = vadd.f32 0.0, %v1761
    %v1763 = vpop.f32.mrf.mxu0
    %1764 = vdwg.mxu0
    %v1765 = vadd.f32 %v1575, %v1762
    %v1766 = vxor.u32 %v1765, 2147483648
    %v1767 = vmul.f32 %v1766, 1.442695
    %v1768 = vpow.pop %v1767
    %v1769 = vadd.f32 %v1768, 1.0
    %v1770 = vrcp.pop %v1769
    %v1771 = vmul.f32 1.0, %v1770
    %v1772 = vadd.f32 %v1762, %v637
    %1774 = vrot.lane.b32.xlu0 %v1772, 64
    %v1775 = vpop.permute.xlu0 %1774
    %v1777 = vmul.f32 %v1771, %v1775
    %1779 = vrot.lane.b32.xlu0 %v1777, 64
    %v1780 = vpop.permute.xlu0 %1779
    %v1782 = vadd.f32 %v1575, %v1780
    %v1783 = vtanh.pop %v1782
    %v1784 = vsub.f32 1.0, %v1771
    %1786 = vrot.lane.b32.xlu0 %v1783, 96
    %v1787 = vpop.permute.xlu0 %1786
    %v1789 = vmul.f32 %v1784, %v1787
    %v1790 = vmul.f32 %v1771, %v1571
    %v1791 = vadd.f32 %v1789, %v1790
    %v1792 = vsel %vm1689, 1, 0
    %1793 = vset.pattern.permute.xlu0 0
    %1794 = vperm.xlu0 %1793, %v1792
    %v1795 = vpop.permute.xlu0 %1794
    %vm1796 = vcmp.eq.s32.totalorder %v1795, 1
    %v1797 = vsel %vm1796, %v1791, %v1571
    %s1798 = scalar_lea.vmem [#allocation2], 48
    %v1799 = vld [vmem:[%s1798] sm:$0xff]
    %s1800 = scalar_lea.vmem [#allocation3], 8
    %v1801 = vld [vmem:[%s1800] sm:$0xff]
    %s1802 = sadd.s32 %s81, 6
    %v1803 = vstv %s1802
    %vm1804 = vcmp.lt.s32.totalorder %v1803, %v432
    %1806 = vrot.lane.b32.xlu0 %v1686, 96
    %v1807 = vpop.permute.xlu0 %1806
    %v1808 = vsel %vm441, %v1807, 0
    %1810 = vmatprep.subr.mxu0 0.0
    %1811 = vmatpush1.msra.mxu0 0.0
    %1812 = vmatprep.subr.mxu0 0.0
    %1813 = vmatpush1.msra.mxu0 0.0
    %1814 = vmatprep.subr.mxu0 0.0
    %1815 = vmatpush1.msra.mxu0 0.0
    %1816 = vmatprep.subr.mxu0 0.0
    %1817 = vmatpush1.msra.mxu0 0.0
    %1818 = vmatprep.subr.mxu0 0.0
    %1819 = vmatpush1.msra.mxu0 0.0
    %1820 = vmatprep.subr.mxu0 0.0
    %1821 = vmatpush1.msra.mxu0 0.0
    %1822 = vmatprep.subr.mxu0 0.0
    %1823 = vmatpush1.msra.mxu0 0.0
    %1824 = vmatprep.subr.mxu0 0.0
    %1825 = vmatpush1.msra.mxu0 0.0
    %1826 = vmatprep.subr.mxu0 0.0
    %1827 = vmatpush1.msra.mxu0 0.0
    %1828 = vmatprep.subr.mxu0 0.0
    %1829 = vmatpush1.msra.mxu0 0.0
    %1830 = vmatprep.subr.mxu0 0.0
    %1831 = vmatpush1.msra.mxu0 0.0
    %1832 = vmatprep.subr.mxu0 0.0
    %1833 = vmatpush1.msra.mxu0 0.0
    %1834 = vmatprep.subr.mxu0 0.0
    %1835 = vmatpush1.msra.mxu0 %v415
    %1836 = vmatprep.subr.mxu0 0.0
    %1837 = vmatpush1.msra.mxu0 %v414
    %1838 = vmatprep.subr.mxu0 0.0
    %1839 = vmatpush1.msra.mxu0 %v413
    %1840 = vmatprep.subr.mxu0 0.0
    %1841 = vmatpush1.msra.mxu0 %v412
    %1842 = vmatprep.subr.mxu0 0.0
    %1843 = vmatpush2.msra.mxu0 0.0
    %1844 = vmatprep.subr.mxu0 0.0
    %1845 = vmatpush2.msra.mxu0 0.0
    %1846 = vmatprep.subr.mxu0 0.0
    %1847 = vmatpush2.msra.mxu0 0.0
    %1848 = vmatprep.subr.mxu0 0.0
    %1849 = vmatpush2.msra.mxu0 0.0
    %1850 = vmatprep.subr.mxu0 0.0
    %1851 = vmatpush2.msra.mxu0 0.0
    %1852 = vmatprep.subr.mxu0 0.0
    %1853 = vmatpush2.msra.mxu0 0.0
    %1854 = vmatprep.subr.mxu0 0.0
    %1855 = vmatpush2.msra.mxu0 0.0
    %1856 = vmatprep.subr.mxu0 0.0
    %1857 = vmatpush2.msra.mxu0 0.0
    %1858 = vmatprep.subr.mxu0 0.0
    %1859 = vmatpush2.msra.mxu0 0.0
    %1860 = vmatprep.subr.mxu0 0.0
    %1861 = vmatpush2.msra.mxu0 0.0
    %1862 = vmatprep.subr.mxu0 0.0
    %1863 = vmatpush2.msra.mxu0 0.0
    %1864 = vmatprep.subr.mxu0 0.0
    %1865 = vmatpush2.msra.mxu0 0.0
    %1866 = vmatprep.subr.mxu0 0.0
    %1867 = vmatpush2.msra.mxu0 0.0
    %1868 = vmatprep.subr.mxu0 0.0
    %1869 = vmatpush2.msra.mxu0 0.0
    %1870 = vmatprep.subr.mxu0 0.0
    %1871 = vmatpush2.msra.mxu0 0.0
    %1872 = vmatprep.subr.mxu0 0.0
    %1873 = vmatpush2.msra.mxu0 0.0
    %1874 = vmatprep.mubr.f32.mxu0 0.0
    %1875 = vmatmul.mubr.f32.gmra.mxu0 %v1808
    %v1876 = vpop.f32.mrf.mxu0
    %v1877 = vadd.f32 0.0, %v1876
    %v1878 = vpop.f32.mrf.mxu0
    %1879 = vdwg.mxu0
    %v1880 = vadd.f32 %v1799, %v1877
    %v1881 = vxor.u32 %v1880, 2147483648
    %v1882 = vmul.f32 %v1881, 1.442695
    %v1883 = vpow.pop %v1882
    %v1884 = vadd.f32 %v1883, 1.0
    %v1885 = vrcp.pop %v1884
    %v1886 = vmul.f32 1.0, %v1885
    %v1887 = vadd.f32 %v1877, %v523
    %1889 = vrot.lane.b32.xlu0 %v1887, 64
    %v1890 = vpop.permute.xlu0 %1889
    %v1892 = vmul.f32 %v1886, %v1890
    %1894 = vrot.lane.b32.xlu0 %v1892, 64
    %v1895 = vpop.permute.xlu0 %1894
    %v1897 = vadd.f32 %v1799, %v1895
    %v1898 = vtanh.pop %v1897
    %v1899 = vsub.f32 1.0, %v1886
    %1901 = vrot.lane.b32.xlu0 %v1898, 96
    %v1902 = vpop.permute.xlu0 %1901
    %v1904 = vmul.f32 %v1899, %v1902
    %v1905 = vmul.f32 %v1886, %v1686
    %v1906 = vadd.f32 %v1904, %v1905
    %v1907 = vsel %vm1804, 1, 0
    %1908 = vset.pattern.permute.xlu0 0
    %1909 = vperm.xlu0 %1908, %v1907
    %v1910 = vpop.permute.xlu0 %1909
    %vm1911 = vcmp.eq.s32.totalorder %v1910, 1
    %v1912 = vsel %vm1911, %v1906, %v1686
    %s1913 = sadd.s32 %s84, 1
    %v1914 = vstv %s1913
    %vm1915 = vcmp.lt.s32.totalorder %v1914, %v432
    %1917 = vrot.lane.b32.xlu0 %v1797, 96
    %v1918 = vpop.permute.xlu0 %1917
    %v1919 = vsel %vm441, %v1918, 0
    %1921 = vmatprep.subr.mxu0 0.0
    %1922 = vmatpush1.msra.mxu0 0.0
    %1923 = vmatprep.subr.mxu0 0.0
    %1924 = vmatpush1.msra.mxu0 0.0
    %1925 = vmatprep.subr.mxu0 0.0
    %1926 = vmatpush1.msra.mxu0 0.0
    %1927 = vmatprep.subr.mxu0 0.0
    %1928 = vmatpush1.msra.mxu0 0.0
    %1929 = vmatprep.subr.mxu0 0.0
    %1930 = vmatpush1.msra.mxu0 0.0
    %1931 = vmatprep.subr.mxu0 0.0
    %1932 = vmatpush1.msra.mxu0 0.0
    %1933 = vmatprep.subr.mxu0 0.0
    %1934 = vmatpush1.msra.mxu0 0.0
    %1935 = vmatprep.subr.mxu0 0.0
    %1936 = vmatpush1.msra.mxu0 0.0
    %1937 = vmatprep.subr.mxu0 0.0
    %1938 = vmatpush1.msra.mxu0 0.0
    %1939 = vmatprep.subr.mxu0 0.0
    %1940 = vmatpush1.msra.mxu0 0.0
    %1941 = vmatprep.subr.mxu0 0.0
    %1942 = vmatpush1.msra.mxu0 0.0
    %1943 = vmatprep.subr.mxu0 0.0
    %1944 = vmatpush1.msra.mxu0 0.0
    %1945 = vmatprep.subr.mxu0 0.0
    %1946 = vmatpush1.msra.mxu0 %v419
    %1947 = vmatprep.subr.mxu0 0.0
    %1948 = vmatpush1.msra.mxu0 %v418
    %1949 = vmatprep.subr.mxu0 0.0
    %1950 = vmatpush1.msra.mxu0 %v417
    %1951 = vmatprep.subr.mxu0 0.0
    %1952 = vmatpush1.msra.mxu0 %v416
    %1953 = vmatprep.subr.mxu0 0.0
    %1954 = vmatpush2.msra.mxu0 0.0
    %1955 = vmatprep.subr.mxu0 0.0
    %1956 = vmatpush2.msra.mxu0 0.0
    %1957 = vmatprep.subr.mxu0 0.0
    %1958 = vmatpush2.msra.mxu0 0.0
    %1959 = vmatprep.subr.mxu0 0.0
    %1960 = vmatpush2.msra.mxu0 0.0
    %1961 = vmatprep.subr.mxu0 0.0
    %1962 = vmatpush2.msra.mxu0 0.0
    %1963 = vmatprep.subr.mxu0 0.0
    %1964 = vmatpush2.msra.mxu0 0.0
    %1965 = vmatprep.subr.mxu0 0.0
    %1966 = vmatpush2.msra.mxu0 0.0
    %1967 = vmatprep.subr.mxu0 0.0
    %1968 = vmatpush2.msra.mxu0 0.0
    %1969 = vmatprep.subr.mxu0 0.0
    %1970 = vmatpush2.msra.mxu0 0.0
    %1971 = vmatprep.subr.mxu0 0.0
    %1972 = vmatpush2.msra.mxu0 0.0
    %1973 = vmatprep.subr.mxu0 0.0
    %1974 = vmatpush2.msra.mxu0 0.0
    %1975 = vmatprep.subr.mxu0 0.0
    %1976 = vmatpush2.msra.mxu0 0.0
    %1977 = vmatprep.subr.mxu0 0.0
    %1978 = vmatpush2.msra.mxu0 0.0
    %1979 = vmatprep.subr.mxu0 0.0
    %1980 = vmatpush2.msra.mxu0 0.0
    %1981 = vmatprep.subr.mxu0 0.0
    %1982 = vmatpush2.msra.mxu0 0.0
    %1983 = vmatprep.subr.mxu0 0.0
    %1984 = vmatpush2.msra.mxu0 0.0
    %1985 = vmatprep.mubr.f32.mxu0 0.0
    %1986 = vmatmul.mubr.f32.gmra.mxu0 %v1919
    %v1987 = vpop.f32.mrf.mxu0
    %v1988 = vadd.f32 0.0, %v1987
    %v1989 = vpop.f32.mrf.mxu0
    %1990 = vdwg.mxu0
    %v1991 = vadd.f32 %v1801, %v1988
    %v1992 = vxor.u32 %v1991, 2147483648
    %v1993 = vmul.f32 %v1992, 1.442695
    %v1994 = vpow.pop %v1993
    %v1995 = vadd.f32 %v1994, 1.0
    %v1996 = vrcp.pop %v1995
    %v1997 = vmul.f32 1.0, %v1996
    %v1998 = vadd.f32 %v1988, %v637
    %2000 = vrot.lane.b32.xlu0 %v1998, 64
    %v2001 = vpop.permute.xlu0 %2000
    %v2003 = vmul.f32 %v1997, %v2001
    %2005 = vrot.lane.b32.xlu0 %v2003, 64
    %v2006 = vpop.permute.xlu0 %2005
    %v2008 = vadd.f32 %v1801, %v2006
    %v2009 = vtanh.pop %v2008
    %v2010 = vsub.f32 1.0, %v1997
    %2012 = vrot.lane.b32.xlu0 %v2009, 96
    %v2013 = vpop.permute.xlu0 %2012
    %v2015 = vmul.f32 %v2010, %v2013
    %v2016 = vmul.f32 %v1997, %v1797
    %v2017 = vadd.f32 %v2015, %v2016
    %v2018 = vsel %vm1915, 1, 0
    %2019 = vset.pattern.permute.xlu0 0
    %2020 = vperm.xlu0 %2019, %v2018
    %v2021 = vpop.permute.xlu0 %2020
    %vm2022 = vcmp.eq.s32.totalorder %v2021, 1
    %v2023 = vsel %vm2022, %v2017, %v1797
    %s2024 = scalar_lea.vmem [#allocation2], 56
    %v2025 = vld [vmem:[%s2024] sm:$0xff]
    %v2026 = vld [vmem:[#allocation3] sm:$0xff]
    %s2027 = sadd.s32 %s81, 7
    %v2028 = vstv %s2027
    %vm2029 = vcmp.lt.s32.totalorder %v2028, %v432
    %2031 = vrot.lane.b32.xlu0 %v1912, 96
    %v2032 = vpop.permute.xlu0 %2031
    %v2033 = vsel %vm441, %v2032, 0
    %2035 = vmatprep.subr.mxu0 0.0
    %2036 = vmatpush1.msra.mxu0 0.0
    %2037 = vmatprep.subr.mxu0 0.0
    %2038 = vmatpush1.msra.mxu0 0.0
    %2039 = vmatprep.subr.mxu0 0.0
    %2040 = vmatpush1.msra.mxu0 0.0
    %2041 = vmatprep.subr.mxu0 0.0
    %2042 = vmatpush1.msra.mxu0 0.0
    %2043 = vmatprep.subr.mxu0 0.0
    %2044 = vmatpush1.msra.mxu0 0.0
    %2045 = vmatprep.subr.mxu0 0.0
    %2046 = vmatpush1.msra.mxu0 0.0
    %2047 = vmatprep.subr.mxu0 0.0
    %2048 = vmatpush1.msra.mxu0 0.0
    %2049 = vmatprep.subr.mxu0 0.0
    %2050 = vmatpush1.msra.mxu0 0.0
    %2051 = vmatprep.subr.mxu0 0.0
    %2052 = vmatpush1.msra.mxu0 0.0
    %2053 = vmatprep.subr.mxu0 0.0
    %2054 = vmatpush1.msra.mxu0 0.0
    %2055 = vmatprep.subr.mxu0 0.0
    %2056 = vmatpush1.msra.mxu0 0.0
    %2057 = vmatprep.subr.mxu0 0.0
    %2058 = vmatpush1.msra.mxu0 0.0
    %2059 = vmatprep.subr.mxu0 0.0
    %2060 = vmatpush1.msra.mxu0 %v415
    %2061 = vmatprep.subr.mxu0 0.0
    %2062 = vmatpush1.msra.mxu0 %v414
    %2063 = vmatprep.subr.mxu0 0.0
    %2064 = vmatpush1.msra.mxu0 %v413
    %2065 = vmatprep.subr.mxu0 0.0
    %2066 = vmatpush1.msra.mxu0 %v412
    %2067 = vmatprep.subr.mxu0 0.0
    %2068 = vmatpush2.msra.mxu0 0.0
    %2069 = vmatprep.subr.mxu0 0.0
    %2070 = vmatpush2.msra.mxu0 0.0
    %2071 = vmatprep.subr.mxu0 0.0
    %2072 = vmatpush2.msra.mxu0 0.0
    %2073 = vmatprep.subr.mxu0 0.0
    %2074 = vmatpush2.msra.mxu0 0.0
    %2075 = vmatprep.subr.mxu0 0.0
    %2076 = vmatpush2.msra.mxu0 0.0
    %2077 = vmatprep.subr.mxu0 0.0
    %2078 = vmatpush2.msra.mxu0 0.0
    %2079 = vmatprep.subr.mxu0 0.0
    %2080 = vmatpush2.msra.mxu0 0.0
    %2081 = vmatprep.subr.mxu0 0.0
    %2082 = vmatpush2.msra.mxu0 0.0
    %2083 = vmatprep.subr.mxu0 0.0
    %2084 = vmatpush2.msra.mxu0 0.0
    %2085 = vmatprep.subr.mxu0 0.0
    %2086 = vmatpush2.msra.mxu0 0.0
    %2087 = vmatprep.subr.mxu0 0.0
    %2088 = vmatpush2.msra.mxu0 0.0
    %2089 = vmatprep.subr.mxu0 0.0
    %2090 = vmatpush2.msra.mxu0 0.0
    %2091 = vmatprep.subr.mxu0 0.0
    %2092 = vmatpush2.msra.mxu0 0.0
    %2093 = vmatprep.subr.mxu0 0.0
    %2094 = vmatpush2.msra.mxu0 0.0
    %2095 = vmatprep.subr.mxu0 0.0
    %2096 = vmatpush2.msra.mxu0 0.0
    %2097 = vmatprep.subr.mxu0 0.0
    %2098 = vmatpush2.msra.mxu0 0.0
    %2099 = vmatprep.mubr.f32.mxu0 0.0
    %2100 = vmatmul.mubr.f32.gmra.mxu0 %v2033
    %v2101 = vpop.f32.mrf.mxu0
    %v2102 = vadd.f32 0.0, %v2101
    %v2103 = vpop.f32.mrf.mxu0
    %2104 = vdwg.mxu0
    %v2105 = vadd.f32 %v2025, %v2102
    %v2106 = vxor.u32 %v2105, 2147483648
    %v2107 = vmul.f32 %v2106, 1.442695
    %v2108 = vpow.pop %v2107
    %v2109 = vadd.f32 %v2108, 1.0
    %v2110 = vrcp.pop %v2109
    %v2111 = vmul.f32 1.0, %v2110
    %v2112 = vadd.f32 %v2102, %v523
    %2114 = vrot.lane.b32.xlu0 %v2112, 64
    %v2115 = vpop.permute.xlu0 %2114
    %v2117 = vmul.f32 %v2111, %v2115
    %2119 = vrot.lane.b32.xlu0 %v2117, 64
    %v2120 = vpop.permute.xlu0 %2119
    %v2122 = vadd.f32 %v2025, %v2120
    %v2123 = vtanh.pop %v2122
    %v2124 = vsub.f32 1.0, %v2111
    %2126 = vrot.lane.b32.xlu0 %v2123, 96
    %v2127 = vpop.permute.xlu0 %2126
    %v2129 = vmul.f32 %v2124, %v2127
    %v2130 = vmul.f32 %v2111, %v1912
    %v2131 = vadd.f32 %v2129, %v2130
    %v2132 = vsel %vm2029, 1, 0
    %2133 = vset.pattern.permute.xlu0 0
    %2134 = vperm.xlu0 %2133, %v2132
    %v2135 = vpop.permute.xlu0 %2134
    %vm2136 = vcmp.eq.s32.totalorder %v2135, 1
    %v2137 = vsel %vm2136, %v2131, %v1912
    %v2138 = vstv %s84
    %vm2139 = vcmp.lt.s32.totalorder %v2138, %v432
    %2141 = vrot.lane.b32.xlu0 %v2023, 96
    %v2142 = vpop.permute.xlu0 %2141
    %v2143 = vsel %vm441, %v2142, 0
    %2145 = vmatprep.subr.mxu0 0.0
    %2146 = vmatpush1.msra.mxu0 0.0
    %2147 = vmatprep.subr.mxu0 0.0
    %2148 = vmatpush1.msra.mxu0 0.0
    %2149 = vmatprep.subr.mxu0 0.0
    %2150 = vmatpush1.msra.mxu0 0.0
    %2151 = vmatprep.subr.mxu0 0.0
    %2152 = vmatpush1.msra.mxu0 0.0
    %2153 = vmatprep.subr.mxu0 0.0
    %2154 = vmatpush1.msra.mxu0 0.0
    %2155 = vmatprep.subr.mxu0 0.0
    %2156 = vmatpush1.msra.mxu0 0.0
    %2157 = vmatprep.subr.mxu0 0.0
    %2158 = vmatpush1.msra.mxu0 0.0
    %2159 = vmatprep.subr.mxu0 0.0
    %2160 = vmatpush1.msra.mxu0 0.0
    %2161 = vmatprep.subr.mxu0 0.0
    %2162 = vmatpush1.msra.mxu0 0.0
    %2163 = vmatprep.subr.mxu0 0.0
    %2164 = vmatpush1.msra.mxu0 0.0
    %2165 = vmatprep.subr.mxu0 0.0
    %2166 = vmatpush1.msra.mxu0 0.0
    %2167 = vmatprep.subr.mxu0 0.0
    %2168 = vmatpush1.msra.mxu0 0.0
    %2169 = vmatprep.subr.mxu0 0.0
    %2170 = vmatpush1.msra.mxu0 %v419
    %2171 = vmatprep.subr.mxu0 0.0
    %2172 = vmatpush1.msra.mxu0 %v418
    %2173 = vmatprep.subr.mxu0 0.0
    %2174 = vmatpush1.msra.mxu0 %v417
    %2175 = vmatprep.subr.mxu0 0.0
    %2176 = vmatpush1.msra.mxu0 %v416
    %2177 = vmatprep.subr.mxu0 0.0
    %2178 = vmatpush2.msra.mxu0 0.0
    %2179 = vmatprep.subr.mxu0 0.0
    %2180 = vmatpush2.msra.mxu0 0.0
    %2181 = vmatprep.subr.mxu0 0.0
    %2182 = vmatpush2.msra.mxu0 0.0
    %2183 = vmatprep.subr.mxu0 0.0
    %2184 = vmatpush2.msra.mxu0 0.0
    %2185 = vmatprep.subr.mxu0 0.0
    %2186 = vmatpush2.msra.mxu0 0.0
    %2187 = vmatprep.subr.mxu0 0.0
    %2188 = vmatpush2.msra.mxu0 0.0
    %2189 = vmatprep.subr.mxu0 0.0
    %2190 = vmatpush2.msra.mxu0 0.0
    %2191 = vmatprep.subr.mxu0 0.0
    %2192 = vmatpush2.msra.mxu0 0.0
    %2193 = vmatprep.subr.mxu0 0.0
    %2194 = vmatpush2.msra.mxu0 0.0
    %2195 = vmatprep.subr.mxu0 0.0
    %2196 = vmatpush2.msra.mxu0 0.0
    %2197 = vmatprep.subr.mxu0 0.0
    %2198 = vmatpush2.msra.mxu0 0.0
    %2199 = vmatprep.subr.mxu0 0.0
    %2200 = vmatpush2.msra.mxu0 0.0
    %2201 = vmatprep.subr.mxu0 0.0
    %2202 = vmatpush2.msra.mxu0 0.0
    %2203 = vmatprep.subr.mxu0 0.0
    %2204 = vmatpush2.msra.mxu0 0.0
    %2205 = vmatprep.subr.mxu0 0.0
    %2206 = vmatpush2.msra.mxu0 0.0
    %2207 = vmatprep.subr.mxu0 0.0
    %2208 = vmatpush2.msra.mxu0 0.0
    %2209 = vmatprep.mubr.f32.mxu0 0.0
    %2210 = vmatmul.mubr.f32.gmra.mxu0 %v2143
    %v2211 = vpop.f32.mrf.mxu0
    %v2212 = vadd.f32 0.0, %v2211
    %v2213 = vpop.f32.mrf.mxu0
    %2214 = vdwg.mxu0
    %v2215 = vadd.f32 %v2026, %v2212
    %v2216 = vxor.u32 %v2215, 2147483648
    %v2217 = vmul.f32 %v2216, 1.442695
    %v2218 = vpow.pop %v2217
    %v2219 = vadd.f32 %v2218, 1.0
    %v2220 = vrcp.pop %v2219
    %v2221 = vmul.f32 1.0, %v2220
    %v2222 = vadd.f32 %v2212, %v637
    %2224 = vrot.lane.b32.xlu0 %v2222, 64
    %v2225 = vpop.permute.xlu0 %2224
    %v2227 = vmul.f32 %v2221, %v2225
    %2229 = vrot.lane.b32.xlu0 %v2227, 64
    %v2230 = vpop.permute.xlu0 %2229
    %v2232 = vadd.f32 %v2026, %v2230
    %v2233 = vtanh.pop %v2232
    %v2234 = vsub.f32 1.0, %v2221
    %2236 = vrot.lane.b32.xlu0 %v2233, 96
    %v2237 = vpop.permute.xlu0 %2236
    %v2239 = vmul.f32 %v2234, %v2237
    %v2240 = vmul.f32 %v2221, %v2023
    %v2241 = vadd.f32 %v2239, %v2240
    %v2242 = vsel %vm2139, 1, 0
    %2243 = vset.pattern.permute.xlu0 0
    %2244 = vperm.xlu0 %2243, %v2242
    %v2245 = vpop.permute.xlu0 %2244
    %vm2246 = vcmp.eq.s32.totalorder %v2245, 1
    %v2247 = vsel %vm2246, %v2241, %v2023
    %2249 = vrot.lane.b32.xlu0 %v2137, 96
    %v2250 = vpop.permute.xlu0 %2249
    %2252 = vst.msk [vmem:[#allocation4] sm:$0xff] %vm441, %v2250
    %2254 = vrot.lane.b32.xlu0 %v2247, 96
    %v2255 = vpop.permute.xlu0 %2254
    %2257 = vst.msk [vmem:[#allocation5] sm:$0xff] %vm441, %v2255
  $region73: #{fine_tune_head.1} parent=0 // pred_fallthru
    _
  // Predicated region
  $region74: #{fine_tune_head.1} parent=0 // pred_check
    %p2258 = pneg %p73
  $region75: #{fine_tune_head.1} parent=0 // pred_check_branch
    %2260 = sbr.rel (%p2258) target = $region77
  $region76: #{fine_tune_head.1} parent=0 // pred_region
    %v2261 = vld [vmem:[#allocation4] sm:$0xff]
    %v2262 = vld [vmem:[%s12] sm:$0xff]
    %v2263 = vld [vmem:[%s12 + $0x8] sm:$0xff]
    %v2264 = vld [vmem:[%s12 + $0x10] sm:$0xff]
    %v2265 = vld [vmem:[%s12 + $0x18] sm:$0xff]
    %v2266 = vld [vmem:[#allocation5] sm:$0xff]
    %v2267 = vld [vmem:[%s13] sm:$0xff]
    %v2268 = vld [vmem:[%s13 + $0x8] sm:$0xff]
    %v2269 = vld [vmem:[%s13 + $0x10] sm:$0xff]
    %v2270 = vld [vmem:[%s13 + $0x18] sm:$0xff]
    %vm2271 = vcmask 261120
    %v2273 = vsel %vm2271, %v2266, 0
    %2275 = vmatprep.subr.mxu0 0.0
    %2276 = vmatpush1.msra.mxu0 0.0
    %2277 = vmatprep.subr.mxu0 0.0
    %2278 = vmatpush1.msra.mxu0 0.0
    %2279 = vmatprep.subr.mxu0 0.0
    %2280 = vmatpush1.msra.mxu0 0.0
    %2281 = vmatprep.subr.mxu0 0.0
    %2282 = vmatpush1.msra.mxu0 0.0
    %2283 = vmatprep.subr.mxu0 0.0
    %2284 = vmatpush1.msra.mxu0 0.0
    %2285 = vmatprep.subr.mxu0 0.0
    %2286 = vmatpush1.msra.mxu0 0.0
    %2287 = vmatprep.subr.mxu0 0.0
    %2288 = vmatpush1.msra.mxu0 0.0
    %2289 = vmatprep.subr.mxu0 0.0
    %2290 = vmatpush1.msra.mxu0 0.0
    %2291 = vmatprep.subr.mxu0 0.0
    %2292 = vmatpush1.msra.mxu0 0.0
    %2293 = vmatprep.subr.mxu0 0.0
    %2294 = vmatpush1.msra.mxu0 0.0
    %2295 = vmatprep.subr.mxu0 0.0
    %2296 = vmatpush1.msra.mxu0 0.0
    %2297 = vmatprep.subr.mxu0 0.0
    %2298 = vmatpush1.msra.mxu0 0.0
    %2299 = vmatprep.subr.mxu0 0.0
    %2300 = vmatpush1.msra.mxu0 %v2270
    %2301 = vmatprep.subr.mxu0 0.0
    %2302 = vmatpush1.msra.mxu0 %v2269
    %2303 = vmatprep.subr.mxu0 0.0
    %2304 = vmatpush1.msra.mxu0 %v2268
    %2305 = vmatprep.subr.mxu0 0.0
    %2306 = vmatpush1.msra.mxu0 %v2267
    %2307 = vmatprep.subr.mxu0 0.0
    %2308 = vmatpush2.msra.mxu0 0.0
    %2309 = vmatprep.subr.mxu0 0.0
    %2310 = vmatpush2.msra.mxu0 0.0
    %2311 = vmatprep.subr.mxu0 0.0
    %2312 = vmatpush2.msra.mxu0 0.0
    %2313 = vmatprep.subr.mxu0 0.0
    %2314 = vmatpush2.msra.mxu0 0.0
    %2315 = vmatprep.subr.mxu0 0.0
    %2316 = vmatpush2.msra.mxu0 0.0
    %2317 = vmatprep.subr.mxu0 0.0
    %2318 = vmatpush2.msra.mxu0 0.0
    %2319 = vmatprep.subr.mxu0 0.0
    %2320 = vmatpush2.msra.mxu0 0.0
    %2321 = vmatprep.subr.mxu0 0.0
    %2322 = vmatpush2.msra.mxu0 0.0
    %2323 = vmatprep.subr.mxu0 0.0
    %2324 = vmatpush2.msra.mxu0 0.0
    %2325 = vmatprep.subr.mxu0 0.0
    %2326 = vmatpush2.msra.mxu0 0.0
    %2327 = vmatprep.subr.mxu0 0.0
    %2328 = vmatpush2.msra.mxu0 0.0
    %2329 = vmatprep.subr.mxu0 0.0
    %2330 = vmatpush2.msra.mxu0 0.0
    %2331 = vmatprep.subr.mxu0 0.0
    %2332 = vmatpush2.msra.mxu0 0.0
    %2333 = vmatprep.subr.mxu0 0.0
    %2334 = vmatpush2.msra.mxu0 0.0
    %2335 = vmatprep.subr.mxu0 0.0
    %2336 = vmatpush2.msra.mxu0 0.0
    %2337 = vmatprep.subr.mxu0 0.0
    %2338 = vmatpush2.msra.mxu0 0.0
    %2339 = vmatprep.mubr.f32.mxu0 0.0
    %2340 = vmatmul.mubr.f32.gmra.mxu0 %v2273
    %v2341 = vpop.f32.mrf.mxu0
    %v2342 = vadd.f32 0.0, %v2341
    %v2343 = vpop.f32.mrf.mxu0
    %2344 = vdwg.mxu0
    %v2346 = vsel %vm2271, %v2261, 0
    %2348 = vmatprep.subr.mxu0 0.0
    %2349 = vmatpush1.msra.mxu0 0.0
    %2350 = vmatprep.subr.mxu0 0.0
    %2351 = vmatpush1.msra.mxu0 0.0
    %2352 = vmatprep.subr.mxu0 0.0
    %2353 = vmatpush1.msra.mxu0 0.0
    %2354 = vmatprep.subr.mxu0 0.0
    %2355 = vmatpush1.msra.mxu0 0.0
    %2356 = vmatprep.subr.mxu0 0.0
    %2357 = vmatpush1.msra.mxu0 0.0
    %2358 = vmatprep.subr.mxu0 0.0
    %2359 = vmatpush1.msra.mxu0 0.0
    %2360 = vmatprep.subr.mxu0 0.0
    %2361 = vmatpush1.msra.mxu0 0.0
    %2362 = vmatprep.subr.mxu0 0.0
    %2363 = vmatpush1.msra.mxu0 0.0
    %2364 = vmatprep.subr.mxu0 0.0
    %2365 = vmatpush1.msra.mxu0 0.0
    %2366 = vmatprep.subr.mxu0 0.0
    %2367 = vmatpush1.msra.mxu0 0.0
    %2368 = vmatprep.subr.mxu0 0.0
    %2369 = vmatpush1.msra.mxu0 0.0
    %2370 = vmatprep.subr.mxu0 0.0
    %2371 = vmatpush1.msra.mxu0 0.0
    %2372 = vmatprep.subr.mxu0 0.0
    %2373 = vmatpush1.msra.mxu0 %v2265
    %2374 = vmatprep.subr.mxu0 0.0
    %2375 = vmatpush1.msra.mxu0 %v2264
    %2376 = vmatprep.subr.mxu0 0.0
    %2377 = vmatpush1.msra.mxu0 %v2263
    %2378 = vmatprep.subr.mxu0 0.0
    %2379 = vmatpush1.msra.mxu0 %v2262
    %2380 = vmatprep.subr.mxu0 0.0
    %2381 = vmatpush2.msra.mxu0 0.0
    %2382 = vmatprep.subr.mxu0 0.0
    %2383 = vmatpush2.msra.mxu0 0.0
    %2384 = vmatprep.subr.mxu0 0.0
    %2385 = vmatpush2.msra.mxu0 0.0
    %2386 = vmatprep.subr.mxu0 0.0
    %2387 = vmatpush2.msra.mxu0 0.0
    %2388 = vmatprep.subr.mxu0 0.0
    %2389 = vmatpush2.msra.mxu0 0.0
    %2390 = vmatprep.subr.mxu0 0.0
    %2391 = vmatpush2.msra.mxu0 0.0
    %2392 = vmatprep.subr.mxu0 0.0
    %2393 = vmatpush2.msra.mxu0 0.0
    %2394 = vmatprep.subr.mxu0 0.0
    %2395 = vmatpush2.msra.mxu0 0.0
    %2396 = vmatprep.subr.mxu0 0.0
    %2397 = vmatpush2.msra.mxu0 0.0
    %2398 = vmatprep.subr.mxu0 0.0
    %2399 = vmatpush2.msra.mxu0 0.0
    %2400 = vmatprep.subr.mxu0 0.0
    %2401 = vmatpush2.msra.mxu0 0.0
    %2402 = vmatprep.subr.mxu0 0.0
    %2403 = vmatpush2.msra.mxu0 0.0
    %2404 = vmatprep.subr.mxu0 0.0
    %2405 = vmatpush2.msra.mxu0 0.0
    %2406 = vmatprep.subr.mxu0 0.0
    %2407 = vmatpush2.msra.mxu0 0.0
    %2408 = vmatprep.subr.mxu0 0.0
    %2409 = vmatpush2.msra.mxu0 0.0
    %2410 = vmatprep.subr.mxu0 0.0
    %2411 = vmatpush2.msra.mxu0 0.0
    %2412 = vmatprep.mubr.f32.mxu0 0.0
    %2413 = vmatmul.mubr.f32.gmra.mxu0 %v2346
    %v2414 = vpop.f32.mrf.mxu0
    %v2415 = vadd.f32 %v2342, %v2414
    %v2416 = vpop.f32.mrf.mxu0
    %2417 = vdwg.mxu0
    %v2418 = vld [vmem:[#allocation8] sm:$0x1]
    %v2420 = vlaneseq
    %v2421 = vshrl.u32 %v2420, 7
    %v2422 = vsub.s32 0, %v2421
    %v2423 = vrot.slane %v2418, %v2422
    %v2425 = vadd.f32 %v2415, %v2423
    %vm2426 = vcmask 7168
    %2427 = vst.msk [vmem:[%s15] sm:$0xff] %vm2426, %v2425
  $region77: #{fine_tune_head.1} parent=0 // pred_fallthru
    _
  // Predicated region
  $region78: #{fine_tune_head.1} parent=0 // pred_check
    _
  $region79: #{fine_tune_head.1} parent=0 // pred_check_branch
    %2429 = sbr.rel (0) target = $region81
  $region80: #{fine_tune_head.1} parent=0 // pred_region
    _
  $region81: #{fine_tune_head.1} parent=0 // pred_fallthru
    _
  // Predicated region
  $region82: #{fine_tune_head.1} parent=0 // pred_check
    _
  $region83: #{fine_tune_head.1} parent=0 // pred_check_branch
    %2431 = sbr.rel (0) target = $region85
  $region84: #{fine_tune_head.1} parent=0 // pred_region
    _
  $region85: #{fine_tune_head.1} parent=0 // pred_fallthru
    _

</llo_original>
